<compile_context>
chip_gen: v6e
topology: v6e:2x2x1
jax: 0.10.0
libtpu: 0.0.40
codegen_flags: <defaults>
</compile_context>

<pallas_src>
import functools

import numpy as np
import jax
import jax.numpy as jnp
from jax import lax
from jax.experimental import pallas as pl
from jax.experimental.pallas import tpu as pltpu


# -----------------------------------------------------------------------------
# Parameter init for the assumed ConvRNN sub-module
# -----------------------------------------------------------------------------
def init_rnn_params(key, in_ch, hidden):
    def conv_init(k, cin, cout):
        kw_, kb_ = jax.random.split(k)
        w = jax.random.normal(kw_, (3, 3, cin, cout), jnp.float32) * 0.1
        bias = jax.random.normal(kb_, (cout,), jnp.float32) * 0.1
        return w, bias

    k1, k2, k3 = jax.random.split(key, 3)
    return {
        "conv_x": conv_init(k1, in_ch, hidden),   # input  -> hidden
        "conv_h": conv_init(k2, hidden, hidden),  # hidden -> hidden
        "conv_o": conv_init(k3, hidden, in_ch),   # hidden -> next frame
    }


# -----------------------------------------------------------------------------
# Wrapper-side prep: banded (block-Toeplitz) weights over VALID W columns only
# (K = W*C; the W boundary handling is encoded by omitting out-of-range band
# entries, so no W padding is needed in the lane dim), plus W-tiled biases.
# -----------------------------------------------------------------------------
def _prepare_operands(params_stacked, H, W):
    wx, bx = params_stacked["conv_x"]   # (S,3,3,Cin,Chid), (S,Chid)
    wh, bh = params_stacked["conv_h"]   # (S,3,3,Chid,Chid), (S,Chid)
    wo, bo = params_stacked["conv_o"]   # (S,3,3,Chid,Cin),  (S,Cin)
    S = wx.shape[0]

    # sel[dw, j_in, j_out] = 1 iff j_in == j_out + dw - 1 and j_in is valid.
    sel = np.zeros((3, W, W), np.float32)
    for dw in range(3):
        for j in range(W):
            ji = j + dw - 1
            if 0 <= ji < W:
                sel[dw, ji, j] = 1.0
    sel = jnp.asarray(sel)

    def band(w):  # (S,3,3,ci,co) -> (S, 3, W*ci, W*co) bf16
        ci, co = w.shape[-2], w.shape[-1]
        B = jnp.einsum("wab,sdwio->sdaibo", sel, w)
        return B.reshape(S, 3, W * ci, W * co).astype(jnp.bfloat16)

    def tile_bias(b):  # (S,c) -> (S,1,W*c), lane layout j*C + c
        c = b.shape[-1]
        return jnp.tile(b.astype(jnp.float32), (1, W)).reshape(S, 1, W * c)

    Bx, Bh, Bo = band(wx), band(wh), band(wo)
    bias_h = tile_bias(bx + bh)          # conv_x bias + conv_h bias, folded
    bias_o = tile_bias(bo)
    return Bx, Bh, Bo, bias_h, bias_o


# -----------------------------------------------------------------------------
# The fused ConvRNN kernel (one grid step == one complete RNN stream)
# -----------------------------------------------------------------------------
def _make_rnn_kernel(R, Kh, Ko, niter):
    # row shifts of the full-R matmul results via XLU rotations (both shifts
    # are positive and < R; wrap-around rows are pad rows, killed by the mask)
    def _roll_rows(y, shift):
        return pltpu.roll(y, shift % R, axis=0)

    def conv3(lhs_bf16, w_ref):
        # lhs: (R, K_in) bf16 value; w_ref: (1, 3, K_in, K_out) bf16.
        # out[r] = lhs[r-1] @ W0 + lhs[r] @ W1 + lhs[r+1] @ W2
        y0 = jnp.dot(lhs_bf16, w_ref[0, 0], preferred_element_type=jnp.float32)
        y1 = jnp.dot(lhs_bf16, w_ref[0, 1], preferred_element_type=jnp.float32)
        y2 = jnp.dot(lhs_bf16, w_ref[0, 2], preferred_element_type=jnp.float32)
        return _roll_rows(y0, 1) + y1 + _roll_rows(y2, -1)

    def kernel(mask_ref, xp_ref, bxw_ref, bhw_ref, bow_ref,
               bias_h_ref, bias_o_ref, out_ref, hpad_ref, cxb_ref):
        # ---- cx = conv_x(x) + (bx + bh folded), computed once --------------
        cx = conv3(xp_ref[0], bxw_ref) + bias_h_ref[0]
        cxb_ref[...] = cx                                   # f32, loop-invariant

        if niter == 0:
            hpad_ref[...] = jnp.zeros((R, Kh), jnp.bfloat16)
        else:
            # first step: conv_h(h0 = 0) contributes only its (folded) bias
            hpad_ref[...] = jnp.tanh(cx).astype(jnp.bfloat16) * mask_ref[...]

            if niter > 1:
                def step(_, carry):
                    tot = conv3(hpad_ref[...], bhw_ref) + cxb_ref[...]
                    # single aligned full-R masked bf16 store of the new h
                    hpad_ref[...] = (jnp.tanh(tot).astype(jnp.bfloat16)
                                     * mask_ref[...])
                    return carry

                # full unroll for small trip counts (LLO visibility); partial
                # unroll for large niter to bound vreg pressure / code bloat.
                lax.fori_loop(0, niter - 1, step, 0,
                              unroll=True if niter <= 9 else 2)

        # ---- out = conv_o(h_T) + bo (full R rows; wrapper strips H pads) ----
        out_ref[0] = conv3(hpad_ref[...], bow_ref) + bias_o_ref[0]

    return kernel


# -----------------------------------------------------------------------------
# S independent ConvRNN streams in ONE pallas_call (grid=(S,), "parallel")
# -----------------------------------------------------------------------------
def _fused_rnn_stacked(params_stacked, x_nchw_stacked, numiterations):
    S, Nb, Cin, H, W = x_nchw_stacked.shape
    Chid = params_stacked["conv_h"][0].shape[-1]
    Cout = params_stacked["conv_o"][0].shape[-1]
    Hp = H + 2
    R = Nb * Hp                         # rows of the padded layout
    Kx, Kh, Ko = W * Cin, W * Chid, W * Cout

    Bx, Bh, Bo, bias_h, bias_o = _prepare_operands(params_stacked, H, W)

    # input: NCHW -> NHWC -> zero-pad H by 1 -> (S, R, W*Cin) in bf16
    # (x is only ever an MXU lhs, so pre-cast in the wrapper).
    x = jnp.transpose(x_nchw_stacked, (0, 1, 3, 4, 2)).astype(jnp.float32)
    xp = jnp.pad(x, ((0, 0), (0, 0), (1, 1), (0, 0), (0, 0)))
    xp = xp.reshape(S, R, Kx).astype(jnp.bfloat16)

    # Full-R row-validity mask (zeroes per-image H-pad rows, incl. rows 0/R-1,
    # which also kills pltpu.roll wrap-around). Pre-broadcast to (R, Kh) bf16
    # in the wrapper so the hot loop never re-emits a broadcast_in_dim.
    rows = np.arange(R)
    valid = ((rows % Hp) >= 1) & ((rows % Hp) <= H)
    maskb = jnp.asarray(
        np.broadcast_to(valid[:, None], (R, Kh)).astype(np.float32)
    ).astype(jnp.bfloat16)

    kernel = _make_rnn_kernel(R, Kh, Ko, int(numiterations))

    # TODO(synk): at much larger W/hidden the double-buffered Bh block can
    # exceed v7x's 64 MiB VMEM -- single-buffer the weight specs
    # (pipeline_mode=pl.Buffered(1)) or tile Bh's K dim in that regime.
    out = pl.pallas_call(
        kernel,
        out_shape=jax.ShapeDtypeStruct((S, R, Ko), jnp.float32),
        grid=(S,),
        in_specs=[
            pl.BlockSpec((R, Kh), lambda s: (0, 0)),               # row mask (bf16)
            pl.BlockSpec((1, R, Kx), lambda s: (s, 0, 0)),         # x (bf16, H-pad)
            pl.BlockSpec((1, 3, Kx, Kh), lambda s: (s, 0, 0, 0)),  # Bx (bf16)
            pl.BlockSpec((1, 3, Kh, Kh), lambda s: (s, 0, 0, 0)),  # Bh (bf16)
            pl.BlockSpec((1, 3, Kh, Ko), lambda s: (s, 0, 0, 0)),  # Bo (bf16)
            pl.BlockSpec((1, 1, Kh), lambda s: (s, 0, 0)),         # bx+bh tiled
            pl.BlockSpec((1, 1, Ko), lambda s: (s, 0, 0)),         # bo tiled
        ],
        out_specs=pl.BlockSpec((1, R, Ko), lambda s: (s, 0, 0)),
        scratch_shapes=[pltpu.VMEM((R, Kh), jnp.bfloat16),   # h state (bf16)
                        pltpu.VMEM((R, Kh), jnp.float32)],   # cx + folded biases
        compiler_params=pltpu.CompilerParams(
            # v7x: one stream per TensorCore; v5e/v6e: serial grid loop.
            dimension_semantics=("parallel",),
            vmem_limit_bytes=32 * 1024 * 1024),
    )(maskb, xp, Bx, Bh, Bo, bias_h, bias_o)

    # padded-layout rows back to (S, Nb, Cout, H, W)
    out5 = out.reshape(S, Nb, Hp, W, Cout)[:, :, 1:H + 1, :, :]
    return jnp.transpose(out5, (0, 1, 4, 2, 3))


# -----------------------------------------------------------------------------
# Network_static_Semantic forward
# -----------------------------------------------------------------------------
def network_static_semantic_forward(params_static, params_semantic,
                                    staticgrid_tensor, semanticgrid_tensor,
                                    numiterations):
    b, s, H, W, C = staticgrid_tensor.shape
    # mirrors torch .contiguous().view(b*s, C, H, W): raw memory reinterpret
    x_static = staticgrid_tensor.reshape(b * s, C, H, W)
    b2, s2, H2, W2, C2 = semanticgrid_tensor.shape
    x_sem = semanticgrid_tensor.reshape(b2 * s2, C2, H2, W2)

    same_shapes = (x_static.shape == x_sem.shape) and all(
        jax.tree_util.tree_leaves(
            jax.tree_util.tree_map(lambda a, c: a.shape == c.shape,
                                   params_static, params_semantic)))
    if same_shapes:
        stacked = jax.tree_util.tree_map(
            lambda a, c: jnp.stack([a, c], axis=0),
            params_static, params_semantic)
        x = jnp.stack([x_static, x_sem], axis=0)
        out = _fused_rnn_stacked(stacked, x, numiterations)
        return out[0], out[1]

    # fallback: run each stream through its own single-stream fused kernel
    expand = lambda p: jax.tree_util.tree_map(lambda a: a[None], p)
    o1 = _fused_rnn_stacked(expand(params_static), x_static[None],
                            numiterations)[0]
    o2 = _fused_rnn_stacked(expand(params_semantic), x_sem[None],
                            numiterations)[0]
    return o1, o2


# -----------------------------------------------------------------------------
# Pure-JAX reference of the assumed ConvRNN.  x, h and all weights are rounded
# to bf16 (exactly the kernel's MXU operand precision, f32 accumulation), so a
# tight tolerance is meaningful.
# -----------------------------------------------------------------------------
def _conv3x3_ref(x_nhwc, w_hwio, b):
    y = lax.conv_general_dilated(
        x_nhwc, w_hwio, window_strides=(1, 1), padding="SAME",
        dimension_numbers=("NHWC", "HWIO", "NHWC"),
        precision=lax.Precision.HIGHEST)
    return y + b


def rnn_reference(params, x_nchw, numiterations):
    rd = lambda a: a.astype(jnp.bfloat16).astype(jnp.float32)
    wx, bx = params["conv_x"]
    wh, bh = params["conv_h"]
    wo, bo = params["conv_o"]
    x = rd(jnp.transpose(x_nchw, (0, 2, 3, 1)))
    cx = _conv3x3_ref(x, rd(wx), bx)
    h = jnp.zeros(x.shape[:3] + (wh.shape[-1],), jnp.float32)
    for _ in range(int(numiterations)):
        h = jnp.tanh(cx + _conv3x3_ref(rd(h), rd(wh), bh))
    out = _conv3x3_ref(rd(h), rd(wo), bo)
    return jnp.transpose(out, (0, 3, 1, 2))


# -----------------------------------------------------------------------------
if __name__ == "__main__":
    batch, seqlen, H, W, C = 2, 4, 16, 16, 4
    hidden = 16
    numiterations = 3

    key = jax.random.PRNGKey(0)
    k_in1, k_in2, k_p1, k_p2 = jax.random.split(key, 4)

    staticgrid = jax.random.normal(k_in1, (batch, seqlen, H, W, C), jnp.float32)
    semanticgrid = jax.random.normal(k_in2, (batch, seqlen, H, W, C), jnp.float32)

    params_static = init_rnn_params(k_p1, C, hidden)
    params_semantic = init_rnn_params(k_p2, C, hidden)

    fwd = jax.jit(functools.partial(network_static_semantic_forward,
                                    numiterations=numiterations))
    out_static, out_semantic = fwd(params_static, params_semantic,
                                   staticgrid, semanticgrid)
    jax.block_until_ready((out_static, out_semantic))

    assert out_static.shape == (batch * seqlen, C, H, W)
    assert out_semantic.shape == (batch * seqlen, C, H, W)

    # correctness check against the pure-JAX reference of the assumed ConvRNN
    ref_static = rnn_reference(
        params_static, staticgrid.reshape(batch * seqlen, C, H, W),
        numiterations)
    ref_sem = rnn_reference(
        params_semantic, semanticgrid.reshape(batch * seqlen, C, H, W),
        numiterations)
    err = max(float(jnp.max(jnp.abs(out_static - ref_static))),
              float(jnp.max(jnp.abs(out_semantic - ref_sem))))
    assert err < 3e-2, f"max abs error vs reference: {err}"

    print("KERNEL_OK")
</pallas_src>

<mosaic_0001>
module attributes {stable_mosaic.version = 11 : i64} {
  func.func @kernel(%arg0: i32, %arg1: memref<144x256xbf16, #tpu.memory_space<vmem>>, %arg2: memref<1x144x64xbf16, #tpu.memory_space<vmem>>, %arg3: memref<1x3x64x256xbf16, #tpu.memory_space<vmem>>, %arg4: memref<1x3x256x256xbf16, #tpu.memory_space<vmem>>, %arg5: memref<1x3x256x64xbf16, #tpu.memory_space<vmem>>, %arg6: memref<1x1x256xf32, #tpu.memory_space<vmem>>, %arg7: memref<1x1x64xf32, #tpu.memory_space<vmem>>, %arg8: memref<1x144x64xf32, #tpu.memory_space<vmem>>, %arg9: memref<144x256xbf16, #tpu.memory_space<vmem>>, %arg10: memref<144x256xf32, #tpu.memory_space<vmem>>) attributes {dimension_semantics = [#tpu.dimension_semantics<parallel>], iteration_bounds = array<i64: 2>, scalar_prefetch = 0 : i64, scratch_operands = 2 : i64, tpu.core_type = #tpu.core_type<tc>, window_params = [{pipeline_mode = #tpu.pipeline_mode<synchronous>, transform_indices = @transform_0, window_bounds = array<i64: 144, 256>}, {transform_indices = @transform_1, window_bounds = array<i64: 1, 144, 64>}, {transform_indices = @transform_2, window_bounds = array<i64: 1, 3, 64, 256>}, {transform_indices = @transform_3, window_bounds = array<i64: 1, 3, 256, 256>}, {transform_indices = @transform_4, window_bounds = array<i64: 1, 3, 256, 64>}, {transform_indices = @transform_5, window_bounds = array<i64: 1, 1, 256>}, {transform_indices = @transform_6, window_bounds = array<i64: 1, 1, 64>}, {transform_indices = @transform_7, window_bounds = array<i64: 1, 144, 64>}]} {
    %c0 = arith.constant 0 : index
    %c0_0 = arith.constant 0 : index
    %c0_1 = arith.constant 0 : index
    %0 = vector.load %arg2[%c0, %c0_0, %c0_1] : memref<1x144x64xbf16, #tpu.memory_space<vmem>>, vector<1x144x64xbf16>
    %1 = vector.shape_cast %0 : vector<1x144x64xbf16> to vector<144x64xbf16>
    %c0_2 = arith.constant 0 : index
    %c0_3 = arith.constant 0 : index
    %c0_4 = arith.constant 0 : index
    %c0_5 = arith.constant 0 : index
    %2 = vector.load %arg3[%c0_2, %c0_3, %c0_4, %c0_5] : memref<1x3x64x256xbf16, #tpu.memory_space<vmem>>, vector<1x1x64x256xbf16>
    %3 = vector.shape_cast %2 : vector<1x1x64x256xbf16> to vector<64x256xbf16>
    %cst = arith.constant dense<0.000000e+00> : vector<144x256xf32>
    %4 = tpu.matmul %1, %3, %cst {dimension_numbers = #tpu.dot_dimension_numbers<[1], [0], [0], [1], [0, 0, 1, 1], [], []>} : vector<144x64xbf16>, vector<64x256xbf16>, vector<144x256xf32> -> vector<144x256xf32>
    %c0_6 = arith.constant 0 : index
    %c1 = arith.constant 1 : index
    %c0_7 = arith.constant 0 : index
    %c0_8 = arith.constant 0 : index
    %5 = vector.load %arg3[%c0_6, %c1, %c0_7, %c0_8] : memref<1x3x64x256xbf16, #tpu.memory_space<vmem>>, vector<1x1x64x256xbf16>
    %6 = vector.shape_cast %5 : vector<1x1x64x256xbf16> to vector<64x256xbf16>
    %cst_9 = arith.constant dense<0.000000e+00> : vector<144x256xf32>
    %7 = tpu.matmul %1, %6, %cst_9 {dimension_numbers = #tpu.dot_dimension_numbers<[1], [0], [0], [1], [0, 0, 1, 1], [], []>} : vector<144x64xbf16>, vector<64x256xbf16>, vector<144x256xf32> -> vector<144x256xf32>
    %c0_10 = arith.constant 0 : index
    %c2 = arith.constant 2 : index
    %c0_11 = arith.constant 0 : index
    %c0_12 = arith.constant 0 : index
    %8 = vector.load %arg3[%c0_10, %c2, %c0_11, %c0_12] : memref<1x3x64x256xbf16, #tpu.memory_space<vmem>>, vector<1x1x64x256xbf16>
    %9 = vector.shape_cast %8 : vector<1x1x64x256xbf16> to vector<64x256xbf16>
    %cst_13 = arith.constant dense<0.000000e+00> : vector<144x256xf32>
    %10 = tpu.matmul %1, %9, %cst_13 {dimension_numbers = #tpu.dot_dimension_numbers<[1], [0], [0], [1], [0, 0, 1, 1], [], []>} : vector<144x64xbf16>, vector<64x256xbf16>, vector<144x256xf32> -> vector<144x256xf32>
    %c1_i32 = arith.constant 1 : i32
    %11 = tpu.dynamic_rotate %4 by %c1_i32 dim 0 : vector<144x256xf32>, i32 -> vector<144x256xf32>
    %12 = arith.addf %11, %7 : vector<144x256xf32>
    %c143_i32 = arith.constant 143 : i32
    %13 = tpu.dynamic_rotate %10 by %c143_i32 dim 0 : vector<144x256xf32>, i32 -> vector<144x256xf32>
    %14 = arith.addf %12, %13 : vector<144x256xf32>
    %c0_14 = arith.constant 0 : index
    %c0_15 = arith.constant 0 : index
    %c0_16 = arith.constant 0 : index
    %15 = vector.load %arg6[%c0_14, %c0_15, %c0_16] : memref<1x1x256xf32, #tpu.memory_space<vmem>>, vector<1x1x256xf32>
    %16 = vector.shape_cast %15 : vector<1x1x256xf32> to vector<1x256xf32>
    %17 = vector.broadcast %16 : vector<1x256xf32> to vector<144x256xf32>
    %18 = arith.addf %14, %17 : vector<144x256xf32>
    %c0_17 = arith.constant 0 : index
    %c0_18 = arith.constant 0 : index
    %19 = vector.load %arg10[%c0_17, %c0_18] : memref<144x256xf32, #tpu.memory_space<vmem>>, vector<144x256xf32>
    tpu.vector_store %arg10[%c0_17, %c0_18], %18 {strides = array<i32>} : memref<144x256xf32, #tpu.memory_space<vmem>>, vector<144x256xf32>,
    %20 = math.tanh %18 : vector<144x256xf32>
    %21 = arith.truncf %20 : vector<144x256xf32> to vector<144x256xbf16>
    %c0_19 = arith.constant 0 : index
    %c0_20 = arith.constant 0 : index
    %22 = vector.load %arg1[%c0_19, %c0_20] : memref<144x256xbf16, #tpu.memory_space<vmem>>, vector<144x256xbf16>
    %23 = arith.mulf %21, %22 : vector<144x256xbf16>
    %c0_21 = arith.constant 0 : index
    %c0_22 = arith.constant 0 : index
    %24 = vector.load %arg9[%c0_21, %c0_22] : memref<144x256xbf16, #tpu.memory_space<vmem>>, vector<144x256xbf16>
    tpu.vector_store %arg9[%c0_21, %c0_22], %23 {strides = array<i32>} : memref<144x256xbf16, #tpu.memory_space<vmem>>, vector<144x256xbf16>,
    %c0_i32 = arith.constant 0 : i32
    %c0_23 = arith.constant 0 : index
    %c0_24 = arith.constant 0 : index
    %25 = vector.load %arg9[%c0_23, %c0_24] : memref<144x256xbf16, #tpu.memory_space<vmem>>, vector<144x256xbf16>
    %c0_25 = arith.constant 0 : index
    %c0_26 = arith.constant 0 : index
    %c0_27 = arith.constant 0 : index
    %c0_28 = arith.constant 0 : index
    %26 = vector.load %arg4[%c0_25, %c0_26, %c0_27, %c0_28] : memref<1x3x256x256xbf16, #tpu.memory_space<vmem>>, vector<1x1x256x256xbf16>
    %27 = vector.shape_cast %26 : vector<1x1x256x256xbf16> to vector<256x256xbf16>
    %cst_29 = arith.constant dense<0.000000e+00> : vector<144x256xf32>
    %28 = tpu.matmul %25, %27, %cst_29 {dimension_numbers = #tpu.dot_dimension_numbers<[1], [0], [0], [1], [0, 0, 1, 1], [], []>} : vector<144x256xbf16>, vector<256x256xbf16>, vector<144x256xf32> -> vector<144x256xf32>
    %c0_30 = arith.constant 0 : index
    %c1_31 = arith.constant 1 : index
    %c0_32 = arith.constant 0 : index
    %c0_33 = arith.constant 0 : index
    %29 = vector.load %arg4[%c0_30, %c1_31, %c0_32, %c0_33] : memref<1x3x256x256xbf16, #tpu.memory_space<vmem>>, vector<1x1x256x256xbf16>
    %30 = vector.shape_cast %29 : vector<1x1x256x256xbf16> to vector<256x256xbf16>
    %cst_34 = arith.constant dense<0.000000e+00> : vector<144x256xf32>
    %31 = tpu.matmul %25, %30, %cst_34 {dimension_numbers = #tpu.dot_dimension_numbers<[1], [0], [0], [1], [0, 0, 1, 1], [], []>} : vector<144x256xbf16>, vector<256x256xbf16>, vector<144x256xf32> -> vector<144x256xf32>
    %c0_35 = arith.constant 0 : index
    %c2_36 = arith.constant 2 : index
    %c0_37 = arith.constant 0 : index
    %c0_38 = arith.constant 0 : index
    %32 = vector.load %arg4[%c0_35, %c2_36, %c0_37, %c0_38] : memref<1x3x256x256xbf16, #tpu.memory_space<vmem>>, vector<1x1x256x256xbf16>
    %33 = vector.shape_cast %32 : vector<1x1x256x256xbf16> to vector<256x256xbf16>
    %cst_39 = arith.constant dense<0.000000e+00> : vector<144x256xf32>
    %34 = tpu.matmul %25, %33, %cst_39 {dimension_numbers = #tpu.dot_dimension_numbers<[1], [0], [0], [1], [0, 0, 1, 1], [], []>} : vector<144x256xbf16>, vector<256x256xbf16>, vector<144x256xf32> -> vector<144x256xf32>
    %c1_i32_40 = arith.constant 1 : i32
    %35 = tpu.dynamic_rotate %28 by %c1_i32_40 dim 0 : vector<144x256xf32>, i32 -> vector<144x256xf32>
    %36 = arith.addf %35, %31 : vector<144x256xf32>
    %c143_i32_41 = arith.constant 143 : i32
    %37 = tpu.dynamic_rotate %34 by %c143_i32_41 dim 0 : vector<144x256xf32>, i32 -> vector<144x256xf32>
    %38 = arith.addf %36, %37 : vector<144x256xf32>
    %c0_42 = arith.constant 0 : index
    %c0_43 = arith.constant 0 : index
    %39 = vector.load %arg10[%c0_42, %c0_43] : memref<144x256xf32, #tpu.memory_space<vmem>>, vector<144x256xf32>
    %40 = arith.addf %38, %39 : vector<144x256xf32>
    %41 = math.tanh %40 : vector<144x256xf32>
    %42 = arith.truncf %41 : vector<144x256xf32> to vector<144x256xbf16>
    %c0_44 = arith.constant 0 : index
    %c0_45 = arith.constant 0 : index
    %43 = vector.load %arg1[%c0_44, %c0_45] : memref<144x256xbf16, #tpu.memory_space<vmem>>, vector<144x256xbf16>
    %44 = arith.mulf %42, %43 : vector<144x256xbf16>
    %c0_46 = arith.constant 0 : index
    %c0_47 = arith.constant 0 : index
    %45 = vector.load %arg9[%c0_46, %c0_47] : memref<144x256xbf16, #tpu.memory_space<vmem>>, vector<144x256xbf16>
    tpu.vector_store %arg9[%c0_46, %c0_47], %44 {strides = array<i32>} : memref<144x256xbf16, #tpu.memory_space<vmem>>, vector<144x256xbf16>,
    %c1_i32_48 = arith.constant 1 : i32
    %c0_49 = arith.constant 0 : index
    %c0_50 = arith.constant 0 : index
    %46 = vector.load %arg9[%c0_49, %c0_50] : memref<144x256xbf16, #tpu.memory_space<vmem>>, vector<144x256xbf16>
    %c0_51 = arith.constant 0 : index
    %c0_52 = arith.constant 0 : index
    %c0_53 = arith.constant 0 : index
    %c0_54 = arith.constant 0 : index
    %47 = vector.load %arg4[%c0_51, %c0_52, %c0_53, %c0_54] : memref<1x3x256x256xbf16, #tpu.memory_space<vmem>>, vector<1x1x256x256xbf16>
    %48 = vector.shape_cast %47 : vector<1x1x256x256xbf16> to vector<256x256xbf16>
    %cst_55 = arith.constant dense<0.000000e+00> : vector<144x256xf32>
    %49 = tpu.matmul %46, %48, %cst_55 {dimension_numbers = #tpu.dot_dimension_numbers<[1], [0], [0], [1], [0, 0, 1, 1], [], []>} : vector<144x256xbf16>, vector<256x256xbf16>, vector<144x256xf32> -> vector<144x256xf32>
    %c0_56 = arith.constant 0 : index
    %c1_57 = arith.constant 1 : index
    %c0_58 = arith.constant 0 : index
    %c0_59 = arith.constant 0 : index
    %50 = vector.load %arg4[%c0_56, %c1_57, %c0_58, %c0_59] : memref<1x3x256x256xbf16, #tpu.memory_space<vmem>>, vector<1x1x256x256xbf16>
    %51 = vector.shape_cast %50 : vector<1x1x256x256xbf16> to vector<256x256xbf16>
    %cst_60 = arith.constant dense<0.000000e+00> : vector<144x256xf32>
    %52 = tpu.matmul %46, %51, %cst_60 {dimension_numbers = #tpu.dot_dimension_numbers<[1], [0], [0], [1], [0, 0, 1, 1], [], []>} : vector<144x256xbf16>, vector<256x256xbf16>, vector<144x256xf32> -> vector<144x256xf32>
    %c0_61 = arith.constant 0 : index
    %c2_62 = arith.constant 2 : index
    %c0_63 = arith.constant 0 : index
    %c0_64 = arith.constant 0 : index
    %53 = vector.load %arg4[%c0_61, %c2_62, %c0_63, %c0_64] : memref<1x3x256x256xbf16, #tpu.memory_space<vmem>>, vector<1x1x256x256xbf16>
    %54 = vector.shape_cast %53 : vector<1x1x256x256xbf16> to vector<256x256xbf16>
    %cst_65 = arith.constant dense<0.000000e+00> : vector<144x256xf32>
    %55 = tpu.matmul %46, %54, %cst_65 {dimension_numbers = #tpu.dot_dimension_numbers<[1], [0], [0], [1], [0, 0, 1, 1], [], []>} : vector<144x256xbf16>, vector<256x256xbf16>, vector<144x256xf32> -> vector<144x256xf32>
    %c1_i32_66 = arith.constant 1 : i32
    %56 = tpu.dynamic_rotate %49 by %c1_i32_66 dim 0 : vector<144x256xf32>, i32 -> vector<144x256xf32>
    %57 = arith.addf %56, %52 : vector<144x256xf32>
    %c143_i32_67 = arith.constant 143 : i32
    %58 = tpu.dynamic_rotate %55 by %c143_i32_67 dim 0 : vector<144x256xf32>, i32 -> vector<144x256xf32>
    %59 = arith.addf %57, %58 : vector<144x256xf32>
    %c0_68 = arith.constant 0 : index
    %c0_69 = arith.constant 0 : index
    %60 = vector.load %arg10[%c0_68, %c0_69] : memref<144x256xf32, #tpu.memory_space<vmem>>, vector<144x256xf32>
    %61 = arith.addf %59, %60 : vector<144x256xf32>
    %62 = math.tanh %61 : vector<144x256xf32>
    %63 = arith.truncf %62 : vector<144x256xf32> to vector<144x256xbf16>
    %c0_70 = arith.constant 0 : index
    %c0_71 = arith.constant 0 : index
    %64 = vector.load %arg1[%c0_70, %c0_71] : memref<144x256xbf16, #tpu.memory_space<vmem>>, vector<144x256xbf16>
    %65 = arith.mulf %63, %64 : vector<144x256xbf16>
    %c0_72 = arith.constant 0 : index
    %c0_73 = arith.constant 0 : index
    %66 = vector.load %arg9[%c0_72, %c0_73] : memref<144x256xbf16, #tpu.memory_space<vmem>>, vector<144x256xbf16>
    tpu.vector_store %arg9[%c0_72, %c0_73], %65 {strides = array<i32>} : memref<144x256xbf16, #tpu.memory_space<vmem>>, vector<144x256xbf16>,
    %c0_74 = arith.constant 0 : index
    %c0_75 = arith.constant 0 : index
    %67 = vector.load %arg9[%c0_74, %c0_75] : memref<144x256xbf16, #tpu.memory_space<vmem>>, vector<144x256xbf16>
    %c0_76 = arith.constant 0 : index
    %c0_77 = arith.constant 0 : index
    %c0_78 = arith.constant 0 : index
    %c0_79 = arith.constant 0 : index
    %68 = vector.load %arg5[%c0_76, %c0_77, %c0_78, %c0_79] : memref<1x3x256x64xbf16, #tpu.memory_space<vmem>>, vector<1x1x256x64xbf16>
    %69 = vector.shape_cast %68 : vector<1x1x256x64xbf16> to vector<256x64xbf16>
    %cst_80 = arith.constant dense<0.000000e+00> : vector<144x64xf32>
    %70 = tpu.matmul %67, %69, %cst_80 {dimension_numbers = #tpu.dot_dimension_numbers<[1], [0], [0], [1], [0, 0, 1, 1], [], []>} : vector<144x256xbf16>, vector<256x64xbf16>, vector<144x64xf32> -> vector<144x64xf32>
    %c0_81 = arith.constant 0 : index
    %c1_82 = arith.constant 1 : index
    %c0_83 = arith.constant 0 : index
    %c0_84 = arith.constant 0 : index
    %71 = vector.load %arg5[%c0_81, %c1_82, %c0_83, %c0_84] : memref<1x3x256x64xbf16, #tpu.memory_space<vmem>>, vector<1x1x256x64xbf16>
    %72 = vector.shape_cast %71 : vector<1x1x256x64xbf16> to vector<256x64xbf16>
    %cst_85 = arith.constant dense<0.000000e+00> : vector<144x64xf32>
    %73 = tpu.matmul %67, %72, %cst_85 {dimension_numbers = #tpu.dot_dimension_numbers<[1], [0], [0], [1], [0, 0, 1, 1], [], []>} : vector<144x256xbf16>, vector<256x64xbf16>, vector<144x64xf32> -> vector<144x64xf32>
    %c0_86 = arith.constant 0 : index
    %c2_87 = arith.constant 2 : index
    %c0_88 = arith.constant 0 : index
    %c0_89 = arith.constant 0 : index
    %74 = vector.load %arg5[%c0_86, %c2_87, %c0_88, %c0_89] : memref<1x3x256x64xbf16, #tpu.memory_space<vmem>>, vector<1x1x256x64xbf16>
    %75 = vector.shape_cast %74 : vector<1x1x256x64xbf16> to vector<256x64xbf16>
    %cst_90 = arith.constant dense<0.000000e+00> : vector<144x64xf32>
    %76 = tpu.matmul %67, %75, %cst_90 {dimension_numbers = #tpu.dot_dimension_numbers<[1], [0], [0], [1], [0, 0, 1, 1], [], []>} : vector<144x256xbf16>, vector<256x64xbf16>, vector<144x64xf32> -> vector<144x64xf32>
    %c1_i32_91 = arith.constant 1 : i32
    %77 = tpu.dynamic_rotate %70 by %c1_i32_91 dim 0 : vector<144x64xf32>, i32 -> vector<144x64xf32>
    %78 = arith.addf %77, %73 : vector<144x64xf32>
    %c143_i32_92 = arith.constant 143 : i32
    %79 = tpu.dynamic_rotate %76 by %c143_i32_92 dim 0 : vector<144x64xf32>, i32 -> vector<144x64xf32>
    %80 = arith.addf %78, %79 : vector<144x64xf32>
    %c0_93 = arith.constant 0 : index
    %c0_94 = arith.constant 0 : index
    %c0_95 = arith.constant 0 : index
    %81 = vector.load %arg7[%c0_93, %c0_94, %c0_95] : memref<1x1x64xf32, #tpu.memory_space<vmem>>, vector<1x1x64xf32>
    %82 = vector.shape_cast %81 : vector<1x1x64xf32> to vector<1x64xf32>
    %83 = vector.broadcast %82 : vector<1x64xf32> to vector<144x64xf32>
    %84 = arith.addf %80, %83 : vector<144x64xf32>
    %c0_96 = arith.constant 0 : index
    %c0_97 = arith.constant 0 : index
    %c0_98 = arith.constant 0 : index
    %85 = vector.load %arg8[%c0_96, %c0_97, %c0_98] : memref<1x144x64xf32, #tpu.memory_space<vmem>>, vector<1x144x64xf32>
    %86 = vector.shape_cast %85 : vector<1x144x64xf32> to vector<144x64xf32>
    %87 = vector.shape_cast %84 : vector<144x64xf32> to vector<1x144x64xf32>
    tpu.vector_store %arg8[%c0_96, %c0_97, %c0_98], %87 {strides = array<i32>} : memref<1x144x64xf32, #tpu.memory_space<vmem>>, vector<1x144x64xf32>,
    return
  }
  func.func @transform_0(%arg0: i32) -> (i32, i32) {
    %c0_i32 = arith.constant 0 : i32
    %c0_i32_0 = arith.constant 0 : i32
    %c0_i32_1 = arith.constant 0 : i32
    return %c0_i32, %c0_i32_0 : i32, i32
  }
  func.func @transform_1(%arg0: i32) -> (i32, i32, i32) {
    %c0_i32 = arith.constant 0 : i32
    %c0_i32_0 = arith.constant 0 : i32
    %c0_i32_1 = arith.constant 0 : i32
    return %arg0, %c0_i32, %c0_i32_0 : i32, i32, i32
  }
  func.func @transform_2(%arg0: i32) -> (i32, i32, i32, i32) {
    %c0_i32 = arith.constant 0 : i32
    %c0_i32_0 = arith.constant 0 : i32
    %c0_i32_1 = arith.constant 0 : i32
    %c0_i32_2 = arith.constant 0 : i32
    return %arg0, %c0_i32, %c0_i32_0, %c0_i32_1 : i32, i32, i32, i32
  }
  func.func @transform_3(%arg0: i32) -> (i32, i32, i32, i32) {
    %c0_i32 = arith.constant 0 : i32
    %c0_i32_0 = arith.constant 0 : i32
    %c0_i32_1 = arith.constant 0 : i32
    %c0_i32_2 = arith.constant 0 : i32
    return %arg0, %c0_i32, %c0_i32_0, %c0_i32_1 : i32, i32, i32, i32
  }
  func.func @transform_4(%arg0: i32) -> (i32, i32, i32, i32) {
    %c0_i32 = arith.constant 0 : i32
    %c0_i32_0 = arith.constant 0 : i32
    %c0_i32_1 = arith.constant 0 : i32
    %c0_i32_2 = arith.constant 0 : i32
    return %arg0, %c0_i32, %c0_i32_0, %c0_i32_1 : i32, i32, i32, i32
  }
  func.func @transform_5(%arg0: i32) -> (i32, i32, i32) {
    %c0_i32 = arith.constant 0 : i32
    %c0_i32_0 = arith.constant 0 : i32
    %c0_i32_1 = arith.constant 0 : i32
    return %arg0, %c0_i32, %c0_i32_0 : i32, i32, i32
  }
  func.func @transform_6(%arg0: i32) -> (i32, i32, i32) {
    %c0_i32 = arith.constant 0 : i32
    %c0_i32_0 = arith.constant 0 : i32
    %c0_i32_1 = arith.constant 0 : i32
    return %arg0, %c0_i32, %c0_i32_0 : i32, i32, i32
  }
  func.func @transform_7(%arg0: i32) -> (i32, i32, i32) {
    %c0_i32 = arith.constant 0 : i32
    %c0_i32_0 = arith.constant 0 : i32
    %c0_i32_1 = arith.constant 0 : i32
    return %arg0, %c0_i32, %c0_i32_0 : i32, i32, i32
  }
}

</mosaic_0001>

<llo_original>
// kernel: network_static_semantic_forward.1
$region0: #{network_static_semantic_forward.1}
  #allocation0 [shape = 'u32[]', space=smem, size = 0x4, offset = 0x4, fixed_abs, tag = 'smem constant byte address 0x4 - core index']
  #allocation1 [shape = 'u32[144,128]{1,0:T(1,128)}', space=vmem, size = 0x12000, scoped, tag = 'internal scratch']
  #allocation2 [shape = 'bf16[144,256]{1,0:T(8,128)(2,1)}', space=vmem, size = 0x12000, scoped, tag = 'scratch operand']
  #allocation3 [shape = 'f32[144,256]{1,0:T(8,128)}', space=vmem, size = 0x24000, scoped, tag = 'scratch operand']
  %s0 = inlined_call_operand.vmem [shape: bf16[144,256], index: 0, kind: input, shape index: {}]
  %s1 = inlined_call_operand.vmem [shape: bf16[2,144,64], index: 1, kind: input, shape index: {}]
  %s2 = inlined_call_operand.vmem [shape: bf16[2,3,64,256], index: 2, kind: input, shape index: {}]
  %s3 = inlined_call_operand.vmem [shape: bf16[2,3,256,256], index: 3, kind: input, shape index: {}]
  %s4 = inlined_call_operand.vmem [shape: bf16[2,3,256,64], index: 4, kind: input, shape index: {}]
  %s5 = inlined_call_operand.vmem [shape: f32[2,1,256], index: 5, kind: input, shape index: {}]
  %s6 = inlined_call_operand.vmem [shape: f32[2,1,64], index: 6, kind: input, shape index: {}]
  %s7 = inlined_call_operand.vmem [shape: f32[2,144,64], index: 7, kind: output, shape index: {}]
  %s8 = sld [smem:[#allocation0]]
  $region61: #{network_static_semantic_forward.1} parent=0
    _
  %s10 = ssub.s32 1, %s8
  %s11 = scalar_select 0, %s10, %s8
  loop: start=0, step=1, limit=4
  $region2: #{network_static_semantic_forward.1} parent=0 // loop_pre_header
    _
  $region3: #{network_static_semantic_forward.1} parent=0 // loop_header
    %s13 = sphi 0, %s17
    %p14 = scmp.ge.s32.totalorder %s13, 4
    %s21 = sphi 0, %s21
    %s23 = sphi 0, %s21
    %s24 = sphi 0, %s23
    %s38 = sphi 0, %s24
    %s44 = sphi 0, %s46
    %s47 = sphi 0, %s44
    %s48 = sphi 0, %s47
    %s64 = sphi 0, %s48
    %s70 = sphi 0, %s72
    %s73 = sphi 0, %s70
    %s74 = sphi 0, %s73
    %s90 = sphi 0, %s74
    %s96 = sphi 0, %s98
    %s99 = sphi 0, %s96
    %s100 = sphi 0, %s99
    %s116 = sphi 0, %s100
    %s122 = sphi 0, %s124
    %s125 = sphi 0, %s122
    %s126 = sphi 0, %s125
    %s142 = sphi 0, %s126
    %s148 = sphi 0, %s150
    %s151 = sphi 0, %s148
    %s152 = sphi 0, %s151
    %s168 = sphi 0, %s152
    %s174 = sphi 0, %s176
    %s177 = sphi 0, %s174
    %s178 = sphi 0, %s177
    %s194 = sphi 0, %s178
    %s200 = sphi 0, %s202
    %s203 = sphi 0, %s200
    %s204 = sphi 0, %s203
    %s220 = sphi 0, %s204
  $region4: #{network_static_semantic_forward.1} parent=0 // loop_header_branch
    %16 = sbr.rel (%p14) target = $region8
  $region5: #{network_static_semantic_forward.1} parent=0 // loop_body
    %s18 = ssub.s32 %s13, 1
    %s19 = ssub.s32 %s13, 2
    %s20 = sadd.s32 %s13, 1
    %s22 = sadd.s32 %s21, 1
    %p25 = scmp.eq.s32.totalorder %s13, 1
    %p26 = scmp.ne.s32.totalorder %s21, %s23
    %p27 = scmp.eq.s32.totalorder %s13, 0
    %p28 = por %p26, %p27
    %p29 = scmp.ne.s32.totalorder %s21, %s23
    %p30 = scmp.eq.s32.totalorder %s18, 1
    %p31 = por %p29, %p30
    %p32 = scmp.ne.s32.totalorder %s23, %s24
    %p33 = scmp.eq.s32.totalorder %s18, 0
    %p34 = por %p32, %p33
    %p35 = scmp.ne.s32.totalorder %s23, %s24
    %p36 = scmp.eq.s32.totalorder %s19, 1
    %p37 = por %p35, %p36
    %p39 = scmp.ne.s32.totalorder %s24, %s38
    %p40 = scmp.eq.s32.totalorder %s19, 0
    %p41 = por %p39, %p40
    %s42 = ssub.s32 %s13, %s20
    %p43 = scmp.eq.s32.totalorder %s42, 0
    %s45 = sadd.s32 %s44, 1
    %s46 = scalar_select %p43, %s44, %s45
    %p49 = pneg %p43
    %p50 = scmp.eq.s32.totalorder %s13, 1
    %p51 = por %p49, %p50
    %p52 = scmp.ne.s32.totalorder %s44, %s47
    %p53 = scmp.eq.s32.totalorder %s13, 0
    %p54 = por %p52, %p53
    %p55 = scmp.ne.s32.totalorder %s44, %s47
    %p56 = scmp.eq.s32.totalorder %s18, 1
    %p57 = por %p55, %p56
    %p58 = scmp.ne.s32.totalorder %s47, %s48
    %p59 = scmp.eq.s32.totalorder %s18, 0
    %p60 = por %p58, %p59
    %p61 = scmp.ne.s32.totalorder %s47, %s48
    %p62 = scmp.eq.s32.totalorder %s19, 1
    %p63 = por %p61, %p62
    %p65 = scmp.ne.s32.totalorder %s48, %s64
    %p66 = scmp.eq.s32.totalorder %s19, 0
    %p67 = por %p65, %p66
    %s68 = ssub.s32 %s13, %s20
    %p69 = scmp.eq.s32.totalorder %s68, 0
    %s71 = sadd.s32 %s70, 1
    %s72 = scalar_select %p69, %s70, %s71
    %p75 = pneg %p69
    %p76 = scmp.eq.s32.totalorder %s13, 1
    %p77 = por %p75, %p76
    %p78 = scmp.ne.s32.totalorder %s70, %s73
    %p79 = scmp.eq.s32.totalorder %s13, 0
    %p80 = por %p78, %p79
    %p81 = scmp.ne.s32.totalorder %s70, %s73
    %p82 = scmp.eq.s32.totalorder %s18, 1
    %p83 = por %p81, %p82
    %p84 = scmp.ne.s32.totalorder %s73, %s74
    %p85 = scmp.eq.s32.totalorder %s18, 0
    %p86 = por %p84, %p85
    %p87 = scmp.ne.s32.totalorder %s73, %s74
    %p88 = scmp.eq.s32.totalorder %s19, 1
    %p89 = por %p87, %p88
    %p91 = scmp.ne.s32.totalorder %s74, %s90
    %p92 = scmp.eq.s32.totalorder %s19, 0
    %p93 = por %p91, %p92
    %s94 = ssub.s32 %s13, %s20
    %p95 = scmp.eq.s32.totalorder %s94, 0
    %s97 = sadd.s32 %s96, 1
    %s98 = scalar_select %p95, %s96, %s97
    %p101 = pneg %p95
    %p102 = scmp.eq.s32.totalorder %s13, 1
    %p103 = por %p101, %p102
    %p104 = scmp.ne.s32.totalorder %s96, %s99
    %p105 = scmp.eq.s32.totalorder %s13, 0
    %p106 = por %p104, %p105
    %p107 = scmp.ne.s32.totalorder %s96, %s99
    %p108 = scmp.eq.s32.totalorder %s18, 1
    %p109 = por %p107, %p108
    %p110 = scmp.ne.s32.totalorder %s99, %s100
    %p111 = scmp.eq.s32.totalorder %s18, 0
    %p112 = por %p110, %p111
    %p113 = scmp.ne.s32.totalorder %s99, %s100
    %p114 = scmp.eq.s32.totalorder %s19, 1
    %p115 = por %p113, %p114
    %p117 = scmp.ne.s32.totalorder %s100, %s116
    %p118 = scmp.eq.s32.totalorder %s19, 0
    %p119 = por %p117, %p118
    %s120 = ssub.s32 %s13, %s20
    %p121 = scmp.eq.s32.totalorder %s120, 0
    %s123 = sadd.s32 %s122, 1
    %s124 = scalar_select %p121, %s122, %s123
    %p127 = pneg %p121
    %p128 = scmp.eq.s32.totalorder %s13, 1
    %p129 = por %p127, %p128
    %p130 = scmp.ne.s32.totalorder %s122, %s125
    %p131 = scmp.eq.s32.totalorder %s13, 0
    %p132 = por %p130, %p131
    %p133 = scmp.ne.s32.totalorder %s122, %s125
    %p134 = scmp.eq.s32.totalorder %s18, 1
    %p135 = por %p133, %p134
    %p136 = scmp.ne.s32.totalorder %s125, %s126
    %p137 = scmp.eq.s32.totalorder %s18, 0
    %p138 = por %p136, %p137
    %p139 = scmp.ne.s32.totalorder %s125, %s126
    %p140 = scmp.eq.s32.totalorder %s19, 1
    %p141 = por %p139, %p140
    %p143 = scmp.ne.s32.totalorder %s126, %s142
    %p144 = scmp.eq.s32.totalorder %s19, 0
    %p145 = por %p143, %p144
    %s146 = ssub.s32 %s13, %s20
    %p147 = scmp.eq.s32.totalorder %s146, 0
    %s149 = sadd.s32 %s148, 1
    %s150 = scalar_select %p147, %s148, %s149
    %p153 = pneg %p147
    %p154 = scmp.eq.s32.totalorder %s13, 1
    %p155 = por %p153, %p154
    %p156 = scmp.ne.s32.totalorder %s148, %s151
    %p157 = scmp.eq.s32.totalorder %s13, 0
    %p158 = por %p156, %p157
    %p159 = scmp.ne.s32.totalorder %s148, %s151
    %p160 = scmp.eq.s32.totalorder %s18, 1
    %p161 = por %p159, %p160
    %p162 = scmp.ne.s32.totalorder %s151, %s152
    %p163 = scmp.eq.s32.totalorder %s18, 0
    %p164 = por %p162, %p163
    %p165 = scmp.ne.s32.totalorder %s151, %s152
    %p166 = scmp.eq.s32.totalorder %s19, 1
    %p167 = por %p165, %p166
    %p169 = scmp.ne.s32.totalorder %s152, %s168
    %p170 = scmp.eq.s32.totalorder %s19, 0
    %p171 = por %p169, %p170
    %s172 = ssub.s32 %s13, %s20
    %p173 = scmp.eq.s32.totalorder %s172, 0
    %s175 = sadd.s32 %s174, 1
    %s176 = scalar_select %p173, %s174, %s175
    %p179 = pneg %p173
    %p180 = scmp.eq.s32.totalorder %s13, 1
    %p181 = por %p179, %p180
    %p182 = scmp.ne.s32.totalorder %s174, %s177
    %p183 = scmp.eq.s32.totalorder %s13, 0
    %p184 = por %p182, %p183
    %p185 = scmp.ne.s32.totalorder %s174, %s177
    %p186 = scmp.eq.s32.totalorder %s18, 1
    %p187 = por %p185, %p186
    %p188 = scmp.ne.s32.totalorder %s177, %s178
    %p189 = scmp.eq.s32.totalorder %s18, 0
    %p190 = por %p188, %p189
    %p191 = scmp.ne.s32.totalorder %s177, %s178
    %p192 = scmp.eq.s32.totalorder %s19, 1
    %p193 = por %p191, %p192
    %p195 = scmp.ne.s32.totalorder %s178, %s194
    %p196 = scmp.eq.s32.totalorder %s19, 0
    %p197 = por %p195, %p196
    %s198 = ssub.s32 %s13, %s20
    %p199 = scmp.eq.s32.totalorder %s198, 0
    %s201 = sadd.s32 %s200, 1
    %s202 = scalar_select %p199, %s200, %s201
    %p205 = pneg %p199
    %p206 = scmp.eq.s32.totalorder %s13, 1
    %p207 = por %p205, %p206
    %p208 = scmp.ne.s32.totalorder %s200, %s203
    %p209 = scmp.eq.s32.totalorder %s13, 0
    %p210 = por %p208, %p209
    %p211 = scmp.ne.s32.totalorder %s200, %s203
    %p212 = scmp.eq.s32.totalorder %s18, 1
    %p213 = por %p211, %p212
    %p214 = scmp.ne.s32.totalorder %s203, %s204
    %p215 = scmp.eq.s32.totalorder %s18, 0
    %p216 = por %p214, %p215
    %p217 = scmp.ne.s32.totalorder %s203, %s204
    %p218 = scmp.eq.s32.totalorder %s19, 1
    %p219 = por %p217, %p218
    %p221 = scmp.ne.s32.totalorder %s204, %s220
    %p222 = scmp.eq.s32.totalorder %s19, 0
    %p223 = por %p221, %p222
    %p224 = scmp.le.s32.totalorder 1, %s13
    %p225 = scmp.lt.s32.totalorder %s13, 3
    %p226 = pnand %p224, %p225
    %p227 = pneg %p226
    // Predicated region
    $region9: #{network_static_semantic_forward.1} parent=5 // pred_check
      _
    $region10: #{network_static_semantic_forward.1} parent=5 // pred_check_branch
      %229 = sbr.rel (%p226) target = $region12
    $region11: #{network_static_semantic_forward.1} parent=5 // pred_region
      %s230 = ssub.s32 %s13, 1
      // Predicated region
      $region13: #{network_static_semantic_forward.1} parent=11 // pred_check
        %p231 = pneg %p34
      $region14: #{network_static_semantic_forward.1} parent=11 // pred_check_branch
        %233 = sbr.rel (%p231) target = $region16
      $region15: #{network_static_semantic_forward.1} parent=11 // pred_region
        _
      $region16: #{network_static_semantic_forward.1} parent=11 // pred_fallthru
        _
    $region12: #{network_static_semantic_forward.1} parent=5 // pred_fallthru
      _
    %p234 = scmp.lt.s32.totalorder %s13, 2
    // Predicated region
    $region17: #{network_static_semantic_forward.1} parent=5 // pred_check
      %p235 = pneg %p234
    $region18: #{network_static_semantic_forward.1} parent=5 // pred_check_branch
      %237 = sbr.rel (%p235) target = $region20
    $region19: #{network_static_semantic_forward.1} parent=5 // pred_region
      // Predicated region
      $region21: #{network_static_semantic_forward.1} parent=19 // pred_check
        %p238 = pneg %p54
      $region22: #{network_static_semantic_forward.1} parent=19 // pred_check_branch
        %240 = sbr.rel (%p238) target = $region24
      $region23: #{network_static_semantic_forward.1} parent=19 // pred_region
        %p241 = scmp.lt.s32.totalorder %s13, 1
        %s242 = scalar_select %p241, %s13, 1
        %s243 = smul.addr %s242, 18
        %s244 = smul.addr %s243, 4
        %s245 = scalar_lea.vmem %s1, %s244
      $region24: #{network_static_semantic_forward.1} parent=19 // pred_fallthru
        _
      // Predicated region
      $region25: #{network_static_semantic_forward.1} parent=19 // pred_check
        %p246 = pneg %p80
      $region26: #{network_static_semantic_forward.1} parent=19 // pred_check_branch
        %248 = sbr.rel (%p246) target = $region28
      $region27: #{network_static_semantic_forward.1} parent=19 // pred_region
        %p249 = scmp.lt.s32.totalorder %s13, 1
        %s250 = scalar_select %p249, %s13, 1
        %s251 = smul.addr %s250, 48
        %s252 = smul.addr %s251, 4
        %s253 = scalar_lea.vmem %s2, %s252
      $region28: #{network_static_semantic_forward.1} parent=19 // pred_fallthru
        _
      // Predicated region
      $region29: #{network_static_semantic_forward.1} parent=19 // pred_check
        %p254 = pneg %p106
      $region30: #{network_static_semantic_forward.1} parent=19 // pred_check_branch
        %256 = sbr.rel (%p254) target = $region32
      $region31: #{network_static_semantic_forward.1} parent=19 // pred_region
        %p257 = scmp.lt.s32.totalorder %s13, 1
        %s258 = scalar_select %p257, %s13, 1
        %s259 = smul.addr %s258, 192
        %s260 = smul.addr %s259, 4
        %s261 = scalar_lea.vmem %s3, %s260
      $region32: #{network_static_semantic_forward.1} parent=19 // pred_fallthru
        _
      // Predicated region
      $region33: #{network_static_semantic_forward.1} parent=19 // pred_check
        %p262 = pneg %p132
      $region34: #{network_static_semantic_forward.1} parent=19 // pred_check_branch
        %264 = sbr.rel (%p262) target = $region36
      $region35: #{network_static_semantic_forward.1} parent=19 // pred_region
        %p265 = scmp.lt.s32.totalorder %s13, 1
        %s266 = scalar_select %p265, %s13, 1
        %s267 = smul.addr %s266, 96
        %s268 = smul.addr %s267, 4
        %s269 = scalar_lea.vmem %s4, %s268
      $region36: #{network_static_semantic_forward.1} parent=19 // pred_fallthru
        _
      // Predicated region
      $region37: #{network_static_semantic_forward.1} parent=19 // pred_check
        %p270 = pneg %p158
      $region38: #{network_static_semantic_forward.1} parent=19 // pred_check_branch
        %272 = sbr.rel (%p270) target = $region40
      $region39: #{network_static_semantic_forward.1} parent=19 // pred_region
        %p273 = scmp.lt.s32.totalorder %s13, 1
        %s274 = scalar_select %p273, %s13, 1
        %s275 = smul.addr %s274, 2
        %s276 = scalar_lea.vmem %s5, %s275
      $region40: #{network_static_semantic_forward.1} parent=19 // pred_fallthru
        _
      // Predicated region
      $region41: #{network_static_semantic_forward.1} parent=19 // pred_check
        %p277 = pneg %p184
      $region42: #{network_static_semantic_forward.1} parent=19 // pred_check_branch
        %279 = sbr.rel (%p277) target = $region44
      $region43: #{network_static_semantic_forward.1} parent=19 // pred_region
        %p280 = scmp.lt.s32.totalorder %s13, 1
        %s281 = scalar_select %p280, %s13, 1
        %s282 = scalar_lea.vmem %s6, %s281
      $region44: #{network_static_semantic_forward.1} parent=19 // pred_fallthru
        _
    $region20: #{network_static_semantic_forward.1} parent=5 // pred_fallthru
      _
    %p283 = scmp.le.s32.totalorder 1, %s13
    %p284 = scmp.lt.s32.totalorder %s13, 3
    %p285 = pnand %p283, %p284
    %p286 = pneg %p285
    // Predicated region
    $region45: #{network_static_semantic_forward.1} parent=5 // pred_check
      _
    $region46: #{network_static_semantic_forward.1} parent=5 // pred_check_branch
      %288 = sbr.rel (%p285) target = $region48
    $region47: #{network_static_semantic_forward.1} parent=5 // pred_region
      %s289 = ssub.s32 %s13, 1
      %p290 = pneg %p34
      %p291 = pneg %p31
      %p292 = scmp.lt.s32.totalorder %s18, 1
      %s293 = scalar_select %p292, %s18, 1
      %s294 = smul.addr %s293, 18
      %s295 = smul.addr %s294, 4
      %s296 = scalar_lea.vmem %s1, %s295
      %p297 = pneg %p60
      %p298 = pneg %p57
      %p299 = scmp.lt.s32.totalorder %s18, 1
      %s300 = scalar_select %p299, %s18, 1
      %s301 = smul.addr %s300, 48
      %s302 = smul.addr %s301, 4
      %s303 = scalar_lea.vmem %s2, %s302
      %p304 = pneg %p86
      %p305 = pneg %p83
      %p306 = scmp.lt.s32.totalorder %s18, 1
      %s307 = scalar_select %p306, %s18, 1
      %s308 = smul.addr %s307, 192
      %s309 = smul.addr %s308, 4
      %s310 = scalar_lea.vmem %s3, %s309
      %p311 = pneg %p112
      %p312 = pneg %p109
      %p313 = scmp.lt.s32.totalorder %s18, 1
      %s314 = scalar_select %p313, %s18, 1
      %s315 = smul.addr %s314, 96
      %s316 = smul.addr %s315, 4
      %s317 = scalar_lea.vmem %s4, %s316
      %p318 = pneg %p138
      %p319 = pneg %p135
      %p320 = scmp.lt.s32.totalorder %s18, 1
      %s321 = scalar_select %p320, %s18, 1
      %s322 = smul.addr %s321, 2
      %s323 = scalar_lea.vmem %s5, %s322
      %p324 = pneg %p164
      %p325 = pneg %p161
      %p326 = scmp.lt.s32.totalorder %s18, 1
      %s327 = scalar_select %p326, %s18, 1
      %s328 = scalar_lea.vmem %s6, %s327
      %p329 = pneg %p190
      %p330 = pneg %p187
      %p331 = pneg %p216
      %p332 = pneg %p213
      %p333 = scmp.lt.s32.totalorder %s18, 1
      %s334 = scalar_select %p333, %s18, 1
      %s335 = smul.addr %s334, 18
      %s336 = smul.addr %s335, 8
      %s337 = scalar_lea.vmem %s7, %s336
      %p338 = scmp.lt.s32.totalorder %s18, 1
      %s339 = scalar_select %p338, %s18, 1
      %s340 = smul.addr %s339, 18
      %s341 = smul.addr %s340, 4
      %s342 = scalar_lea.vmem %s1, %s341
      %p343 = scmp.lt.s32.totalorder %s18, 1
      %s344 = scalar_select %p343, %s18, 1
      %s345 = smul.addr %s344, 48
      %s346 = smul.addr %s345, 4
      %s347 = scalar_lea.vmem %s2, %s346
      %p348 = scmp.lt.s32.totalorder %s18, 1
      %s349 = scalar_select %p348, %s18, 1
      %s350 = smul.addr %s349, 192
      %s351 = smul.addr %s350, 4
      %s352 = scalar_lea.vmem %s3, %s351
      %p353 = scmp.lt.s32.totalorder %s18, 1
      %s354 = scalar_select %p353, %s18, 1
      %s355 = smul.addr %s354, 96
      %s356 = smul.addr %s355, 4
      %s357 = scalar_lea.vmem %s4, %s356
      %p358 = scmp.lt.s32.totalorder %s18, 1
      %s359 = scalar_select %p358, %s18, 1
      %s360 = smul.addr %s359, 2
      %s361 = scalar_lea.vmem %s5, %s360
      %p362 = scmp.lt.s32.totalorder %s18, 1
      %s363 = scalar_select %p362, %s18, 1
      %s364 = scalar_lea.vmem %s6, %s363
      %p365 = scmp.lt.s32.totalorder %s18, 1
      %s366 = scalar_select %p365, %s18, 1
      %s367 = smul.addr %s366, 18
      %s368 = smul.addr %s367, 8
      %s369 = scalar_lea.vmem %s7, %s368
      %v371 = vld [vmem:[%s342] sm:$0xf]
      %v372 = vld [vmem:[%s342 + $0x4] sm:$0xf]
      %v373 = vld [vmem:[%s342 + $0x8] sm:$0xf]
      %v374 = vld [vmem:[%s342 + $0xc] sm:$0xf]
      %v375 = vld [vmem:[%s342 + $0x10] sm:$0xf]
      %v376 = vld [vmem:[%s342 + $0x14] sm:$0xf]
      %v377 = vld [vmem:[%s342 + $0x18] sm:$0xf]
      %v378 = vld [vmem:[%s342 + $0x1c] sm:$0xf]
      %v379 = vld [vmem:[%s342 + $0x20] sm:$0xf]
      %v380 = vld [vmem:[%s342 + $0x24] sm:$0xf]
      %v381 = vld [vmem:[%s342 + $0x28] sm:$0xf]
      %v382 = vld [vmem:[%s342 + $0x2c] sm:$0xf]
      %v383 = vld [vmem:[%s342 + $0x30] sm:$0xf]
      %v384 = vld [vmem:[%s342 + $0x34] sm:$0xf]
      %v385 = vld [vmem:[%s342 + $0x38] sm:$0xf]
      %v386 = vld [vmem:[%s342 + $0x3c] sm:$0xf]
      %v387 = vld [vmem:[%s342 + $0x40] sm:$0xf]
      %v388 = vld [vmem:[%s342 + $0x44] sm:$0xf]
      %v389 = vld [vmem:[%s347] sm:$0xff]
      %v390 = vld [vmem:[%s347 + $0x8] sm:$0xff]
      %v391 = vld [vmem:[%s347 + $0x10] sm:$0xff]
      %v392 = vld [vmem:[%s347 + $0x18] sm:$0xff]
      %v393 = vld [vmem:[%s347 + $0x20] sm:$0xff]
      %v394 = vld [vmem:[%s347 + $0x28] sm:$0xff]
      %v395 = vld [vmem:[%s347 + $0x30] sm:$0xff]
      %v396 = vld [vmem:[%s347 + $0x38] sm:$0xff]
      %v415 = vunpack.c.l.b16 %v371
      %v416 = vunpack.c.l.b16 %v372
      %v417 = vunpack.c.l.b16 %v373
      %v418 = vunpack.c.l.b16 %v374
      %v419 = vunpack.c.l.b16 %v375
      %v420 = vunpack.c.l.b16 %v376
      %v421 = vunpack.c.l.b16 %v377
      %v422 = vunpack.c.l.b16 %v378
      %v423 = vunpack.c.l.b16 %v379
      %v424 = vunpack.c.l.b16 %v380
      %v425 = vunpack.c.l.b16 %v381
      %v426 = vunpack.c.l.b16 %v382
      %v427 = vunpack.c.l.b16 %v383
      %v428 = vunpack.c.l.b16 %v384
      %v429 = vunpack.c.l.b16 %v385
      %v430 = vunpack.c.l.b16 %v386
      %v431 = vunpack.c.l.b16 %v387
      %v432 = vunpack.c.l.b16 %v388
      %v433 = vpack.c.b16 %v416, %v415
      %v434 = vpack.c.b16 %v418, %v417
      %v435 = vpack.c.b16 %v420, %v419
      %v436 = vpack.c.b16 %v422, %v421
      %v437 = vpack.c.b16 %v424, %v423
      %v438 = vpack.c.b16 %v426, %v425
      %v439 = vpack.c.b16 %v428, %v427
      %v440 = vpack.c.b16 %v430, %v429
      %v441 = vpack.c.b16 %v432, %v431
      %v450 = vunpack.c.l.b16 %v389
      %v451 = vunpack.c.h.b16 %v389
      %v452 = vunpack.c.l.b16 %v390
      %v453 = vunpack.c.h.b16 %v390
      %v454 = vunpack.c.l.b16 %v391
      %v455 = vunpack.c.h.b16 %v391
      %v456 = vunpack.c.l.b16 %v392
      %v457 = vunpack.c.h.b16 %v392
      %v458 = vunpack.c.l.b16 %v393
      %v459 = vunpack.c.h.b16 %v393
      %v460 = vunpack.c.l.b16 %v394
      %v461 = vunpack.c.h.b16 %v394
      %v462 = vunpack.c.l.b16 %v395
      %v463 = vunpack.c.h.b16 %v395
      %v464 = vunpack.c.l.b16 %v396
      %v465 = vunpack.c.h.b16 %v396
      %v466 = vpack.c.b16 %v452, %v450
      %v467 = vpack.c.b16 %v453, %v451
      %v468 = vpack.c.b16 %v456, %v454
      %v469 = vpack.c.b16 %v457, %v455
      %v470 = vpack.c.b16 %v460, %v458
      %v471 = vpack.c.b16 %v461, %v459
      %v472 = vpack.c.b16 %v464, %v462
      %v473 = vpack.c.b16 %v465, %v463
      %vm482 = vcmask 523264
      %v484 = vsel %vm482, %v433, 0
      %v487 = vsel %vm482, %v434, 0
      %v490 = vsel %vm482, %v435, 0
      %v493 = vsel %vm482, %v436, 0
      %v496 = vsel %vm482, %v437, 0
      %v499 = vsel %vm482, %v438, 0
      %v502 = vsel %vm482, %v439, 0
      %v505 = vsel %vm482, %v440, 0
      %v508 = vsel %vm482, %v441, 0
      %510 = vmatprep.subr.bf16.mxu0 0
      %511 = vmatpush1.bf16.msra.mxu0 0
      %512 = vmatprep.subr.bf16.mxu0 0
      %513 = vmatpush1.bf16.msra.mxu0 0
      %514 = vmatprep.subr.bf16.mxu0 0
      %515 = vmatpush1.bf16.msra.mxu0 0
      %516 = vmatprep.subr.bf16.mxu0 0
      %517 = vmatpush1.bf16.msra.mxu0 0
      %518 = vmatprep.subr.bf16.mxu0 %v473
      %519 = vmatpush1.bf16.msra.mxu0 %v472
      %520 = vmatprep.subr.bf16.mxu0 %v471
      %521 = vmatpush1.bf16.msra.mxu0 %v470
      %522 = vmatprep.subr.bf16.mxu0 %v469
      %523 = vmatpush1.bf16.msra.mxu0 %v468
      %524 = vmatprep.subr.bf16.mxu0 %v467
      %525 = vmatpush1.bf16.msra.mxu0 %v466
      %526 = vmatprep.subr.bf16.mxu0 0
      %527 = vmatpush2.bf16.msra.mxu0 0
      %528 = vmatprep.subr.bf16.mxu0 0
      %529 = vmatpush2.bf16.msra.mxu0 0
      %530 = vmatprep.subr.bf16.mxu0 0
      %531 = vmatpush2.bf16.msra.mxu0 0
      %532 = vmatprep.subr.bf16.mxu0 0
      %533 = vmatpush2.bf16.msra.mxu0 0
      %534 = vmatprep.subr.bf16.mxu0 0
      %535 = vmatpush2.bf16.msra.mxu0 0
      %536 = vmatprep.subr.bf16.mxu0 0
      %537 = vmatpush2.bf16.msra.mxu0 0
      %538 = vmatprep.subr.bf16.mxu0 0
      %539 = vmatpush2.bf16.msra.mxu0 0
      %540 = vmatprep.subr.bf16.mxu0 0
      %541 = vmatpush2.bf16.msra.mxu0 0
      %542 = vmatprep.mubr.bf16.mxu0 0
      %543 = vmatmul.mubr.bf16.gmra.mxu0 %v484
      %v544 = vpop.f32.mrf.mxu0
      %v545 = vadd.f32 0.0, %v544
      %v546 = vpop.f32.mrf.mxu0
      %v547 = vadd.f32 0.0, %v546
      %v548 = vpop.f32.mrf.mxu0
      %v549 = vadd.f32 0.0, %v548
      %v550 = vpop.f32.mrf.mxu0
      %v551 = vadd.f32 0.0, %v550
      %552 = vmatprep.mubr.bf16.mxu0 0
      %553 = vmatmul.mubr.bf16.gmra.mxu0 %v487
      %v554 = vpop.f32.mrf.mxu0
      %v555 = vadd.f32 0.0, %v554
      %v556 = vpop.f32.mrf.mxu0
      %v557 = vadd.f32 0.0, %v556
      %v558 = vpop.f32.mrf.mxu0
      %v559 = vadd.f32 0.0, %v558
      %v560 = vpop.f32.mrf.mxu0
      %v561 = vadd.f32 0.0, %v560
      %562 = vmatprep.mubr.bf16.mxu0 0
      %563 = vmatmul.mubr.bf16.gmra.mxu0 %v490
      %v564 = vpop.f32.mrf.mxu0
      %v565 = vadd.f32 0.0, %v564
      %v566 = vpop.f32.mrf.mxu0
      %v567 = vadd.f32 0.0, %v566
      %v568 = vpop.f32.mrf.mxu0
      %v569 = vadd.f32 0.0, %v568
      %v570 = vpop.f32.mrf.mxu0
      %v571 = vadd.f32 0.0, %v570
      %572 = vmatprep.mubr.bf16.mxu0 0
      %573 = vmatmul.mubr.bf16.gmra.mxu0 %v493
      %v574 = vpop.f32.mrf.mxu0
      %v575 = vadd.f32 0.0, %v574
      %v576 = vpop.f32.mrf.mxu0
      %v577 = vadd.f32 0.0, %v576
      %v578 = vpop.f32.mrf.mxu0
      %v579 = vadd.f32 0.0, %v578
      %v580 = vpop.f32.mrf.mxu0
      %v581 = vadd.f32 0.0, %v580
      %582 = vmatprep.mubr.bf16.mxu0 0
      %583 = vmatmul.mubr.bf16.gmra.mxu0 %v496
      %v584 = vpop.f32.mrf.mxu0
      %v585 = vadd.f32 0.0, %v584
      %v586 = vpop.f32.mrf.mxu0
      %v587 = vadd.f32 0.0, %v586
      %v588 = vpop.f32.mrf.mxu0
      %v589 = vadd.f32 0.0, %v588
      %v590 = vpop.f32.mrf.mxu0
      %v591 = vadd.f32 0.0, %v590
      %592 = vmatprep.mubr.bf16.mxu0 0
      %593 = vmatmul.mubr.bf16.gmra.mxu0 %v499
      %v594 = vpop.f32.mrf.mxu0
      %v595 = vadd.f32 0.0, %v594
      %v596 = vpop.f32.mrf.mxu0
      %v597 = vadd.f32 0.0, %v596
      %v598 = vpop.f32.mrf.mxu0
      %v599 = vadd.f32 0.0, %v598
      %v600 = vpop.f32.mrf.mxu0
      %v601 = vadd.f32 0.0, %v600
      %602 = vmatprep.mubr.bf16.mxu0 0
      %603 = vmatmul.mubr.bf16.gmra.mxu0 %v502
      %v604 = vpop.f32.mrf.mxu0
      %v605 = vadd.f32 0.0, %v604
      %v606 = vpop.f32.mrf.mxu0
      %v607 = vadd.f32 0.0, %v606
      %v608 = vpop.f32.mrf.mxu0
      %v609 = vadd.f32 0.0, %v608
      %v610 = vpop.f32.mrf.mxu0
      %v611 = vadd.f32 0.0, %v610
      %612 = vmatprep.mubr.bf16.mxu0 0
      %613 = vmatmul.mubr.bf16.gmra.mxu0 %v505
      %v614 = vpop.f32.mrf.mxu0
      %v615 = vadd.f32 0.0, %v614
      %v616 = vpop.f32.mrf.mxu0
      %v617 = vadd.f32 0.0, %v616
      %v618 = vpop.f32.mrf.mxu0
      %v619 = vadd.f32 0.0, %v618
      %v620 = vpop.f32.mrf.mxu0
      %v621 = vadd.f32 0.0, %v620
      %622 = vmatprep.mubr.bf16.mxu0 0
      %623 = vmatmul.mubr.bf16.gmra.mxu0 %v508
      %v624 = vpop.f32.mrf.mxu0
      %v625 = vadd.f32 0.0, %v624
      %v626 = vpop.f32.mrf.mxu0
      %v627 = vadd.f32 0.0, %v626
      %v628 = vpop.f32.mrf.mxu0
      %v629 = vadd.f32 0.0, %v628
      %v630 = vpop.f32.mrf.mxu0
      %v631 = vadd.f32 0.0, %v630
      %632 = vdwg.mxu0
      %s633 = scalar_lea.vmem %s347, 64
      %v634 = vld [vmem:[%s633] sm:$0xff]
      %v635 = vld [vmem:[%s633 + $0x8] sm:$0xff]
      %v636 = vld [vmem:[%s633 + $0x10] sm:$0xff]
      %v637 = vld [vmem:[%s633 + $0x18] sm:$0xff]
      %v638 = vld [vmem:[%s633 + $0x20] sm:$0xff]
      %v639 = vld [vmem:[%s633 + $0x28] sm:$0xff]
      %v640 = vld [vmem:[%s633 + $0x30] sm:$0xff]
      %v641 = vld [vmem:[%s633 + $0x38] sm:$0xff]
      %v650 = vunpack.c.l.b16 %v634
      %v651 = vunpack.c.h.b16 %v634
      %v652 = vunpack.c.l.b16 %v635
      %v653 = vunpack.c.h.b16 %v635
      %v654 = vunpack.c.l.b16 %v636
      %v655 = vunpack.c.h.b16 %v636
      %v656 = vunpack.c.l.b16 %v637
      %v657 = vunpack.c.h.b16 %v637
      %v658 = vunpack.c.l.b16 %v638
      %v659 = vunpack.c.h.b16 %v638
      %v660 = vunpack.c.l.b16 %v639
      %v661 = vunpack.c.h.b16 %v639
      %v662 = vunpack.c.l.b16 %v640
      %v663 = vunpack.c.h.b16 %v640
      %v664 = vunpack.c.l.b16 %v641
      %v665 = vunpack.c.h.b16 %v641
      %v666 = vpack.c.b16 %v652, %v650
      %v667 = vpack.c.b16 %v653, %v651
      %v668 = vpack.c.b16 %v656, %v654
      %v669 = vpack.c.b16 %v657, %v655
      %v670 = vpack.c.b16 %v660, %v658
      %v671 = vpack.c.b16 %v661, %v659
      %v672 = vpack.c.b16 %v664, %v662
      %v673 = vpack.c.b16 %v665, %v663
      %682 = vmatprep.subr.bf16.mxu0 0
      %683 = vmatpush1.bf16.msra.mxu0 0
      %684 = vmatprep.subr.bf16.mxu0 0
      %685 = vmatpush1.bf16.msra.mxu0 0
      %686 = vmatprep.subr.bf16.mxu0 0
      %687 = vmatpush1.bf16.msra.mxu0 0
      %688 = vmatprep.subr.bf16.mxu0 0
      %689 = vmatpush1.bf16.msra.mxu0 0
      %690 = vmatprep.subr.bf16.mxu0 %v673
      %691 = vmatpush1.bf16.msra.mxu0 %v672
      %692 = vmatprep.subr.bf16.mxu0 %v671
      %693 = vmatpush1.bf16.msra.mxu0 %v670
      %694 = vmatprep.subr.bf16.mxu0 %v669
      %695 = vmatpush1.bf16.msra.mxu0 %v668
      %696 = vmatprep.subr.bf16.mxu0 %v667
      %697 = vmatpush1.bf16.msra.mxu0 %v666
      %698 = vmatprep.subr.bf16.mxu0 0
      %699 = vmatpush2.bf16.msra.mxu0 0
      %700 = vmatprep.subr.bf16.mxu0 0
      %701 = vmatpush2.bf16.msra.mxu0 0
      %702 = vmatprep.subr.bf16.mxu0 0
      %703 = vmatpush2.bf16.msra.mxu0 0
      %704 = vmatprep.subr.bf16.mxu0 0
      %705 = vmatpush2.bf16.msra.mxu0 0
      %706 = vmatprep.subr.bf16.mxu0 0
      %707 = vmatpush2.bf16.msra.mxu0 0
      %708 = vmatprep.subr.bf16.mxu0 0
      %709 = vmatpush2.bf16.msra.mxu0 0
      %710 = vmatprep.subr.bf16.mxu0 0
      %711 = vmatpush2.bf16.msra.mxu0 0
      %712 = vmatprep.subr.bf16.mxu0 0
      %713 = vmatpush2.bf16.msra.mxu0 0
      %714 = vmatprep.mubr.bf16.mxu0 0
      %715 = vmatmul.mubr.bf16.gmra.mxu0 %v484
      %v716 = vpop.f32.mrf.mxu0
      %v717 = vadd.f32 0.0, %v716
      %v718 = vpop.f32.mrf.mxu0
      %v719 = vadd.f32 0.0, %v718
      %v720 = vpop.f32.mrf.mxu0
      %v721 = vadd.f32 0.0, %v720
      %v722 = vpop.f32.mrf.mxu0
      %v723 = vadd.f32 0.0, %v722
      %724 = vmatprep.mubr.bf16.mxu0 0
      %725 = vmatmul.mubr.bf16.gmra.mxu0 %v487
      %v726 = vpop.f32.mrf.mxu0
      %v727 = vadd.f32 0.0, %v726
      %v728 = vpop.f32.mrf.mxu0
      %v729 = vadd.f32 0.0, %v728
      %v730 = vpop.f32.mrf.mxu0
      %v731 = vadd.f32 0.0, %v730
      %v732 = vpop.f32.mrf.mxu0
      %v733 = vadd.f32 0.0, %v732
      %734 = vmatprep.mubr.bf16.mxu0 0
      %735 = vmatmul.mubr.bf16.gmra.mxu0 %v490
      %v736 = vpop.f32.mrf.mxu0
      %v737 = vadd.f32 0.0, %v736
      %v738 = vpop.f32.mrf.mxu0
      %v739 = vadd.f32 0.0, %v738
      %v740 = vpop.f32.mrf.mxu0
      %v741 = vadd.f32 0.0, %v740
      %v742 = vpop.f32.mrf.mxu0
      %v743 = vadd.f32 0.0, %v742
      %744 = vmatprep.mubr.bf16.mxu0 0
      %745 = vmatmul.mubr.bf16.gmra.mxu0 %v493
      %v746 = vpop.f32.mrf.mxu0
      %v747 = vadd.f32 0.0, %v746
      %v748 = vpop.f32.mrf.mxu0
      %v749 = vadd.f32 0.0, %v748
      %v750 = vpop.f32.mrf.mxu0
      %v751 = vadd.f32 0.0, %v750
      %v752 = vpop.f32.mrf.mxu0
      %v753 = vadd.f32 0.0, %v752
      %754 = vmatprep.mubr.bf16.mxu0 0
      %755 = vmatmul.mubr.bf16.gmra.mxu0 %v496
      %v756 = vpop.f32.mrf.mxu0
      %v757 = vadd.f32 0.0, %v756
      %v758 = vpop.f32.mrf.mxu0
      %v759 = vadd.f32 0.0, %v758
      %v760 = vpop.f32.mrf.mxu0
      %v761 = vadd.f32 0.0, %v760
      %v762 = vpop.f32.mrf.mxu0
      %v763 = vadd.f32 0.0, %v762
      %764 = vmatprep.mubr.bf16.mxu0 0
      %765 = vmatmul.mubr.bf16.gmra.mxu0 %v499
      %v766 = vpop.f32.mrf.mxu0
      %v767 = vadd.f32 0.0, %v766
      %v768 = vpop.f32.mrf.mxu0
      %v769 = vadd.f32 0.0, %v768
      %v770 = vpop.f32.mrf.mxu0
      %v771 = vadd.f32 0.0, %v770
      %v772 = vpop.f32.mrf.mxu0
      %v773 = vadd.f32 0.0, %v772
      %774 = vmatprep.mubr.bf16.mxu0 0
      %775 = vmatmul.mubr.bf16.gmra.mxu0 %v502
      %v776 = vpop.f32.mrf.mxu0
      %v777 = vadd.f32 0.0, %v776
      %v778 = vpop.f32.mrf.mxu0
      %v779 = vadd.f32 0.0, %v778
      %v780 = vpop.f32.mrf.mxu0
      %v781 = vadd.f32 0.0, %v780
      %v782 = vpop.f32.mrf.mxu0
      %v783 = vadd.f32 0.0, %v782
      %784 = vmatprep.mubr.bf16.mxu0 0
      %785 = vmatmul.mubr.bf16.gmra.mxu0 %v505
      %v786 = vpop.f32.mrf.mxu0
      %v787 = vadd.f32 0.0, %v786
      %v788 = vpop.f32.mrf.mxu0
      %v789 = vadd.f32 0.0, %v788
      %v790 = vpop.f32.mrf.mxu0
      %v791 = vadd.f32 0.0, %v790
      %v792 = vpop.f32.mrf.mxu0
      %v793 = vadd.f32 0.0, %v792
      %794 = vmatprep.mubr.bf16.mxu0 0
      %795 = vmatmul.mubr.bf16.gmra.mxu0 %v508
      %v796 = vpop.f32.mrf.mxu0
      %v797 = vadd.f32 0.0, %v796
      %v798 = vpop.f32.mrf.mxu0
      %v799 = vadd.f32 0.0, %v798
      %v800 = vpop.f32.mrf.mxu0
      %v801 = vadd.f32 0.0, %v800
      %v802 = vpop.f32.mrf.mxu0
      %v803 = vadd.f32 0.0, %v802
      %804 = vdwg.mxu0
      %s805 = scalar_lea.vmem %s347, 128
      %v806 = vld [vmem:[%s805] sm:$0xff]
      %v807 = vld [vmem:[%s805 + $0x8] sm:$0xff]
      %v808 = vld [vmem:[%s805 + $0x10] sm:$0xff]
      %v809 = vld [vmem:[%s805 + $0x18] sm:$0xff]
      %v810 = vld [vmem:[%s805 + $0x20] sm:$0xff]
      %v811 = vld [vmem:[%s805 + $0x28] sm:$0xff]
      %v812 = vld [vmem:[%s805 + $0x30] sm:$0xff]
      %v813 = vld [vmem:[%s805 + $0x38] sm:$0xff]
      %v822 = vunpack.c.l.b16 %v806
      %v823 = vunpack.c.h.b16 %v806
      %v824 = vunpack.c.l.b16 %v807
      %v825 = vunpack.c.h.b16 %v807
      %v826 = vunpack.c.l.b16 %v808
      %v827 = vunpack.c.h.b16 %v808
      %v828 = vunpack.c.l.b16 %v809
      %v829 = vunpack.c.h.b16 %v809
      %v830 = vunpack.c.l.b16 %v810
      %v831 = vunpack.c.h.b16 %v810
      %v832 = vunpack.c.l.b16 %v811
      %v833 = vunpack.c.h.b16 %v811
      %v834 = vunpack.c.l.b16 %v812
      %v835 = vunpack.c.h.b16 %v812
      %v836 = vunpack.c.l.b16 %v813
      %v837 = vunpack.c.h.b16 %v813
      %v838 = vpack.c.b16 %v824, %v822
      %v839 = vpack.c.b16 %v825, %v823
      %v840 = vpack.c.b16 %v828, %v826
      %v841 = vpack.c.b16 %v829, %v827
      %v842 = vpack.c.b16 %v832, %v830
      %v843 = vpack.c.b16 %v833, %v831
      %v844 = vpack.c.b16 %v836, %v834
      %v845 = vpack.c.b16 %v837, %v835
      %854 = vmatprep.subr.bf16.mxu0 0
      %855 = vmatpush1.bf16.msra.mxu0 0
      %856 = vmatprep.subr.bf16.mxu0 0
      %857 = vmatpush1.bf16.msra.mxu0 0
      %858 = vmatprep.subr.bf16.mxu0 0
      %859 = vmatpush1.bf16.msra.mxu0 0
      %860 = vmatprep.subr.bf16.mxu0 0
      %861 = vmatpush1.bf16.msra.mxu0 0
      %862 = vmatprep.subr.bf16.mxu0 %v845
      %863 = vmatpush1.bf16.msra.mxu0 %v844
      %864 = vmatprep.subr.bf16.mxu0 %v843
      %865 = vmatpush1.bf16.msra.mxu0 %v842
      %866 = vmatprep.subr.bf16.mxu0 %v841
      %867 = vmatpush1.bf16.msra.mxu0 %v840
      %868 = vmatprep.subr.bf16.mxu0 %v839
      %869 = vmatpush1.bf16.msra.mxu0 %v838
      %870 = vmatprep.subr.bf16.mxu0 0
      %871 = vmatpush2.bf16.msra.mxu0 0
      %872 = vmatprep.subr.bf16.mxu0 0
      %873 = vmatpush2.bf16.msra.mxu0 0
      %874 = vmatprep.subr.bf16.mxu0 0
      %875 = vmatpush2.bf16.msra.mxu0 0
      %876 = vmatprep.subr.bf16.mxu0 0
      %877 = vmatpush2.bf16.msra.mxu0 0
      %878 = vmatprep.subr.bf16.mxu0 0
      %879 = vmatpush2.bf16.msra.mxu0 0
      %880 = vmatprep.subr.bf16.mxu0 0
      %881 = vmatpush2.bf16.msra.mxu0 0
      %882 = vmatprep.subr.bf16.mxu0 0
      %883 = vmatpush2.bf16.msra.mxu0 0
      %884 = vmatprep.subr.bf16.mxu0 0
      %885 = vmatpush2.bf16.msra.mxu0 0
      %886 = vmatprep.mubr.bf16.mxu0 0
      %887 = vmatmul.mubr.bf16.gmra.mxu0 %v484
      %v888 = vpop.f32.mrf.mxu0
      %v889 = vadd.f32 0.0, %v888
      %v890 = vpop.f32.mrf.mxu0
      %v891 = vadd.f32 0.0, %v890
      %v892 = vpop.f32.mrf.mxu0
      %v893 = vadd.f32 0.0, %v892
      %v894 = vpop.f32.mrf.mxu0
      %v895 = vadd.f32 0.0, %v894
      %896 = vmatprep.mubr.bf16.mxu0 0
      %897 = vmatmul.mubr.bf16.gmra.mxu0 %v487
      %v898 = vpop.f32.mrf.mxu0
      %v899 = vadd.f32 0.0, %v898
      %v900 = vpop.f32.mrf.mxu0
      %v901 = vadd.f32 0.0, %v900
      %v902 = vpop.f32.mrf.mxu0
      %v903 = vadd.f32 0.0, %v902
      %v904 = vpop.f32.mrf.mxu0
      %v905 = vadd.f32 0.0, %v904
      %906 = vmatprep.mubr.bf16.mxu0 0
      %907 = vmatmul.mubr.bf16.gmra.mxu0 %v490
      %v908 = vpop.f32.mrf.mxu0
      %v909 = vadd.f32 0.0, %v908
      %v910 = vpop.f32.mrf.mxu0
      %v911 = vadd.f32 0.0, %v910
      %v912 = vpop.f32.mrf.mxu0
      %v913 = vadd.f32 0.0, %v912
      %v914 = vpop.f32.mrf.mxu0
      %v915 = vadd.f32 0.0, %v914
      %916 = vmatprep.mubr.bf16.mxu0 0
      %917 = vmatmul.mubr.bf16.gmra.mxu0 %v493
      %v918 = vpop.f32.mrf.mxu0
      %v919 = vadd.f32 0.0, %v918
      %v920 = vpop.f32.mrf.mxu0
      %v921 = vadd.f32 0.0, %v920
      %v922 = vpop.f32.mrf.mxu0
      %v923 = vadd.f32 0.0, %v922
      %v924 = vpop.f32.mrf.mxu0
      %v925 = vadd.f32 0.0, %v924
      %926 = vmatprep.mubr.bf16.mxu0 0
      %927 = vmatmul.mubr.bf16.gmra.mxu0 %v496
      %v928 = vpop.f32.mrf.mxu0
      %v929 = vadd.f32 0.0, %v928
      %v930 = vpop.f32.mrf.mxu0
      %v931 = vadd.f32 0.0, %v930
      %v932 = vpop.f32.mrf.mxu0
      %v933 = vadd.f32 0.0, %v932
      %v934 = vpop.f32.mrf.mxu0
      %v935 = vadd.f32 0.0, %v934
      %936 = vmatprep.mubr.bf16.mxu0 0
      %937 = vmatmul.mubr.bf16.gmra.mxu0 %v499
      %v938 = vpop.f32.mrf.mxu0
      %v939 = vadd.f32 0.0, %v938
      %v940 = vpop.f32.mrf.mxu0
      %v941 = vadd.f32 0.0, %v940
      %v942 = vpop.f32.mrf.mxu0
      %v943 = vadd.f32 0.0, %v942
      %v944 = vpop.f32.mrf.mxu0
      %v945 = vadd.f32 0.0, %v944
      %946 = vmatprep.mubr.bf16.mxu0 0
      %947 = vmatmul.mubr.bf16.gmra.mxu0 %v502
      %v948 = vpop.f32.mrf.mxu0
      %v949 = vadd.f32 0.0, %v948
      %v950 = vpop.f32.mrf.mxu0
      %v951 = vadd.f32 0.0, %v950
      %v952 = vpop.f32.mrf.mxu0
      %v953 = vadd.f32 0.0, %v952
      %v954 = vpop.f32.mrf.mxu0
      %v955 = vadd.f32 0.0, %v954
      %956 = vmatprep.mubr.bf16.mxu0 0
      %957 = vmatmul.mubr.bf16.gmra.mxu0 %v505
      %v958 = vpop.f32.mrf.mxu0
      %v959 = vadd.f32 0.0, %v958
      %v960 = vpop.f32.mrf.mxu0
      %v961 = vadd.f32 0.0, %v960
      %v962 = vpop.f32.mrf.mxu0
      %v963 = vadd.f32 0.0, %v962
      %v964 = vpop.f32.mrf.mxu0
      %v965 = vadd.f32 0.0, %v964
      %966 = vmatprep.mubr.bf16.mxu0 0
      %967 = vmatmul.mubr.bf16.gmra.mxu0 %v508
      %v968 = vpop.f32.mrf.mxu0
      %v969 = vadd.f32 0.0, %v968
      %v970 = vpop.f32.mrf.mxu0
      %v971 = vadd.f32 0.0, %v970
      %v972 = vpop.f32.mrf.mxu0
      %v973 = vadd.f32 0.0, %v972
      %v974 = vpop.f32.mrf.mxu0
      %v975 = vadd.f32 0.0, %v974
      %976 = vdwg.mxu0
      %v977 = vrot.slane %v545, 7
      %v978 = vrot.slane %v547, 7
      %v979 = vrot.slane %v549, 7
      %v980 = vrot.slane %v551, 7
      %v981 = vrot.slane %v555, 7
      %v982 = vrot.slane %v557, 7
      %v983 = vrot.slane %v559, 7
      %v984 = vrot.slane %v561, 7
      %v985 = vrot.slane %v565, 7
      %v986 = vrot.slane %v567, 7
      %v987 = vrot.slane %v569, 7
      %v988 = vrot.slane %v571, 7
      %v989 = vrot.slane %v575, 7
      %v990 = vrot.slane %v577, 7
      %v991 = vrot.slane %v579, 7
      %v992 = vrot.slane %v581, 7
      %v993 = vrot.slane %v585, 7
      %v994 = vrot.slane %v587, 7
      %v995 = vrot.slane %v589, 7
      %v996 = vrot.slane %v591, 7
      %v997 = vrot.slane %v595, 7
      %v998 = vrot.slane %v597, 7
      %v999 = vrot.slane %v599, 7
      %v1000 = vrot.slane %v601, 7
      %v1001 = vrot.slane %v605, 7
      %v1002 = vrot.slane %v607, 7
      %v1003 = vrot.slane %v609, 7
      %v1004 = vrot.slane %v611, 7
      %v1005 = vrot.slane %v615, 7
      %v1006 = vrot.slane %v617, 7
      %v1007 = vrot.slane %v619, 7
      %v1008 = vrot.slane %v621, 7
      %v1009 = vrot.slane %v625, 7
      %v1010 = vrot.slane %v627, 7
      %v1011 = vrot.slane %v629, 7
      %v1012 = vrot.slane %v631, 7
      %v1013 = vlaneseq
      %v1014 = vshrl.u32 %v1013, 7
      %vm1015 = vcmp.lt.s32.totalorder %v1014, 1
      %v1016 = vsel %vm1015, %v1009, %v1011
      %v1017 = vsel %vm1015, %v1010, %v1012
      %v1018 = vsel %vm1015, %v1007, %v1009
      %v1019 = vsel %vm1015, %v1008, %v1010
      %v1020 = vsel %vm1015, %v1005, %v1007
      %v1021 = vsel %vm1015, %v1006, %v1008
      %v1022 = vsel %vm1015, %v1003, %v1005
      %v1023 = vsel %vm1015, %v1004, %v1006
      %v1024 = vsel %vm1015, %v1001, %v1003
      %v1025 = vsel %vm1015, %v1002, %v1004
      %v1026 = vsel %vm1015, %v999, %v1001
      %v1027 = vsel %vm1015, %v1000, %v1002
      %v1028 = vsel %vm1015, %v997, %v999
      %v1029 = vsel %vm1015, %v998, %v1000
      %v1030 = vsel %vm1015, %v995, %v997
      %v1031 = vsel %vm1015, %v996, %v998
      %v1032 = vsel %vm1015, %v993, %v995
      %v1033 = vsel %vm1015, %v994, %v996
      %v1034 = vsel %vm1015, %v991, %v993
      %v1035 = vsel %vm1015, %v992, %v994
      %v1036 = vsel %vm1015, %v989, %v991
      %v1037 = vsel %vm1015, %v990, %v992
      %v1038 = vsel %vm1015, %v987, %v989
      %v1039 = vsel %vm1015, %v988, %v990
      %v1040 = vsel %vm1015, %v985, %v987
      %v1041 = vsel %vm1015, %v986, %v988
      %v1042 = vsel %vm1015, %v983, %v985
      %v1043 = vsel %vm1015, %v984, %v986
      %v1044 = vsel %vm1015, %v981, %v983
      %v1045 = vsel %vm1015, %v982, %v984
      %v1046 = vsel %vm1015, %v979, %v981
      %v1047 = vsel %vm1015, %v980, %v982
      %v1048 = vsel %vm1015, %v977, %v979
      %v1049 = vsel %vm1015, %v978, %v980
      %v1050 = vsel %vm1015, %v1011, %v977
      %v1051 = vsel %vm1015, %v1012, %v978
      %v1052 = vadd.f32 %v1050, %v717
      %v1053 = vadd.f32 %v1051, %v719
      %v1054 = vadd.f32 %v1048, %v721
      %v1055 = vadd.f32 %v1049, %v723
      %v1056 = vadd.f32 %v1046, %v727
      %v1057 = vadd.f32 %v1047, %v729
      %v1058 = vadd.f32 %v1044, %v731
      %v1059 = vadd.f32 %v1045, %v733
      %v1060 = vadd.f32 %v1042, %v737
      %v1061 = vadd.f32 %v1043, %v739
      %v1062 = vadd.f32 %v1040, %v741
      %v1063 = vadd.f32 %v1041, %v743
      %v1064 = vadd.f32 %v1038, %v747
      %v1065 = vadd.f32 %v1039, %v749
      %v1066 = vadd.f32 %v1036, %v751
      %v1067 = vadd.f32 %v1037, %v753
      %v1068 = vadd.f32 %v1034, %v757
      %v1069 = vadd.f32 %v1035, %v759
      %v1070 = vadd.f32 %v1032, %v761
      %v1071 = vadd.f32 %v1033, %v763
      %v1072 = vadd.f32 %v1030, %v767
      %v1073 = vadd.f32 %v1031, %v769
      %v1074 = vadd.f32 %v1028, %v771
      %v1075 = vadd.f32 %v1029, %v773
      %v1076 = vadd.f32 %v1026, %v777
      %v1077 = vadd.f32 %v1027, %v779
      %v1078 = vadd.f32 %v1024, %v781
      %v1079 = vadd.f32 %v1025, %v783
      %v1080 = vadd.f32 %v1022, %v787
      %v1081 = vadd.f32 %v1023, %v789
      %v1082 = vadd.f32 %v1020, %v791
      %v1083 = vadd.f32 %v1021, %v793
      %v1084 = vadd.f32 %v1018, %v797
      %v1085 = vadd.f32 %v1019, %v799
      %v1086 = vadd.f32 %v1016, %v801
      %v1087 = vadd.f32 %v1017, %v803
      %v1088 = vrot.slane %v889, 1
      %v1089 = vrot.slane %v891, 1
      %v1090 = vrot.slane %v893, 1
      %v1091 = vrot.slane %v895, 1
      %v1092 = vrot.slane %v899, 1
      %v1093 = vrot.slane %v901, 1
      %v1094 = vrot.slane %v903, 1
      %v1095 = vrot.slane %v905, 1
      %v1096 = vrot.slane %v909, 1
      %v1097 = vrot.slane %v911, 1
      %v1098 = vrot.slane %v913, 1
      %v1099 = vrot.slane %v915, 1
      %v1100 = vrot.slane %v919, 1
      %v1101 = vrot.slane %v921, 1
      %v1102 = vrot.slane %v923, 1
      %v1103 = vrot.slane %v925, 1
      %v1104 = vrot.slane %v929, 1
      %v1105 = vrot.slane %v931, 1
      %v1106 = vrot.slane %v933, 1
      %v1107 = vrot.slane %v935, 1
      %v1108 = vrot.slane %v939, 1
      %v1109 = vrot.slane %v941, 1
      %v1110 = vrot.slane %v943, 1
      %v1111 = vrot.slane %v945, 1
      %v1112 = vrot.slane %v949, 1
      %v1113 = vrot.slane %v951, 1
      %v1114 = vrot.slane %v953, 1
      %v1115 = vrot.slane %v955, 1
      %v1116 = vrot.slane %v959, 1
      %v1117 = vrot.slane %v961, 1
      %v1118 = vrot.slane %v963, 1
      %v1119 = vrot.slane %v965, 1
      %v1120 = vrot.slane %v969, 1
      %v1121 = vrot.slane %v971, 1
      %v1122 = vrot.slane %v973, 1
      %v1123 = vrot.slane %v975, 1
      %vm1124 = vcmp.lt.s32.totalorder %v1014, 7
      %v1125 = vsel %vm1124, %v1120, %v1122
      %v1126 = vsel %vm1124, %v1121, %v1123
      %v1127 = vsel %vm1124, %v1118, %v1120
      %v1128 = vsel %vm1124, %v1119, %v1121
      %v1129 = vsel %vm1124, %v1116, %v1118
      %v1130 = vsel %vm1124, %v1117, %v1119
      %v1131 = vsel %vm1124, %v1114, %v1116
      %v1132 = vsel %vm1124, %v1115, %v1117
      %v1133 = vsel %vm1124, %v1112, %v1114
      %v1134 = vsel %vm1124, %v1113, %v1115
      %v1135 = vsel %vm1124, %v1110, %v1112
      %v1136 = vsel %vm1124, %v1111, %v1113
      %v1137 = vsel %vm1124, %v1108, %v1110
      %v1138 = vsel %vm1124, %v1109, %v1111
      %v1139 = vsel %vm1124, %v1106, %v1108
      %v1140 = vsel %vm1124, %v1107, %v1109
      %v1141 = vsel %vm1124, %v1104, %v1106
      %v1142 = vsel %vm1124, %v1105, %v1107
      %v1143 = vsel %vm1124, %v1102, %v1104
      %v1144 = vsel %vm1124, %v1103, %v1105
      %v1145 = vsel %vm1124, %v1100, %v1102
      %v1146 = vsel %vm1124, %v1101, %v1103
      %v1147 = vsel %vm1124, %v1098, %v1100
      %v1148 = vsel %vm1124, %v1099, %v1101
      %v1149 = vsel %vm1124, %v1096, %v1098
      %v1150 = vsel %vm1124, %v1097, %v1099
      %v1151 = vsel %vm1124, %v1094, %v1096
      %v1152 = vsel %vm1124, %v1095, %v1097
      %v1153 = vsel %vm1124, %v1092, %v1094
      %v1154 = vsel %vm1124, %v1093, %v1095
      %v1155 = vsel %vm1124, %v1090, %v1092
      %v1156 = vsel %vm1124, %v1091, %v1093
      %v1157 = vsel %vm1124, %v1088, %v1090
      %v1158 = vsel %vm1124, %v1089, %v1091
      %v1159 = vsel %vm1124, %v1122, %v1088
      %v1160 = vsel %vm1124, %v1123, %v1089
      %v1161 = vadd.f32 %v1052, %v1157
      %v1162 = vadd.f32 %v1053, %v1158
      %v1163 = vadd.f32 %v1054, %v1155
      %v1164 = vadd.f32 %v1055, %v1156
      %v1165 = vadd.f32 %v1056, %v1153
      %v1166 = vadd.f32 %v1057, %v1154
      %v1167 = vadd.f32 %v1058, %v1151
      %v1168 = vadd.f32 %v1059, %v1152
      %v1169 = vadd.f32 %v1060, %v1149
      %v1170 = vadd.f32 %v1061, %v1150
      %v1171 = vadd.f32 %v1062, %v1147
      %v1172 = vadd.f32 %v1063, %v1148
      %v1173 = vadd.f32 %v1064, %v1145
      %v1174 = vadd.f32 %v1065, %v1146
      %v1175 = vadd.f32 %v1066, %v1143
      %v1176 = vadd.f32 %v1067, %v1144
      %v1177 = vadd.f32 %v1068, %v1141
      %v1178 = vadd.f32 %v1069, %v1142
      %v1179 = vadd.f32 %v1070, %v1139
      %v1180 = vadd.f32 %v1071, %v1140
      %v1181 = vadd.f32 %v1072, %v1137
      %v1182 = vadd.f32 %v1073, %v1138
      %v1183 = vadd.f32 %v1074, %v1135
      %v1184 = vadd.f32 %v1075, %v1136
      %v1185 = vadd.f32 %v1076, %v1133
      %v1186 = vadd.f32 %v1077, %v1134
      %v1187 = vadd.f32 %v1078, %v1131
      %v1188 = vadd.f32 %v1079, %v1132
      %v1189 = vadd.f32 %v1080, %v1129
      %v1190 = vadd.f32 %v1081, %v1130
      %v1191 = vadd.f32 %v1082, %v1127
      %v1192 = vadd.f32 %v1083, %v1128
      %v1193 = vadd.f32 %v1084, %v1125
      %v1194 = vadd.f32 %v1085, %v1126
      %v1195 = vadd.f32 %v1086, %v1159
      %v1196 = vadd.f32 %v1087, %v1160
      %v1197 = vld [vmem:[%s361] sm:$0x3]
      %v1199 = vlaneseq
      %v1200 = vshrl.u32 %v1199, 7
      %v1201 = vsub.s32 0, %v1200
      %v1202 = vrot.slane %v1197, %v1201
      %v1203 = vlaneseq
      %v1204 = vshrl.u32 %v1203, 7
      %v1205 = vsub.s32 1, %v1204
      %v1206 = vrot.slane %v1197, %v1205
      %v1209 = vadd.f32 %v1161, %v1202
      %v1210 = vadd.f32 %v1162, %v1206
      %v1211 = vadd.f32 %v1163, %v1202
      %v1212 = vadd.f32 %v1164, %v1206
      %v1213 = vadd.f32 %v1165, %v1202
      %v1214 = vadd.f32 %v1166, %v1206
      %v1215 = vadd.f32 %v1167, %v1202
      %v1216 = vadd.f32 %v1168, %v1206
      %v1217 = vadd.f32 %v1169, %v1202
      %v1218 = vadd.f32 %v1170, %v1206
      %v1219 = vadd.f32 %v1171, %v1202
      %v1220 = vadd.f32 %v1172, %v1206
      %v1221 = vadd.f32 %v1173, %v1202
      %v1222 = vadd.f32 %v1174, %v1206
      %v1223 = vadd.f32 %v1175, %v1202
      %v1224 = vadd.f32 %v1176, %v1206
      %v1225 = vadd.f32 %v1177, %v1202
      %v1226 = vadd.f32 %v1178, %v1206
      %v1227 = vadd.f32 %v1179, %v1202
      %v1228 = vadd.f32 %v1180, %v1206
      %v1229 = vadd.f32 %v1181, %v1202
      %v1230 = vadd.f32 %v1182, %v1206
      %v1231 = vadd.f32 %v1183, %v1202
      %v1232 = vadd.f32 %v1184, %v1206
      %v1233 = vadd.f32 %v1185, %v1202
      %v1234 = vadd.f32 %v1186, %v1206
      %v1235 = vadd.f32 %v1187, %v1202
      %v1236 = vadd.f32 %v1188, %v1206
      %v1237 = vadd.f32 %v1189, %v1202
      %v1238 = vadd.f32 %v1190, %v1206
      %v1239 = vadd.f32 %v1191, %v1202
      %v1240 = vadd.f32 %v1192, %v1206
      %v1241 = vadd.f32 %v1193, %v1202
      %v1242 = vadd.f32 %v1194, %v1206
      %v1243 = vadd.f32 %v1195, %v1202
      %v1244 = vadd.f32 %v1196, %v1206
      %1245 = vst [vmem:[#allocation3] sm:$0xff] %v1209
      %1246 = vst [vmem:[#allocation3 + $0x8] sm:$0xff] %v1210
      %1247 = vst [vmem:[#allocation3 + $0x10] sm:$0xff] %v1211
      %1248 = vst [vmem:[#allocation3 + $0x18] sm:$0xff] %v1212
      %1249 = vst [vmem:[#allocation3 + $0x20] sm:$0xff] %v1213
      %1250 = vst [vmem:[#allocation3 + $0x28] sm:$0xff] %v1214
      %1251 = vst [vmem:[#allocation3 + $0x30] sm:$0xff] %v1215
      %1252 = vst [vmem:[#allocation3 + $0x38] sm:$0xff] %v1216
      %1253 = vst [vmem:[#allocation3 + $0x40] sm:$0xff] %v1217
      %1254 = vst [vmem:[#allocation3 + $0x48] sm:$0xff] %v1218
      %1255 = vst [vmem:[#allocation3 + $0x50] sm:$0xff] %v1219
      %1256 = vst [vmem:[#allocation3 + $0x58] sm:$0xff] %v1220
      %1257 = vst [vmem:[#allocation3 + $0x60] sm:$0xff] %v1221
      %1258 = vst [vmem:[#allocation3 + $0x68] sm:$0xff] %v1222
      %1259 = vst [vmem:[#allocation3 + $0x70] sm:$0xff] %v1223
      %1260 = vst [vmem:[#allocation3 + $0x78] sm:$0xff] %v1224
      %1261 = vst [vmem:[#allocation3 + $0x80] sm:$0xff] %v1225
      %1262 = vst [vmem:[#allocation3 + $0x88] sm:$0xff] %v1226
      %1263 = vst [vmem:[#allocation3 + $0x90] sm:$0xff] %v1227
      %1264 = vst [vmem:[#allocation3 + $0x98] sm:$0xff] %v1228
      %1265 = vst [vmem:[#allocation3 + $0xa0] sm:$0xff] %v1229
      %1266 = vst [vmem:[#allocation3 + $0xa8] sm:$0xff] %v1230
      %1267 = vst [vmem:[#allocation3 + $0xb0] sm:$0xff] %v1231
      %1268 = vst [vmem:[#allocation3 + $0xb8] sm:$0xff] %v1232
      %1269 = vst [vmem:[#allocation3 + $0xc0] sm:$0xff] %v1233
      %1270 = vst [vmem:[#allocation3 + $0xc8] sm:$0xff] %v1234
      %1271 = vst [vmem:[#allocation3 + $0xd0] sm:$0xff] %v1235
      %1272 = vst [vmem:[#allocation3 + $0xd8] sm:$0xff] %v1236
      %1273 = vst [vmem:[#allocation3 + $0xe0] sm:$0xff] %v1237
      %1274 = vst [vmem:[#allocation3 + $0xe8] sm:$0xff] %v1238
      %1275 = vst [vmem:[#allocation3 + $0xf0] sm:$0xff] %v1239
      %1276 = vst [vmem:[#allocation3 + $0xf8] sm:$0xff] %v1240
      %1277 = vst [vmem:[#allocation3 + $0x100] sm:$0xff] %v1241
      %1278 = vst [vmem:[#allocation3 + $0x108] sm:$0xff] %v1242
      %1279 = vst [vmem:[#allocation3 + $0x110] sm:$0xff] %v1243
      %1280 = vst [vmem:[#allocation3 + $0x118] sm:$0xff] %v1244
      %v1281 = vtanh.pop %v1209
      %v1282 = vtanh.pop %v1210
      %v1283 = vtanh.pop %v1211
      %v1284 = vtanh.pop %v1212
      %v1285 = vtanh.pop %v1213
      %v1286 = vtanh.pop %v1214
      %v1287 = vtanh.pop %v1215
      %v1288 = vtanh.pop %v1216
      %v1289 = vtanh.pop %v1217
      %v1290 = vtanh.pop %v1218
      %v1291 = vtanh.pop %v1219
      %v1292 = vtanh.pop %v1220
      %v1293 = vtanh.pop %v1221
      %v1294 = vtanh.pop %v1222
      %v1295 = vtanh.pop %v1223
      %v1296 = vtanh.pop %v1224
      %v1297 = vtanh.pop %v1225
      %v1298 = vtanh.pop %v1226
      %v1299 = vtanh.pop %v1227
      %v1300 = vtanh.pop %v1228
      %v1301 = vtanh.pop %v1229
      %v1302 = vtanh.pop %v1230
      %v1303 = vtanh.pop %v1231
      %v1304 = vtanh.pop %v1232
      %v1305 = vtanh.pop %v1233
      %v1306 = vtanh.pop %v1234
      %v1307 = vtanh.pop %v1235
      %v1308 = vtanh.pop %v1236
      %v1309 = vtanh.pop %v1237
      %v1310 = vtanh.pop %v1238
      %v1311 = vtanh.pop %v1239
      %v1312 = vtanh.pop %v1240
      %v1313 = vtanh.pop %v1241
      %v1314 = vtanh.pop %v1242
      %v1315 = vtanh.pop %v1243
      %v1316 = vtanh.pop %v1244
      %v1317 = vpack.c.bf16 %v1283, %v1281
      %v1318 = vpack.c.bf16 %v1284, %v1282
      %v1319 = vpack.c.bf16 %v1287, %v1285
      %v1320 = vpack.c.bf16 %v1288, %v1286
      %v1321 = vpack.c.bf16 %v1291, %v1289
      %v1322 = vpack.c.bf16 %v1292, %v1290
      %v1323 = vpack.c.bf16 %v1295, %v1293
      %v1324 = vpack.c.bf16 %v1296, %v1294
      %v1325 = vpack.c.bf16 %v1299, %v1297
      %v1326 = vpack.c.bf16 %v1300, %v1298
      %v1327 = vpack.c.bf16 %v1303, %v1301
      %v1328 = vpack.c.bf16 %v1304, %v1302
      %v1329 = vpack.c.bf16 %v1307, %v1305
      %v1330 = vpack.c.bf16 %v1308, %v1306
      %v1331 = vpack.c.bf16 %v1311, %v1309
      %v1332 = vpack.c.bf16 %v1312, %v1310
      %v1333 = vpack.c.bf16 %v1315, %v1313
      %v1334 = vpack.c.bf16 %v1316, %v1314
      %v1335 = vld [vmem:[%s0] sm:$0xff]
      %v1336 = vld [vmem:[%s0 + $0x8] sm:$0xff]
      %v1337 = vld [vmem:[%s0 + $0x10] sm:$0xff]
      %v1338 = vld [vmem:[%s0 + $0x18] sm:$0xff]
      %v1339 = vld [vmem:[%s0 + $0x20] sm:$0xff]
      %v1340 = vld [vmem:[%s0 + $0x28] sm:$0xff]
      %v1341 = vld [vmem:[%s0 + $0x30] sm:$0xff]
      %v1342 = vld [vmem:[%s0 + $0x38] sm:$0xff]
      %v1343 = vld [vmem:[%s0 + $0x40] sm:$0xff]
      %v1344 = vld [vmem:[%s0 + $0x48] sm:$0xff]
      %v1345 = vld [vmem:[%s0 + $0x50] sm:$0xff]
      %v1346 = vld [vmem:[%s0 + $0x58] sm:$0xff]
      %v1347 = vld [vmem:[%s0 + $0x60] sm:$0xff]
      %v1348 = vld [vmem:[%s0 + $0x68] sm:$0xff]
      %v1349 = vld [vmem:[%s0 + $0x70] sm:$0xff]
      %v1350 = vld [vmem:[%s0 + $0x78] sm:$0xff]
      %v1351 = vld [vmem:[%s0 + $0x80] sm:$0xff]
      %v1352 = vld [vmem:[%s0 + $0x88] sm:$0xff]
      %v1371 = vunpack.c.l.b16 %v1335
      %v1372 = vunpack.c.h.b16 %v1335
      %v1373 = vunpack.c.l.b16 %v1336
      %v1374 = vunpack.c.h.b16 %v1336
      %v1375 = vunpack.c.l.b16 %v1337
      %v1376 = vunpack.c.h.b16 %v1337
      %v1377 = vunpack.c.l.b16 %v1338
      %v1378 = vunpack.c.h.b16 %v1338
      %v1379 = vunpack.c.l.b16 %v1339
      %v1380 = vunpack.c.h.b16 %v1339
      %v1381 = vunpack.c.l.b16 %v1340
      %v1382 = vunpack.c.h.b16 %v1340
      %v1383 = vunpack.c.l.b16 %v1341
      %v1384 = vunpack.c.h.b16 %v1341
      %v1385 = vunpack.c.l.b16 %v1342
      %v1386 = vunpack.c.h.b16 %v1342
      %v1387 = vunpack.c.l.b16 %v1343
      %v1388 = vunpack.c.h.b16 %v1343
      %v1389 = vunpack.c.l.b16 %v1344
      %v1390 = vunpack.c.h.b16 %v1344
      %v1391 = vunpack.c.l.b16 %v1345
      %v1392 = vunpack.c.h.b16 %v1345
      %v1393 = vunpack.c.l.b16 %v1346
      %v1394 = vunpack.c.h.b16 %v1346
      %v1395 = vunpack.c.l.b16 %v1347
      %v1396 = vunpack.c.h.b16 %v1347
      %v1397 = vunpack.c.l.b16 %v1348
      %v1398 = vunpack.c.h.b16 %v1348
      %v1399 = vunpack.c.l.b16 %v1349
      %v1400 = vunpack.c.h.b16 %v1349
      %v1401 = vunpack.c.l.b16 %v1350
      %v1402 = vunpack.c.h.b16 %v1350
      %v1403 = vunpack.c.l.b16 %v1351
      %v1404 = vunpack.c.h.b16 %v1351
      %v1405 = vunpack.c.l.b16 %v1352
      %v1406 = vunpack.c.h.b16 %v1352
      %v1407 = vpack.c.b16 %v1373, %v1371
      %v1408 = vpack.c.b16 %v1374, %v1372
      %v1409 = vpack.c.b16 %v1377, %v1375
      %v1410 = vpack.c.b16 %v1378, %v1376
      %v1411 = vpack.c.b16 %v1381, %v1379
      %v1412 = vpack.c.b16 %v1382, %v1380
      %v1413 = vpack.c.b16 %v1385, %v1383
      %v1414 = vpack.c.b16 %v1386, %v1384
      %v1415 = vpack.c.b16 %v1389, %v1387
      %v1416 = vpack.c.b16 %v1390, %v1388
      %v1417 = vpack.c.b16 %v1393, %v1391
      %v1418 = vpack.c.b16 %v1394, %v1392
      %v1419 = vpack.c.b16 %v1397, %v1395
      %v1420 = vpack.c.b16 %v1398, %v1396
      %v1421 = vpack.c.b16 %v1401, %v1399
      %v1422 = vpack.c.b16 %v1402, %v1400
      %v1423 = vpack.c.b16 %v1405, %v1403
      %v1424 = vpack.c.b16 %v1406, %v1404
      %v1443 = vmul.bf16 %v1317, %v1407
      %v1444 = vmul.bf16 %v1318, %v1408
      %v1445 = vmul.bf16 %v1319, %v1409
      %v1446 = vmul.bf16 %v1320, %v1410
      %v1447 = vmul.bf16 %v1321, %v1411
      %v1448 = vmul.bf16 %v1322, %v1412
      %v1449 = vmul.bf16 %v1323, %v1413
      %v1450 = vmul.bf16 %v1324, %v1414
      %v1451 = vmul.bf16 %v1325, %v1415
      %v1452 = vmul.bf16 %v1326, %v1416
      %v1453 = vmul.bf16 %v1327, %v1417
      %v1454 = vmul.bf16 %v1328, %v1418
      %v1455 = vmul.bf16 %v1329, %v1419
      %v1456 = vmul.bf16 %v1330, %v1420
      %v1457 = vmul.bf16 %v1331, %v1421
      %v1458 = vmul.bf16 %v1332, %v1422
      %v1459 = vmul.bf16 %v1333, %v1423
      %v1460 = vmul.bf16 %v1334, %v1424
      %v1479 = vunpack.c.l.b16 %v1443
      %v1480 = vunpack.c.l.b16 %v1444
      %v1481 = vunpack.c.h.b16 %v1443
      %v1482 = vunpack.c.h.b16 %v1444
      %v1483 = vunpack.c.l.b16 %v1445
      %v1484 = vunpack.c.l.b16 %v1446
      %v1485 = vunpack.c.h.b16 %v1445
      %v1486 = vunpack.c.h.b16 %v1446
      %v1487 = vunpack.c.l.b16 %v1447
      %v1488 = vunpack.c.l.b16 %v1448
      %v1489 = vunpack.c.h.b16 %v1447
      %v1490 = vunpack.c.h.b16 %v1448
      %v1491 = vunpack.c.l.b16 %v1449
      %v1492 = vunpack.c.l.b16 %v1450
      %v1493 = vunpack.c.h.b16 %v1449
      %v1494 = vunpack.c.h.b16 %v1450
      %v1495 = vunpack.c.l.b16 %v1451
      %v1496 = vunpack.c.l.b16 %v1452
      %v1497 = vunpack.c.h.b16 %v1451
      %v1498 = vunpack.c.h.b16 %v1452
      %v1499 = vunpack.c.l.b16 %v1453
      %v1500 = vunpack.c.l.b16 %v1454
      %v1501 = vunpack.c.h.b16 %v1453
      %v1502 = vunpack.c.h.b16 %v1454
      %v1503 = vunpack.c.l.b16 %v1455
      %v1504 = vunpack.c.l.b16 %v1456
      %v1505 = vunpack.c.h.b16 %v1455
      %v1506 = vunpack.c.h.b16 %v1456
      %v1507 = vunpack.c.l.b16 %v1457
      %v1508 = vunpack.c.l.b16 %v1458
      %v1509 = vunpack.c.h.b16 %v1457
      %v1510 = vunpack.c.h.b16 %v1458
      %v1511 = vunpack.c.l.b16 %v1459
      %v1512 = vunpack.c.l.b16 %v1460
      %v1513 = vunpack.c.h.b16 %v1459
      %v1514 = vunpack.c.h.b16 %v1460
      %v1515 = vpack.c.b16 %v1480, %v1479
      %v1516 = vpack.c.b16 %v1482, %v1481
      %v1517 = vpack.c.b16 %v1484, %v1483
      %v1518 = vpack.c.b16 %v1486, %v1485
      %v1519 = vpack.c.b16 %v1488, %v1487
      %v1520 = vpack.c.b16 %v1490, %v1489
      %v1521 = vpack.c.b16 %v1492, %v1491
      %v1522 = vpack.c.b16 %v1494, %v1493
      %v1523 = vpack.c.b16 %v1496, %v1495
      %v1524 = vpack.c.b16 %v1498, %v1497
      %v1525 = vpack.c.b16 %v1500, %v1499
      %v1526 = vpack.c.b16 %v1502, %v1501
      %v1527 = vpack.c.b16 %v1504, %v1503
      %v1528 = vpack.c.b16 %v1506, %v1505
      %v1529 = vpack.c.b16 %v1508, %v1507
      %v1530 = vpack.c.b16 %v1510, %v1509
      %v1531 = vpack.c.b16 %v1512, %v1511
      %v1532 = vpack.c.b16 %v1514, %v1513
      %1551 = vst [vmem:[#allocation2] sm:$0xff] %v1515
      %1552 = vst [vmem:[#allocation2 + $0x8] sm:$0xff] %v1516
      %1553 = vst [vmem:[#allocation2 + $0x10] sm:$0xff] %v1517
      %1554 = vst [vmem:[#allocation2 + $0x18] sm:$0xff] %v1518
      %1555 = vst [vmem:[#allocation2 + $0x20] sm:$0xff] %v1519
      %1556 = vst [vmem:[#allocation2 + $0x28] sm:$0xff] %v1520
      %1557 = vst [vmem:[#allocation2 + $0x30] sm:$0xff] %v1521
      %1558 = vst [vmem:[#allocation2 + $0x38] sm:$0xff] %v1522
      %1559 = vst [vmem:[#allocation2 + $0x40] sm:$0xff] %v1523
      %1560 = vst [vmem:[#allocation2 + $0x48] sm:$0xff] %v1524
      %1561 = vst [vmem:[#allocation2 + $0x50] sm:$0xff] %v1525
      %1562 = vst [vmem:[#allocation2 + $0x58] sm:$0xff] %v1526
      %1563 = vst [vmem:[#allocation2 + $0x60] sm:$0xff] %v1527
      %1564 = vst [vmem:[#allocation2 + $0x68] sm:$0xff] %v1528
      %1565 = vst [vmem:[#allocation2 + $0x70] sm:$0xff] %v1529
      %1566 = vst [vmem:[#allocation2 + $0x78] sm:$0xff] %v1530
      %1567 = vst [vmem:[#allocation2 + $0x80] sm:$0xff] %v1531
      %1568 = vst [vmem:[#allocation2 + $0x88] sm:$0xff] %v1532
      %v1569 = vld [vmem:[#allocation2] sm:$0xff]
      %v1570 = vld [vmem:[#allocation2 + $0x8] sm:$0xff]
      %v1571 = vld [vmem:[#allocation2 + $0x10] sm:$0xff]
      %v1572 = vld [vmem:[#allocation2 + $0x18] sm:$0xff]
      %v1573 = vld [vmem:[#allocation2 + $0x20] sm:$0xff]
      %v1574 = vld [vmem:[#allocation2 + $0x28] sm:$0xff]
      %v1575 = vld [vmem:[#allocation2 + $0x30] sm:$0xff]
      %v1576 = vld [vmem:[#allocation2 + $0x38] sm:$0xff]
      %v1577 = vld [vmem:[#allocation2 + $0x40] sm:$0xff]
      %v1578 = vld [vmem:[#allocation2 + $0x48] sm:$0xff]
      %v1579 = vld [vmem:[#allocation2 + $0x50] sm:$0xff]
      %v1580 = vld [vmem:[#allocation2 + $0x58] sm:$0xff]
      %v1581 = vld [vmem:[#allocation2 + $0x60] sm:$0xff]
      %v1582 = vld [vmem:[#allocation2 + $0x68] sm:$0xff]
      %v1583 = vld [vmem:[#allocation2 + $0x70] sm:$0xff]
      %v1584 = vld [vmem:[#allocation2 + $0x78] sm:$0xff]
      %v1585 = vld [vmem:[#allocation2 + $0x80] sm:$0xff]
      %v1586 = vld [vmem:[#allocation2 + $0x88] sm:$0xff]
      %v1587 = vld [vmem:[%s352] sm:$0xff]
      %v1588 = vld [vmem:[%s352 + $0x8] sm:$0xff]
      %v1589 = vld [vmem:[%s352 + $0x10] sm:$0xff]
      %v1590 = vld [vmem:[%s352 + $0x18] sm:$0xff]
      %v1591 = vld [vmem:[%s352 + $0x20] sm:$0xff]
      %v1592 = vld [vmem:[%s352 + $0x28] sm:$0xff]
      %v1593 = vld [vmem:[%s352 + $0x30] sm:$0xff]
      %v1594 = vld [vmem:[%s352 + $0x38] sm:$0xff]
      %v1595 = vld [vmem:[%s352 + $0x40] sm:$0xff]
      %v1596 = vld [vmem:[%s352 + $0x48] sm:$0xff]
      %v1597 = vld [vmem:[%s352 + $0x50] sm:$0xff]
      %v1598 = vld [vmem:[%s352 + $0x58] sm:$0xff]
      %v1599 = vld [vmem:[%s352 + $0x60] sm:$0xff]
      %v1600 = vld [vmem:[%s352 + $0x68] sm:$0xff]
      %v1601 = vld [vmem:[%s352 + $0x70] sm:$0xff]
      %v1602 = vld [vmem:[%s352 + $0x78] sm:$0xff]
      %v1603 = vld [vmem:[%s352 + $0x80] sm:$0xff]
      %v1604 = vld [vmem:[%s352 + $0x88] sm:$0xff]
      %v1605 = vld [vmem:[%s352 + $0x90] sm:$0xff]
      %v1606 = vld [vmem:[%s352 + $0x98] sm:$0xff]
      %v1607 = vld [vmem:[%s352 + $0xa0] sm:$0xff]
      %v1608 = vld [vmem:[%s352 + $0xa8] sm:$0xff]
      %v1609 = vld [vmem:[%s352 + $0xb0] sm:$0xff]
      %v1610 = vld [vmem:[%s352 + $0xb8] sm:$0xff]
      %v1611 = vld [vmem:[%s352 + $0xc0] sm:$0xff]
      %v1612 = vld [vmem:[%s352 + $0xc8] sm:$0xff]
      %v1613 = vld [vmem:[%s352 + $0xd0] sm:$0xff]
      %v1614 = vld [vmem:[%s352 + $0xd8] sm:$0xff]
      %v1615 = vld [vmem:[%s352 + $0xe0] sm:$0xff]
      %v1616 = vld [vmem:[%s352 + $0xe8] sm:$0xff]
      %v1617 = vld [vmem:[%s352 + $0xf0] sm:$0xff]
      %v1618 = vld [vmem:[%s352 + $0xf8] sm:$0xff]
      %v1637 = vunpack.c.l.b16 %v1569
      %v1638 = vunpack.c.h.b16 %v1569
      %v1639 = vunpack.c.l.b16 %v1570
      %v1640 = vunpack.c.h.b16 %v1570
      %v1641 = vunpack.c.l.b16 %v1571
      %v1642 = vunpack.c.h.b16 %v1571
      %v1643 = vunpack.c.l.b16 %v1572
      %v1644 = vunpack.c.h.b16 %v1572
      %v1645 = vunpack.c.l.b16 %v1573
      %v1646 = vunpack.c.h.b16 %v1573
      %v1647 = vunpack.c.l.b16 %v1574
      %v1648 = vunpack.c.h.b16 %v1574
      %v1649 = vunpack.c.l.b16 %v1575
      %v1650 = vunpack.c.h.b16 %v1575
      %v1651 = vunpack.c.l.b16 %v1576
      %v1652 = vunpack.c.h.b16 %v1576
      %v1653 = vunpack.c.l.b16 %v1577
      %v1654 = vunpack.c.h.b16 %v1577
      %v1655 = vunpack.c.l.b16 %v1578
      %v1656 = vunpack.c.h.b16 %v1578
      %v1657 = vunpack.c.l.b16 %v1579
      %v1658 = vunpack.c.h.b16 %v1579
      %v1659 = vunpack.c.l.b16 %v1580
      %v1660 = vunpack.c.h.b16 %v1580
      %v1661 = vunpack.c.l.b16 %v1581
      %v1662 = vunpack.c.h.b16 %v1581
      %v1663 = vunpack.c.l.b16 %v1582
      %v1664 = vunpack.c.h.b16 %v1582
      %v1665 = vunpack.c.l.b16 %v1583
      %v1666 = vunpack.c.h.b16 %v1583
      %v1667 = vunpack.c.l.b16 %v1584
      %v1668 = vunpack.c.h.b16 %v1584
      %v1669 = vunpack.c.l.b16 %v1585
      %v1670 = vunpack.c.h.b16 %v1585
      %v1671 = vunpack.c.l.b16 %v1586
      %v1672 = vunpack.c.h.b16 %v1586
      %v1673 = vpack.c.b16 %v1639, %v1637
      %v1674 = vpack.c.b16 %v1640, %v1638
      %v1675 = vpack.c.b16 %v1643, %v1641
      %v1676 = vpack.c.b16 %v1644, %v1642
      %v1677 = vpack.c.b16 %v1647, %v1645
      %v1678 = vpack.c.b16 %v1648, %v1646
      %v1679 = vpack.c.b16 %v1651, %v1649
      %v1680 = vpack.c.b16 %v1652, %v1650
      %v1681 = vpack.c.b16 %v1655, %v1653
      %v1682 = vpack.c.b16 %v1656, %v1654
      %v1683 = vpack.c.b16 %v1659, %v1657
      %v1684 = vpack.c.b16 %v1660, %v1658
      %v1685 = vpack.c.b16 %v1663, %v1661
      %v1686 = vpack.c.b16 %v1664, %v1662
      %v1687 = vpack.c.b16 %v1667, %v1665
      %v1688 = vpack.c.b16 %v1668, %v1666
      %v1689 = vpack.c.b16 %v1671, %v1669
      %v1690 = vpack.c.b16 %v1672, %v1670
      %v1741 = vunpack.c.l.b16 %v1587
      %v1742 = vunpack.c.h.b16 %v1587
      %v1743 = vunpack.c.l.b16 %v1588
      %v1744 = vunpack.c.h.b16 %v1588
      %v1745 = vunpack.c.l.b16 %v1589
      %v1746 = vunpack.c.h.b16 %v1589
      %v1747 = vunpack.c.l.b16 %v1590
      %v1748 = vunpack.c.h.b16 %v1590
      %v1749 = vunpack.c.l.b16 %v1591
      %v1750 = vunpack.c.h.b16 %v1591
      %v1751 = vunpack.c.l.b16 %v1592
      %v1752 = vunpack.c.h.b16 %v1592
      %v1753 = vunpack.c.l.b16 %v1593
      %v1754 = vunpack.c.h.b16 %v1593
      %v1755 = vunpack.c.l.b16 %v1594
      %v1756 = vunpack.c.h.b16 %v1594
      %v1757 = vunpack.c.l.b16 %v1595
      %v1758 = vunpack.c.h.b16 %v1595
      %v1759 = vunpack.c.l.b16 %v1596
      %v1760 = vunpack.c.h.b16 %v1596
      %v1761 = vunpack.c.l.b16 %v1597
      %v1762 = vunpack.c.h.b16 %v1597
      %v1763 = vunpack.c.l.b16 %v1598
      %v1764 = vunpack.c.h.b16 %v1598
      %v1765 = vunpack.c.l.b16 %v1599
      %v1766 = vunpack.c.h.b16 %v1599
      %v1767 = vunpack.c.l.b16 %v1600
      %v1768 = vunpack.c.h.b16 %v1600
      %v1769 = vunpack.c.l.b16 %v1601
      %v1770 = vunpack.c.h.b16 %v1601
      %v1771 = vunpack.c.l.b16 %v1602
      %v1772 = vunpack.c.h.b16 %v1602
      %v1773 = vunpack.c.l.b16 %v1603
      %v1774 = vunpack.c.h.b16 %v1603
      %v1775 = vunpack.c.l.b16 %v1604
      %v1776 = vunpack.c.h.b16 %v1604
      %v1777 = vunpack.c.l.b16 %v1605
      %v1778 = vunpack.c.h.b16 %v1605
      %v1779 = vunpack.c.l.b16 %v1606
      %v1780 = vunpack.c.h.b16 %v1606
      %v1781 = vunpack.c.l.b16 %v1607
      %v1782 = vunpack.c.h.b16 %v1607
      %v1783 = vunpack.c.l.b16 %v1608
      %v1784 = vunpack.c.h.b16 %v1608
      %v1785 = vunpack.c.l.b16 %v1609
      %v1786 = vunpack.c.h.b16 %v1609
      %v1787 = vunpack.c.l.b16 %v1610
      %v1788 = vunpack.c.h.b16 %v1610
      %v1789 = vunpack.c.l.b16 %v1611
      %v1790 = vunpack.c.h.b16 %v1611
      %v1791 = vunpack.c.l.b16 %v1612
      %v1792 = vunpack.c.h.b16 %v1612
      %v1793 = vunpack.c.l.b16 %v1613
      %v1794 = vunpack.c.h.b16 %v1613
      %v1795 = vunpack.c.l.b16 %v1614
      %v1796 = vunpack.c.h.b16 %v1614
      %v1797 = vunpack.c.l.b16 %v1615
      %v1798 = vunpack.c.h.b16 %v1615
      %v1799 = vunpack.c.l.b16 %v1616
      %v1800 = vunpack.c.h.b16 %v1616
      %v1801 = vunpack.c.l.b16 %v1617
      %v1802 = vunpack.c.h.b16 %v1617
      %v1803 = vunpack.c.l.b16 %v1618
      %v1804 = vunpack.c.h.b16 %v1618
      %v1805 = vpack.c.b16 %v1743, %v1741
      %v1806 = vpack.c.b16 %v1744, %v1742
      %v1807 = vpack.c.b16 %v1747, %v1745
      %v1808 = vpack.c.b16 %v1748, %v1746
      %v1809 = vpack.c.b16 %v1751, %v1749
      %v1810 = vpack.c.b16 %v1752, %v1750
      %v1811 = vpack.c.b16 %v1755, %v1753
      %v1812 = vpack.c.b16 %v1756, %v1754
      %v1813 = vpack.c.b16 %v1759, %v1757
      %v1814 = vpack.c.b16 %v1760, %v1758
      %v1815 = vpack.c.b16 %v1763, %v1761
      %v1816 = vpack.c.b16 %v1764, %v1762
      %v1817 = vpack.c.b16 %v1767, %v1765
      %v1818 = vpack.c.b16 %v1768, %v1766
      %v1819 = vpack.c.b16 %v1771, %v1769
      %v1820 = vpack.c.b16 %v1772, %v1770
      %v1821 = vpack.c.b16 %v1775, %v1773
      %v1822 = vpack.c.b16 %v1776, %v1774
      %v1823 = vpack.c.b16 %v1779, %v1777
      %v1824 = vpack.c.b16 %v1780, %v1778
      %v1825 = vpack.c.b16 %v1783, %v1781
      %v1826 = vpack.c.b16 %v1784, %v1782
      %v1827 = vpack.c.b16 %v1787, %v1785
      %v1828 = vpack.c.b16 %v1788, %v1786
      %v1829 = vpack.c.b16 %v1791, %v1789
      %v1830 = vpack.c.b16 %v1792, %v1790
      %v1831 = vpack.c.b16 %v1795, %v1793
      %v1832 = vpack.c.b16 %v1796, %v1794
      %v1833 = vpack.c.b16 %v1799, %v1797
      %v1834 = vpack.c.b16 %v1800, %v1798
      %v1835 = vpack.c.b16 %v1803, %v1801
      %v1836 = vpack.c.b16 %v1804, %v1802
      %1869 = vmatprep.subr.bf16.mxu0 %v1820
      %1870 = vmatpush1.bf16.msra.mxu0 %v1819
      %1871 = vmatprep.subr.bf16.mxu0 %v1818
      %1872 = vmatpush1.bf16.msra.mxu0 %v1817
      %1873 = vmatprep.subr.bf16.mxu0 %v1816
      %1874 = vmatpush1.bf16.msra.mxu0 %v1815
      %1875 = vmatprep.subr.bf16.mxu0 %v1814
      %1876 = vmatpush1.bf16.msra.mxu0 %v1813
      %1877 = vmatprep.subr.bf16.mxu0 %v1812
      %1878 = vmatpush1.bf16.msra.mxu0 %v1811
      %1879 = vmatprep.subr.bf16.mxu0 %v1810
      %1880 = vmatpush1.bf16.msra.mxu0 %v1809
      %1881 = vmatprep.subr.bf16.mxu0 %v1808
      %1882 = vmatpush1.bf16.msra.mxu0 %v1807
      %1883 = vmatprep.subr.bf16.mxu0 %v1806
      %1884 = vmatpush1.bf16.msra.mxu0 %v1805
      %1885 = vmatprep.subr.bf16.mxu0 %v1836
      %1886 = vmatpush2.bf16.msra.mxu0 %v1835
      %1887 = vmatprep.subr.bf16.mxu0 %v1834
      %1888 = vmatpush2.bf16.msra.mxu0 %v1833
      %1889 = vmatprep.subr.bf16.mxu0 %v1832
      %1890 = vmatpush2.bf16.msra.mxu0 %v1831
      %1891 = vmatprep.subr.bf16.mxu0 %v1830
      %1892 = vmatpush2.bf16.msra.mxu0 %v1829
      %1893 = vmatprep.subr.bf16.mxu0 %v1828
      %1894 = vmatpush2.bf16.msra.mxu0 %v1827
      %1895 = vmatprep.subr.bf16.mxu0 %v1826
      %1896 = vmatpush2.bf16.msra.mxu0 %v1825
      %1897 = vmatprep.subr.bf16.mxu0 %v1824
      %1898 = vmatpush2.bf16.msra.mxu0 %v1823
      %1899 = vmatprep.subr.bf16.mxu0 %v1822
      %1900 = vmatpush2.bf16.msra.mxu0 %v1821
      %1901 = vmatprep.mubr.bf16.mxu0 %v1674
      %1902 = vmatmul.mubr.bf16.gmra.mxu0 %v1673
      %v1903 = vpop.f32.mrf.mxu0
      %v1904 = vadd.f32 0.0, %v1903
      %v1905 = vpop.f32.mrf.mxu0
      %v1906 = vadd.f32 0.0, %v1905
      %v1907 = vpop.f32.mrf.mxu0
      %v1908 = vadd.f32 0.0, %v1907
      %v1909 = vpop.f32.mrf.mxu0
      %v1910 = vadd.f32 0.0, %v1909
      %1911 = vmatprep.mubr.bf16.mxu0 %v1676
      %1912 = vmatmul.mubr.bf16.gmra.mxu0 %v1675
      %v1913 = vpop.f32.mrf.mxu0
      %v1914 = vadd.f32 0.0, %v1913
      %v1915 = vpop.f32.mrf.mxu0
      %v1916 = vadd.f32 0.0, %v1915
      %v1917 = vpop.f32.mrf.mxu0
      %v1918 = vadd.f32 0.0, %v1917
      %v1919 = vpop.f32.mrf.mxu0
      %v1920 = vadd.f32 0.0, %v1919
      %1921 = vmatprep.mubr.bf16.mxu0 %v1678
      %1922 = vmatmul.mubr.bf16.gmra.mxu0 %v1677
      %v1923 = vpop.f32.mrf.mxu0
      %v1924 = vadd.f32 0.0, %v1923
      %v1925 = vpop.f32.mrf.mxu0
      %v1926 = vadd.f32 0.0, %v1925
      %v1927 = vpop.f32.mrf.mxu0
      %v1928 = vadd.f32 0.0, %v1927
      %v1929 = vpop.f32.mrf.mxu0
      %v1930 = vadd.f32 0.0, %v1929
      %1931 = vmatprep.mubr.bf16.mxu0 %v1680
      %1932 = vmatmul.mubr.bf16.gmra.mxu0 %v1679
      %v1933 = vpop.f32.mrf.mxu0
      %v1934 = vadd.f32 0.0, %v1933
      %v1935 = vpop.f32.mrf.mxu0
      %v1936 = vadd.f32 0.0, %v1935
      %v1937 = vpop.f32.mrf.mxu0
      %v1938 = vadd.f32 0.0, %v1937
      %v1939 = vpop.f32.mrf.mxu0
      %v1940 = vadd.f32 0.0, %v1939
      %1941 = vmatprep.mubr.bf16.mxu0 %v1682
      %1942 = vmatmul.mubr.bf16.gmra.mxu0 %v1681
      %v1943 = vpop.f32.mrf.mxu0
      %v1944 = vadd.f32 0.0, %v1943
      %v1945 = vpop.f32.mrf.mxu0
      %v1946 = vadd.f32 0.0, %v1945
      %v1947 = vpop.f32.mrf.mxu0
      %v1948 = vadd.f32 0.0, %v1947
      %v1949 = vpop.f32.mrf.mxu0
      %v1950 = vadd.f32 0.0, %v1949
      %1951 = vmatprep.mubr.bf16.mxu0 %v1684
      %1952 = vmatmul.mubr.bf16.gmra.mxu0 %v1683
      %v1953 = vpop.f32.mrf.mxu0
      %v1954 = vadd.f32 0.0, %v1953
      %v1955 = vpop.f32.mrf.mxu0
      %v1956 = vadd.f32 0.0, %v1955
      %v1957 = vpop.f32.mrf.mxu0
      %v1958 = vadd.f32 0.0, %v1957
      %v1959 = vpop.f32.mrf.mxu0
      %v1960 = vadd.f32 0.0, %v1959
      %1961 = vmatprep.mubr.bf16.mxu0 %v1686
      %1962 = vmatmul.mubr.bf16.gmra.mxu0 %v1685
      %v1963 = vpop.f32.mrf.mxu0
      %v1964 = vadd.f32 0.0, %v1963
      %v1965 = vpop.f32.mrf.mxu0
      %v1966 = vadd.f32 0.0, %v1965
      %v1967 = vpop.f32.mrf.mxu0
      %v1968 = vadd.f32 0.0, %v1967
      %v1969 = vpop.f32.mrf.mxu0
      %v1970 = vadd.f32 0.0, %v1969
      %1971 = vmatprep.mubr.bf16.mxu0 %v1688
      %1972 = vmatmul.mubr.bf16.gmra.mxu0 %v1687
      %v1973 = vpop.f32.mrf.mxu0
      %v1974 = vadd.f32 0.0, %v1973
      %v1975 = vpop.f32.mrf.mxu0
      %v1976 = vadd.f32 0.0, %v1975
      %v1977 = vpop.f32.mrf.mxu0
      %v1978 = vadd.f32 0.0, %v1977
      %v1979 = vpop.f32.mrf.mxu0
      %v1980 = vadd.f32 0.0, %v1979
      %1981 = vmatprep.mubr.bf16.mxu0 %v1690
      %1982 = vmatmul.mubr.bf16.gmra.mxu0 %v1689
      %v1983 = vpop.f32.mrf.mxu0
      %v1984 = vadd.f32 0.0, %v1983
      %v1985 = vpop.f32.mrf.mxu0
      %v1986 = vadd.f32 0.0, %v1985
      %v1987 = vpop.f32.mrf.mxu0
      %v1988 = vadd.f32 0.0, %v1987
      %v1989 = vpop.f32.mrf.mxu0
      %v1990 = vadd.f32 0.0, %v1989
      %1991 = vdwg.mxu0
      %s1992 = scalar_lea.vmem %s352, 256
      %v1993 = vld [vmem:[%s1992] sm:$0xff]
      %v1994 = vld [vmem:[%s1992 + $0x8] sm:$0xff]
      %v1995 = vld [vmem:[%s1992 + $0x10] sm:$0xff]
      %v1996 = vld [vmem:[%s1992 + $0x18] sm:$0xff]
      %v1997 = vld [vmem:[%s1992 + $0x20] sm:$0xff]
      %v1998 = vld [vmem:[%s1992 + $0x28] sm:$0xff]
      %v1999 = vld [vmem:[%s1992 + $0x30] sm:$0xff]
      %v2000 = vld [vmem:[%s1992 + $0x38] sm:$0xff]
      %v2001 = vld [vmem:[%s1992 + $0x40] sm:$0xff]
      %v2002 = vld [vmem:[%s1992 + $0x48] sm:$0xff]
      %v2003 = vld [vmem:[%s1992 + $0x50] sm:$0xff]
      %v2004 = vld [vmem:[%s1992 + $0x58] sm:$0xff]
      %v2005 = vld [vmem:[%s1992 + $0x60] sm:$0xff]
      %v2006 = vld [vmem:[%s1992 + $0x68] sm:$0xff]
      %v2007 = vld [vmem:[%s1992 + $0x70] sm:$0xff]
      %v2008 = vld [vmem:[%s1992 + $0x78] sm:$0xff]
      %v2009 = vld [vmem:[%s1992 + $0x80] sm:$0xff]
      %v2010 = vld [vmem:[%s1992 + $0x88] sm:$0xff]
      %v2011 = vld [vmem:[%s1992 + $0x90] sm:$0xff]
      %v2012 = vld [vmem:[%s1992 + $0x98] sm:$0xff]
      %v2013 = vld [vmem:[%s1992 + $0xa0] sm:$0xff]
      %v2014 = vld [vmem:[%s1992 + $0xa8] sm:$0xff]
      %v2015 = vld [vmem:[%s1992 + $0xb0] sm:$0xff]
      %v2016 = vld [vmem:[%s1992 + $0xb8] sm:$0xff]
      %v2017 = vld [vmem:[%s1992 + $0xc0] sm:$0xff]
      %v2018 = vld [vmem:[%s1992 + $0xc8] sm:$0xff]
      %v2019 = vld [vmem:[%s1992 + $0xd0] sm:$0xff]
      %v2020 = vld [vmem:[%s1992 + $0xd8] sm:$0xff]
      %v2021 = vld [vmem:[%s1992 + $0xe0] sm:$0xff]
      %v2022 = vld [vmem:[%s1992 + $0xe8] sm:$0xff]
      %v2023 = vld [vmem:[%s1992 + $0xf0] sm:$0xff]
      %v2024 = vld [vmem:[%s1992 + $0xf8] sm:$0xff]
      %v2057 = vunpack.c.l.b16 %v1993
      %v2058 = vunpack.c.h.b16 %v1993
      %v2059 = vunpack.c.l.b16 %v1994
      %v2060 = vunpack.c.h.b16 %v1994
      %v2061 = vunpack.c.l.b16 %v1995
      %v2062 = vunpack.c.h.b16 %v1995
      %v2063 = vunpack.c.l.b16 %v1996
      %v2064 = vunpack.c.h.b16 %v1996
      %v2065 = vunpack.c.l.b16 %v1997
      %v2066 = vunpack.c.h.b16 %v1997
      %v2067 = vunpack.c.l.b16 %v1998
      %v2068 = vunpack.c.h.b16 %v1998
      %v2069 = vunpack.c.l.b16 %v1999
      %v2070 = vunpack.c.h.b16 %v1999
      %v2071 = vunpack.c.l.b16 %v2000
      %v2072 = vunpack.c.h.b16 %v2000
      %v2073 = vunpack.c.l.b16 %v2001
      %v2074 = vunpack.c.h.b16 %v2001
      %v2075 = vunpack.c.l.b16 %v2002
      %v2076 = vunpack.c.h.b16 %v2002
      %v2077 = vunpack.c.l.b16 %v2003
      %v2078 = vunpack.c.h.b16 %v2003
      %v2079 = vunpack.c.l.b16 %v2004
      %v2080 = vunpack.c.h.b16 %v2004
      %v2081 = vunpack.c.l.b16 %v2005
      %v2082 = vunpack.c.h.b16 %v2005
      %v2083 = vunpack.c.l.b16 %v2006
      %v2084 = vunpack.c.h.b16 %v2006
      %v2085 = vunpack.c.l.b16 %v2007
      %v2086 = vunpack.c.h.b16 %v2007
      %v2087 = vunpack.c.l.b16 %v2008
      %v2088 = vunpack.c.h.b16 %v2008
      %v2089 = vunpack.c.l.b16 %v2009
      %v2090 = vunpack.c.h.b16 %v2009
      %v2091 = vunpack.c.l.b16 %v2010
      %v2092 = vunpack.c.h.b16 %v2010
      %v2093 = vunpack.c.l.b16 %v2011
      %v2094 = vunpack.c.h.b16 %v2011
      %v2095 = vunpack.c.l.b16 %v2012
      %v2096 = vunpack.c.h.b16 %v2012
      %v2097 = vunpack.c.l.b16 %v2013
      %v2098 = vunpack.c.h.b16 %v2013
      %v2099 = vunpack.c.l.b16 %v2014
      %v2100 = vunpack.c.h.b16 %v2014
      %v2101 = vunpack.c.l.b16 %v2015
      %v2102 = vunpack.c.h.b16 %v2015
      %v2103 = vunpack.c.l.b16 %v2016
      %v2104 = vunpack.c.h.b16 %v2016
      %v2105 = vunpack.c.l.b16 %v2017
      %v2106 = vunpack.c.h.b16 %v2017
      %v2107 = vunpack.c.l.b16 %v2018
      %v2108 = vunpack.c.h.b16 %v2018
      %v2109 = vunpack.c.l.b16 %v2019
      %v2110 = vunpack.c.h.b16 %v2019
      %v2111 = vunpack.c.l.b16 %v2020
      %v2112 = vunpack.c.h.b16 %v2020
      %v2113 = vunpack.c.l.b16 %v2021
      %v2114 = vunpack.c.h.b16 %v2021
      %v2115 = vunpack.c.l.b16 %v2022
      %v2116 = vunpack.c.h.b16 %v2022
      %v2117 = vunpack.c.l.b16 %v2023
      %v2118 = vunpack.c.h.b16 %v2023
      %v2119 = vunpack.c.l.b16 %v2024
      %v2120 = vunpack.c.h.b16 %v2024
      %v2121 = vpack.c.b16 %v2059, %v2057
      %v2122 = vpack.c.b16 %v2060, %v2058
      %v2123 = vpack.c.b16 %v2063, %v2061
      %v2124 = vpack.c.b16 %v2064, %v2062
      %v2125 = vpack.c.b16 %v2067, %v2065
      %v2126 = vpack.c.b16 %v2068, %v2066
      %v2127 = vpack.c.b16 %v2071, %v2069
      %v2128 = vpack.c.b16 %v2072, %v2070
      %v2129 = vpack.c.b16 %v2075, %v2073
      %v2130 = vpack.c.b16 %v2076, %v2074
      %v2131 = vpack.c.b16 %v2079, %v2077
      %v2132 = vpack.c.b16 %v2080, %v2078
      %v2133 = vpack.c.b16 %v2083, %v2081
      %v2134 = vpack.c.b16 %v2084, %v2082
      %v2135 = vpack.c.b16 %v2087, %v2085
      %v2136 = vpack.c.b16 %v2088, %v2086
      %v2137 = vpack.c.b16 %v2091, %v2089
      %v2138 = vpack.c.b16 %v2092, %v2090
      %v2139 = vpack.c.b16 %v2095, %v2093
      %v2140 = vpack.c.b16 %v2096, %v2094
      %v2141 = vpack.c.b16 %v2099, %v2097
      %v2142 = vpack.c.b16 %v2100, %v2098
      %v2143 = vpack.c.b16 %v2103, %v2101
      %v2144 = vpack.c.b16 %v2104, %v2102
      %v2145 = vpack.c.b16 %v2107, %v2105
      %v2146 = vpack.c.b16 %v2108, %v2106
      %v2147 = vpack.c.b16 %v2111, %v2109
      %v2148 = vpack.c.b16 %v2112, %v2110
      %v2149 = vpack.c.b16 %v2115, %v2113
      %v2150 = vpack.c.b16 %v2116, %v2114
      %v2151 = vpack.c.b16 %v2119, %v2117
      %v2152 = vpack.c.b16 %v2120, %v2118
      %2185 = vmatprep.subr.bf16.mxu0 %v2136
      %2186 = vmatpush1.bf16.msra.mxu0 %v2135
      %2187 = vmatprep.subr.bf16.mxu0 %v2134
      %2188 = vmatpush1.bf16.msra.mxu0 %v2133
      %2189 = vmatprep.subr.bf16.mxu0 %v2132
      %2190 = vmatpush1.bf16.msra.mxu0 %v2131
      %2191 = vmatprep.subr.bf16.mxu0 %v2130
      %2192 = vmatpush1.bf16.msra.mxu0 %v2129
      %2193 = vmatprep.subr.bf16.mxu0 %v2128
      %2194 = vmatpush1.bf16.msra.mxu0 %v2127
      %2195 = vmatprep.subr.bf16.mxu0 %v2126
      %2196 = vmatpush1.bf16.msra.mxu0 %v2125
      %2197 = vmatprep.subr.bf16.mxu0 %v2124
      %2198 = vmatpush1.bf16.msra.mxu0 %v2123
      %2199 = vmatprep.subr.bf16.mxu0 %v2122
      %2200 = vmatpush1.bf16.msra.mxu0 %v2121
      %2201 = vmatprep.subr.bf16.mxu0 %v2152
      %2202 = vmatpush2.bf16.msra.mxu0 %v2151
      %2203 = vmatprep.subr.bf16.mxu0 %v2150
      %2204 = vmatpush2.bf16.msra.mxu0 %v2149
      %2205 = vmatprep.subr.bf16.mxu0 %v2148
      %2206 = vmatpush2.bf16.msra.mxu0 %v2147
      %2207 = vmatprep.subr.bf16.mxu0 %v2146
      %2208 = vmatpush2.bf16.msra.mxu0 %v2145
      %2209 = vmatprep.subr.bf16.mxu0 %v2144
      %2210 = vmatpush2.bf16.msra.mxu0 %v2143
      %2211 = vmatprep.subr.bf16.mxu0 %v2142
      %2212 = vmatpush2.bf16.msra.mxu0 %v2141
      %2213 = vmatprep.subr.bf16.mxu0 %v2140
      %2214 = vmatpush2.bf16.msra.mxu0 %v2139
      %2215 = vmatprep.subr.bf16.mxu0 %v2138
      %2216 = vmatpush2.bf16.msra.mxu0 %v2137
      %2217 = vmatprep.mubr.bf16.mxu0 %v1674
      %2218 = vmatmul.mubr.bf16.gmra.mxu0 %v1673
      %v2219 = vpop.f32.mrf.mxu0
      %v2220 = vadd.f32 0.0, %v2219
      %v2221 = vpop.f32.mrf.mxu0
      %v2222 = vadd.f32 0.0, %v2221
      %v2223 = vpop.f32.mrf.mxu0
      %v2224 = vadd.f32 0.0, %v2223
      %v2225 = vpop.f32.mrf.mxu0
      %v2226 = vadd.f32 0.0, %v2225
      %2227 = vmatprep.mubr.bf16.mxu0 %v1676
      %2228 = vmatmul.mubr.bf16.gmra.mxu0 %v1675
      %v2229 = vpop.f32.mrf.mxu0
      %v2230 = vadd.f32 0.0, %v2229
      %v2231 = vpop.f32.mrf.mxu0
      %v2232 = vadd.f32 0.0, %v2231
      %v2233 = vpop.f32.mrf.mxu0
      %v2234 = vadd.f32 0.0, %v2233
      %v2235 = vpop.f32.mrf.mxu0
      %v2236 = vadd.f32 0.0, %v2235
      %2237 = vmatprep.mubr.bf16.mxu0 %v1678
      %2238 = vmatmul.mubr.bf16.gmra.mxu0 %v1677
      %v2239 = vpop.f32.mrf.mxu0
      %v2240 = vadd.f32 0.0, %v2239
      %v2241 = vpop.f32.mrf.mxu0
      %v2242 = vadd.f32 0.0, %v2241
      %v2243 = vpop.f32.mrf.mxu0
      %v2244 = vadd.f32 0.0, %v2243
      %v2245 = vpop.f32.mrf.mxu0
      %v2246 = vadd.f32 0.0, %v2245
      %2247 = vmatprep.mubr.bf16.mxu0 %v1680
      %2248 = vmatmul.mubr.bf16.gmra.mxu0 %v1679
      %v2249 = vpop.f32.mrf.mxu0
      %v2250 = vadd.f32 0.0, %v2249
      %v2251 = vpop.f32.mrf.mxu0
      %v2252 = vadd.f32 0.0, %v2251
      %v2253 = vpop.f32.mrf.mxu0
      %v2254 = vadd.f32 0.0, %v2253
      %v2255 = vpop.f32.mrf.mxu0
      %v2256 = vadd.f32 0.0, %v2255
      %2257 = vmatprep.mubr.bf16.mxu0 %v1682
      %2258 = vmatmul.mubr.bf16.gmra.mxu0 %v1681
      %v2259 = vpop.f32.mrf.mxu0
      %v2260 = vadd.f32 0.0, %v2259
      %v2261 = vpop.f32.mrf.mxu0
      %v2262 = vadd.f32 0.0, %v2261
      %v2263 = vpop.f32.mrf.mxu0
      %v2264 = vadd.f32 0.0, %v2263
      %v2265 = vpop.f32.mrf.mxu0
      %v2266 = vadd.f32 0.0, %v2265
      %2267 = vmatprep.mubr.bf16.mxu0 %v1684
      %2268 = vmatmul.mubr.bf16.gmra.mxu0 %v1683
      %v2269 = vpop.f32.mrf.mxu0
      %v2270 = vadd.f32 0.0, %v2269
      %v2271 = vpop.f32.mrf.mxu0
      %v2272 = vadd.f32 0.0, %v2271
      %v2273 = vpop.f32.mrf.mxu0
      %v2274 = vadd.f32 0.0, %v2273
      %v2275 = vpop.f32.mrf.mxu0
      %v2276 = vadd.f32 0.0, %v2275
      %2277 = vmatprep.mubr.bf16.mxu0 %v1686
      %2278 = vmatmul.mubr.bf16.gmra.mxu0 %v1685
      %v2279 = vpop.f32.mrf.mxu0
      %v2280 = vadd.f32 0.0, %v2279
      %v2281 = vpop.f32.mrf.mxu0
      %v2282 = vadd.f32 0.0, %v2281
      %v2283 = vpop.f32.mrf.mxu0
      %v2284 = vadd.f32 0.0, %v2283
      %v2285 = vpop.f32.mrf.mxu0
      %v2286 = vadd.f32 0.0, %v2285
      %2287 = vmatprep.mubr.bf16.mxu0 %v1688
      %2288 = vmatmul.mubr.bf16.gmra.mxu0 %v1687
      %v2289 = vpop.f32.mrf.mxu0
      %v2290 = vadd.f32 0.0, %v2289
      %v2291 = vpop.f32.mrf.mxu0
      %v2292 = vadd.f32 0.0, %v2291
      %v2293 = vpop.f32.mrf.mxu0
      %v2294 = vadd.f32 0.0, %v2293
      %v2295 = vpop.f32.mrf.mxu0
      %v2296 = vadd.f32 0.0, %v2295
      %2297 = vmatprep.mubr.bf16.mxu0 %v1690
      %2298 = vmatmul.mubr.bf16.gmra.mxu0 %v1689
      %v2299 = vpop.f32.mrf.mxu0
      %v2300 = vadd.f32 0.0, %v2299
      %v2301 = vpop.f32.mrf.mxu0
      %v2302 = vadd.f32 0.0, %v2301
      %v2303 = vpop.f32.mrf.mxu0
      %v2304 = vadd.f32 0.0, %v2303
      %v2305 = vpop.f32.mrf.mxu0
      %v2306 = vadd.f32 0.0, %v2305
      %2307 = vdwg.mxu0
      %s2308 = scalar_lea.vmem %s352, 512
      %v2309 = vld [vmem:[%s2308] sm:$0xff]
      %v2310 = vld [vmem:[%s2308 + $0x8] sm:$0xff]
      %v2311 = vld [vmem:[%s2308 + $0x10] sm:$0xff]
      %v2312 = vld [vmem:[%s2308 + $0x18] sm:$0xff]
      %v2313 = vld [vmem:[%s2308 + $0x20] sm:$0xff]
      %v2314 = vld [vmem:[%s2308 + $0x28] sm:$0xff]
      %v2315 = vld [vmem:[%s2308 + $0x30] sm:$0xff]
      %v2316 = vld [vmem:[%s2308 + $0x38] sm:$0xff]
      %v2317 = vld [vmem:[%s2308 + $0x40] sm:$0xff]
      %v2318 = vld [vmem:[%s2308 + $0x48] sm:$0xff]
      %v2319 = vld [vmem:[%s2308 + $0x50] sm:$0xff]
      %v2320 = vld [vmem:[%s2308 + $0x58] sm:$0xff]
      %v2321 = vld [vmem:[%s2308 + $0x60] sm:$0xff]
      %v2322 = vld [vmem:[%s2308 + $0x68] sm:$0xff]
      %v2323 = vld [vmem:[%s2308 + $0x70] sm:$0xff]
      %v2324 = vld [vmem:[%s2308 + $0x78] sm:$0xff]
      %v2325 = vld [vmem:[%s2308 + $0x80] sm:$0xff]
      %v2326 = vld [vmem:[%s2308 + $0x88] sm:$0xff]
      %v2327 = vld [vmem:[%s2308 + $0x90] sm:$0xff]
      %v2328 = vld [vmem:[%s2308 + $0x98] sm:$0xff]
      %v2329 = vld [vmem:[%s2308 + $0xa0] sm:$0xff]
      %v2330 = vld [vmem:[%s2308 + $0xa8] sm:$0xff]
      %v2331 = vld [vmem:[%s2308 + $0xb0] sm:$0xff]
      %v2332 = vld [vmem:[%s2308 + $0xb8] sm:$0xff]
      %v2333 = vld [vmem:[%s2308 + $0xc0] sm:$0xff]
      %v2334 = vld [vmem:[%s2308 + $0xc8] sm:$0xff]
      %v2335 = vld [vmem:[%s2308 + $0xd0] sm:$0xff]
      %v2336 = vld [vmem:[%s2308 + $0xd8] sm:$0xff]
      %v2337 = vld [vmem:[%s2308 + $0xe0] sm:$0xff]
      %v2338 = vld [vmem:[%s2308 + $0xe8] sm:$0xff]
      %v2339 = vld [vmem:[%s2308 + $0xf0] sm:$0xff]
      %v2340 = vld [vmem:[%s2308 + $0xf8] sm:$0xff]
      %v2373 = vunpack.c.l.b16 %v2309
      %v2374 = vunpack.c.h.b16 %v2309
      %v2375 = vunpack.c.l.b16 %v2310
      %v2376 = vunpack.c.h.b16 %v2310
      %v2377 = vunpack.c.l.b16 %v2311
      %v2378 = vunpack.c.h.b16 %v2311
      %v2379 = vunpack.c.l.b16 %v2312
      %v2380 = vunpack.c.h.b16 %v2312
      %v2381 = vunpack.c.l.b16 %v2313
      %v2382 = vunpack.c.h.b16 %v2313
      %v2383 = vunpack.c.l.b16 %v2314
      %v2384 = vunpack.c.h.b16 %v2314
      %v2385 = vunpack.c.l.b16 %v2315
      %v2386 = vunpack.c.h.b16 %v2315
      %v2387 = vunpack.c.l.b16 %v2316
      %v2388 = vunpack.c.h.b16 %v2316
      %v2389 = vunpack.c.l.b16 %v2317
      %v2390 = vunpack.c.h.b16 %v2317
      %v2391 = vunpack.c.l.b16 %v2318
      %v2392 = vunpack.c.h.b16 %v2318
      %v2393 = vunpack.c.l.b16 %v2319
      %v2394 = vunpack.c.h.b16 %v2319
      %v2395 = vunpack.c.l.b16 %v2320
      %v2396 = vunpack.c.h.b16 %v2320
      %v2397 = vunpack.c.l.b16 %v2321
      %v2398 = vunpack.c.h.b16 %v2321
      %v2399 = vunpack.c.l.b16 %v2322
      %v2400 = vunpack.c.h.b16 %v2322
      %v2401 = vunpack.c.l.b16 %v2323
      %v2402 = vunpack.c.h.b16 %v2323
      %v2403 = vunpack.c.l.b16 %v2324
      %v2404 = vunpack.c.h.b16 %v2324
      %v2405 = vunpack.c.l.b16 %v2325
      %v2406 = vunpack.c.h.b16 %v2325
      %v2407 = vunpack.c.l.b16 %v2326
      %v2408 = vunpack.c.h.b16 %v2326
      %v2409 = vunpack.c.l.b16 %v2327
      %v2410 = vunpack.c.h.b16 %v2327
      %v2411 = vunpack.c.l.b16 %v2328
      %v2412 = vunpack.c.h.b16 %v2328
      %v2413 = vunpack.c.l.b16 %v2329
      %v2414 = vunpack.c.h.b16 %v2329
      %v2415 = vunpack.c.l.b16 %v2330
      %v2416 = vunpack.c.h.b16 %v2330
      %v2417 = vunpack.c.l.b16 %v2331
      %v2418 = vunpack.c.h.b16 %v2331
      %v2419 = vunpack.c.l.b16 %v2332
      %v2420 = vunpack.c.h.b16 %v2332
      %v2421 = vunpack.c.l.b16 %v2333
      %v2422 = vunpack.c.h.b16 %v2333
      %v2423 = vunpack.c.l.b16 %v2334
      %v2424 = vunpack.c.h.b16 %v2334
      %v2425 = vunpack.c.l.b16 %v2335
      %v2426 = vunpack.c.h.b16 %v2335
      %v2427 = vunpack.c.l.b16 %v2336
      %v2428 = vunpack.c.h.b16 %v2336
      %v2429 = vunpack.c.l.b16 %v2337
      %v2430 = vunpack.c.h.b16 %v2337
      %v2431 = vunpack.c.l.b16 %v2338
      %v2432 = vunpack.c.h.b16 %v2338
      %v2433 = vunpack.c.l.b16 %v2339
      %v2434 = vunpack.c.h.b16 %v2339
      %v2435 = vunpack.c.l.b16 %v2340
      %v2436 = vunpack.c.h.b16 %v2340
      %v2437 = vpack.c.b16 %v2375, %v2373
      %v2438 = vpack.c.b16 %v2376, %v2374
      %v2439 = vpack.c.b16 %v2379, %v2377
      %v2440 = vpack.c.b16 %v2380, %v2378
      %v2441 = vpack.c.b16 %v2383, %v2381
      %v2442 = vpack.c.b16 %v2384, %v2382
      %v2443 = vpack.c.b16 %v2387, %v2385
      %v2444 = vpack.c.b16 %v2388, %v2386
      %v2445 = vpack.c.b16 %v2391, %v2389
      %v2446 = vpack.c.b16 %v2392, %v2390
      %v2447 = vpack.c.b16 %v2395, %v2393
      %v2448 = vpack.c.b16 %v2396, %v2394
      %v2449 = vpack.c.b16 %v2399, %v2397
      %v2450 = vpack.c.b16 %v2400, %v2398
      %v2451 = vpack.c.b16 %v2403, %v2401
      %v2452 = vpack.c.b16 %v2404, %v2402
      %v2453 = vpack.c.b16 %v2407, %v2405
      %v2454 = vpack.c.b16 %v2408, %v2406
      %v2455 = vpack.c.b16 %v2411, %v2409
      %v2456 = vpack.c.b16 %v2412, %v2410
      %v2457 = vpack.c.b16 %v2415, %v2413
      %v2458 = vpack.c.b16 %v2416, %v2414
      %v2459 = vpack.c.b16 %v2419, %v2417
      %v2460 = vpack.c.b16 %v2420, %v2418
      %v2461 = vpack.c.b16 %v2423, %v2421
      %v2462 = vpack.c.b16 %v2424, %v2422
      %v2463 = vpack.c.b16 %v2427, %v2425
      %v2464 = vpack.c.b16 %v2428, %v2426
      %v2465 = vpack.c.b16 %v2431, %v2429
      %v2466 = vpack.c.b16 %v2432, %v2430
      %v2467 = vpack.c.b16 %v2435, %v2433
      %v2468 = vpack.c.b16 %v2436, %v2434
      %2501 = vmatprep.subr.bf16.mxu0 %v2452
      %2502 = vmatpush1.bf16.msra.mxu0 %v2451
      %2503 = vmatprep.subr.bf16.mxu0 %v2450
      %2504 = vmatpush1.bf16.msra.mxu0 %v2449
      %2505 = vmatprep.subr.bf16.mxu0 %v2448
      %2506 = vmatpush1.bf16.msra.mxu0 %v2447
      %2507 = vmatprep.subr.bf16.mxu0 %v2446
      %2508 = vmatpush1.bf16.msra.mxu0 %v2445
      %2509 = vmatprep.subr.bf16.mxu0 %v2444
      %2510 = vmatpush1.bf16.msra.mxu0 %v2443
      %2511 = vmatprep.subr.bf16.mxu0 %v2442
      %2512 = vmatpush1.bf16.msra.mxu0 %v2441
      %2513 = vmatprep.subr.bf16.mxu0 %v2440
      %2514 = vmatpush1.bf16.msra.mxu0 %v2439
      %2515 = vmatprep.subr.bf16.mxu0 %v2438
      %2516 = vmatpush1.bf16.msra.mxu0 %v2437
      %2517 = vmatprep.subr.bf16.mxu0 %v2468
      %2518 = vmatpush2.bf16.msra.mxu0 %v2467
      %2519 = vmatprep.subr.bf16.mxu0 %v2466
      %2520 = vmatpush2.bf16.msra.mxu0 %v2465
      %2521 = vmatprep.subr.bf16.mxu0 %v2464
      %2522 = vmatpush2.bf16.msra.mxu0 %v2463
      %2523 = vmatprep.subr.bf16.mxu0 %v2462
      %2524 = vmatpush2.bf16.msra.mxu0 %v2461
      %2525 = vmatprep.subr.bf16.mxu0 %v2460
      %2526 = vmatpush2.bf16.msra.mxu0 %v2459
      %2527 = vmatprep.subr.bf16.mxu0 %v2458
      %2528 = vmatpush2.bf16.msra.mxu0 %v2457
      %2529 = vmatprep.subr.bf16.mxu0 %v2456
      %2530 = vmatpush2.bf16.msra.mxu0 %v2455
      %2531 = vmatprep.subr.bf16.mxu0 %v2454
      %2532 = vmatpush2.bf16.msra.mxu0 %v2453
      %2533 = vmatprep.mubr.bf16.mxu0 %v1674
      %2534 = vmatmul.mubr.bf16.gmra.mxu0 %v1673
      %v2535 = vpop.f32.mrf.mxu0
      %v2536 = vadd.f32 0.0, %v2535
      %v2537 = vpop.f32.mrf.mxu0
      %v2538 = vadd.f32 0.0, %v2537
      %v2539 = vpop.f32.mrf.mxu0
      %v2540 = vadd.f32 0.0, %v2539
      %v2541 = vpop.f32.mrf.mxu0
      %v2542 = vadd.f32 0.0, %v2541
      %2543 = vmatprep.mubr.bf16.mxu0 %v1676
      %2544 = vmatmul.mubr.bf16.gmra.mxu0 %v1675
      %v2545 = vpop.f32.mrf.mxu0
      %v2546 = vadd.f32 0.0, %v2545
      %v2547 = vpop.f32.mrf.mxu0
      %v2548 = vadd.f32 0.0, %v2547
      %v2549 = vpop.f32.mrf.mxu0
      %v2550 = vadd.f32 0.0, %v2549
      %v2551 = vpop.f32.mrf.mxu0
      %v2552 = vadd.f32 0.0, %v2551
      %2553 = vmatprep.mubr.bf16.mxu0 %v1678
      %2554 = vmatmul.mubr.bf16.gmra.mxu0 %v1677
      %v2555 = vpop.f32.mrf.mxu0
      %v2556 = vadd.f32 0.0, %v2555
      %v2557 = vpop.f32.mrf.mxu0
      %v2558 = vadd.f32 0.0, %v2557
      %v2559 = vpop.f32.mrf.mxu0
      %v2560 = vadd.f32 0.0, %v2559
      %v2561 = vpop.f32.mrf.mxu0
      %v2562 = vadd.f32 0.0, %v2561
      %2563 = vmatprep.mubr.bf16.mxu0 %v1680
      %2564 = vmatmul.mubr.bf16.gmra.mxu0 %v1679
      %v2565 = vpop.f32.mrf.mxu0
      %v2566 = vadd.f32 0.0, %v2565
      %v2567 = vpop.f32.mrf.mxu0
      %v2568 = vadd.f32 0.0, %v2567
      %v2569 = vpop.f32.mrf.mxu0
      %v2570 = vadd.f32 0.0, %v2569
      %v2571 = vpop.f32.mrf.mxu0
      %v2572 = vadd.f32 0.0, %v2571
      %2573 = vmatprep.mubr.bf16.mxu0 %v1682
      %2574 = vmatmul.mubr.bf16.gmra.mxu0 %v1681
      %v2575 = vpop.f32.mrf.mxu0
      %v2576 = vadd.f32 0.0, %v2575
      %v2577 = vpop.f32.mrf.mxu0
      %v2578 = vadd.f32 0.0, %v2577
      %v2579 = vpop.f32.mrf.mxu0
      %v2580 = vadd.f32 0.0, %v2579
      %v2581 = vpop.f32.mrf.mxu0
      %v2582 = vadd.f32 0.0, %v2581
      %2583 = vmatprep.mubr.bf16.mxu0 %v1684
      %2584 = vmatmul.mubr.bf16.gmra.mxu0 %v1683
      %v2585 = vpop.f32.mrf.mxu0
      %v2586 = vadd.f32 0.0, %v2585
      %v2587 = vpop.f32.mrf.mxu0
      %v2588 = vadd.f32 0.0, %v2587
      %v2589 = vpop.f32.mrf.mxu0
      %v2590 = vadd.f32 0.0, %v2589
      %v2591 = vpop.f32.mrf.mxu0
      %v2592 = vadd.f32 0.0, %v2591
      %2593 = vmatprep.mubr.bf16.mxu0 %v1686
      %2594 = vmatmul.mubr.bf16.gmra.mxu0 %v1685
      %v2595 = vpop.f32.mrf.mxu0
      %v2596 = vadd.f32 0.0, %v2595
      %v2597 = vpop.f32.mrf.mxu0
      %v2598 = vadd.f32 0.0, %v2597
      %v2599 = vpop.f32.mrf.mxu0
      %v2600 = vadd.f32 0.0, %v2599
      %v2601 = vpop.f32.mrf.mxu0
      %v2602 = vadd.f32 0.0, %v2601
      %2603 = vmatprep.mubr.bf16.mxu0 %v1688
      %2604 = vmatmul.mubr.bf16.gmra.mxu0 %v1687
      %v2605 = vpop.f32.mrf.mxu0
      %v2606 = vadd.f32 0.0, %v2605
      %v2607 = vpop.f32.mrf.mxu0
      %v2608 = vadd.f32 0.0, %v2607
      %v2609 = vpop.f32.mrf.mxu0
      %v2610 = vadd.f32 0.0, %v2609
      %v2611 = vpop.f32.mrf.mxu0
      %v2612 = vadd.f32 0.0, %v2611
      %2613 = vmatprep.mubr.bf16.mxu0 %v1690
      %2614 = vmatmul.mubr.bf16.gmra.mxu0 %v1689
      %v2615 = vpop.f32.mrf.mxu0
      %v2616 = vadd.f32 0.0, %v2615
      %v2617 = vpop.f32.mrf.mxu0
      %v2618 = vadd.f32 0.0, %v2617
      %v2619 = vpop.f32.mrf.mxu0
      %v2620 = vadd.f32 0.0, %v2619
      %v2621 = vpop.f32.mrf.mxu0
      %v2622 = vadd.f32 0.0, %v2621
      %2623 = vdwg.mxu0
      %v2624 = vrot.slane %v1904, 7
      %v2625 = vrot.slane %v1906, 7
      %v2626 = vrot.slane %v1908, 7
      %v2627 = vrot.slane %v1910, 7
      %v2628 = vrot.slane %v1914, 7
      %v2629 = vrot.slane %v1916, 7
      %v2630 = vrot.slane %v1918, 7
      %v2631 = vrot.slane %v1920, 7
      %v2632 = vrot.slane %v1924, 7
      %v2633 = vrot.slane %v1926, 7
      %v2634 = vrot.slane %v1928, 7
      %v2635 = vrot.slane %v1930, 7
      %v2636 = vrot.slane %v1934, 7
      %v2637 = vrot.slane %v1936, 7
      %v2638 = vrot.slane %v1938, 7
      %v2639 = vrot.slane %v1940, 7
      %v2640 = vrot.slane %v1944, 7
      %v2641 = vrot.slane %v1946, 7
      %v2642 = vrot.slane %v1948, 7
      %v2643 = vrot.slane %v1950, 7
      %v2644 = vrot.slane %v1954, 7
      %v2645 = vrot.slane %v1956, 7
      %v2646 = vrot.slane %v1958, 7
      %v2647 = vrot.slane %v1960, 7
      %v2648 = vrot.slane %v1964, 7
      %v2649 = vrot.slane %v1966, 7
      %v2650 = vrot.slane %v1968, 7
      %v2651 = vrot.slane %v1970, 7
      %v2652 = vrot.slane %v1974, 7
      %v2653 = vrot.slane %v1976, 7
      %v2654 = vrot.slane %v1978, 7
      %v2655 = vrot.slane %v1980, 7
      %v2656 = vrot.slane %v1984, 7
      %v2657 = vrot.slane %v1986, 7
      %v2658 = vrot.slane %v1988, 7
      %v2659 = vrot.slane %v1990, 7
      %v2660 = vsel %vm1015, %v2656, %v2658
      %v2661 = vsel %vm1015, %v2657, %v2659
      %v2662 = vsel %vm1015, %v2654, %v2656
      %v2663 = vsel %vm1015, %v2655, %v2657
      %v2664 = vsel %vm1015, %v2652, %v2654
      %v2665 = vsel %vm1015, %v2653, %v2655
      %v2666 = vsel %vm1015, %v2650, %v2652
      %v2667 = vsel %vm1015, %v2651, %v2653
      %v2668 = vsel %vm1015, %v2648, %v2650
      %v2669 = vsel %vm1015, %v2649, %v2651
      %v2670 = vsel %vm1015, %v2646, %v2648
      %v2671 = vsel %vm1015, %v2647, %v2649
      %v2672 = vsel %vm1015, %v2644, %v2646
      %v2673 = vsel %vm1015, %v2645, %v2647
      %v2674 = vsel %vm1015, %v2642, %v2644
      %v2675 = vsel %vm1015, %v2643, %v2645
      %v2676 = vsel %vm1015, %v2640, %v2642
      %v2677 = vsel %vm1015, %v2641, %v2643
      %v2678 = vsel %vm1015, %v2638, %v2640
      %v2679 = vsel %vm1015, %v2639, %v2641
      %v2680 = vsel %vm1015, %v2636, %v2638
      %v2681 = vsel %vm1015, %v2637, %v2639
      %v2682 = vsel %vm1015, %v2634, %v2636
      %v2683 = vsel %vm1015, %v2635, %v2637
      %v2684 = vsel %vm1015, %v2632, %v2634
      %v2685 = vsel %vm1015, %v2633, %v2635
      %v2686 = vsel %vm1015, %v2630, %v2632
      %v2687 = vsel %vm1015, %v2631, %v2633
      %v2688 = vsel %vm1015, %v2628, %v2630
      %v2689 = vsel %vm1015, %v2629, %v2631
      %v2690 = vsel %vm1015, %v2626, %v2628
      %v2691 = vsel %vm1015, %v2627, %v2629
      %v2692 = vsel %vm1015, %v2624, %v2626
      %v2693 = vsel %vm1015, %v2625, %v2627
      %v2694 = vsel %vm1015, %v2658, %v2624
      %v2695 = vsel %vm1015, %v2659, %v2625
      %v2696 = vadd.f32 %v2694, %v2220
      %v2697 = vadd.f32 %v2695, %v2222
      %v2698 = vadd.f32 %v2692, %v2224
      %v2699 = vadd.f32 %v2693, %v2226
      %v2700 = vadd.f32 %v2690, %v2230
      %v2701 = vadd.f32 %v2691, %v2232
      %v2702 = vadd.f32 %v2688, %v2234
      %v2703 = vadd.f32 %v2689, %v2236
      %v2704 = vadd.f32 %v2686, %v2240
      %v2705 = vadd.f32 %v2687, %v2242
      %v2706 = vadd.f32 %v2684, %v2244
      %v2707 = vadd.f32 %v2685, %v2246
      %v2708 = vadd.f32 %v2682, %v2250
      %v2709 = vadd.f32 %v2683, %v2252
      %v2710 = vadd.f32 %v2680, %v2254
      %v2711 = vadd.f32 %v2681, %v2256
      %v2712 = vadd.f32 %v2678, %v2260
      %v2713 = vadd.f32 %v2679, %v2262
      %v2714 = vadd.f32 %v2676, %v2264
      %v2715 = vadd.f32 %v2677, %v2266
      %v2716 = vadd.f32 %v2674, %v2270
      %v2717 = vadd.f32 %v2675, %v2272
      %v2718 = vadd.f32 %v2672, %v2274
      %v2719 = vadd.f32 %v2673, %v2276
      %v2720 = vadd.f32 %v2670, %v2280
      %v2721 = vadd.f32 %v2671, %v2282
      %v2722 = vadd.f32 %v2668, %v2284
      %v2723 = vadd.f32 %v2669, %v2286
      %v2724 = vadd.f32 %v2666, %v2290
      %v2725 = vadd.f32 %v2667, %v2292
      %v2726 = vadd.f32 %v2664, %v2294
      %v2727 = vadd.f32 %v2665, %v2296
      %v2728 = vadd.f32 %v2662, %v2300
      %v2729 = vadd.f32 %v2663, %v2302
      %v2730 = vadd.f32 %v2660, %v2304
      %v2731 = vadd.f32 %v2661, %v2306
      %v2732 = vrot.slane %v2536, 1
      %v2733 = vrot.slane %v2538, 1
      %v2734 = vrot.slane %v2540, 1
      %v2735 = vrot.slane %v2542, 1
      %v2736 = vrot.slane %v2546, 1
      %v2737 = vrot.slane %v2548, 1
      %v2738 = vrot.slane %v2550, 1
      %v2739 = vrot.slane %v2552, 1
      %v2740 = vrot.slane %v2556, 1
      %v2741 = vrot.slane %v2558, 1
      %v2742 = vrot.slane %v2560, 1
      %v2743 = vrot.slane %v2562, 1
      %v2744 = vrot.slane %v2566, 1
      %v2745 = vrot.slane %v2568, 1
      %v2746 = vrot.slane %v2570, 1
      %v2747 = vrot.slane %v2572, 1
      %v2748 = vrot.slane %v2576, 1
      %v2749 = vrot.slane %v2578, 1
      %v2750 = vrot.slane %v2580, 1
      %v2751 = vrot.slane %v2582, 1
      %v2752 = vrot.slane %v2586, 1
      %v2753 = vrot.slane %v2588, 1
      %v2754 = vrot.slane %v2590, 1
      %v2755 = vrot.slane %v2592, 1
      %v2756 = vrot.slane %v2596, 1
      %v2757 = vrot.slane %v2598, 1
      %v2758 = vrot.slane %v2600, 1
      %v2759 = vrot.slane %v2602, 1
      %v2760 = vrot.slane %v2606, 1
      %v2761 = vrot.slane %v2608, 1
      %v2762 = vrot.slane %v2610, 1
      %v2763 = vrot.slane %v2612, 1
      %v2764 = vrot.slane %v2616, 1
      %v2765 = vrot.slane %v2618, 1
      %v2766 = vrot.slane %v2620, 1
      %v2767 = vrot.slane %v2622, 1
      %v2768 = vsel %vm1124, %v2764, %v2766
      %v2769 = vsel %vm1124, %v2765, %v2767
      %v2770 = vsel %vm1124, %v2762, %v2764
      %v2771 = vsel %vm1124, %v2763, %v2765
      %v2772 = vsel %vm1124, %v2760, %v2762
      %v2773 = vsel %vm1124, %v2761, %v2763
      %v2774 = vsel %vm1124, %v2758, %v2760
      %v2775 = vsel %vm1124, %v2759, %v2761
      %v2776 = vsel %vm1124, %v2756, %v2758
      %v2777 = vsel %vm1124, %v2757, %v2759
      %v2778 = vsel %vm1124, %v2754, %v2756
      %v2779 = vsel %vm1124, %v2755, %v2757
      %v2780 = vsel %vm1124, %v2752, %v2754
      %v2781 = vsel %vm1124, %v2753, %v2755
      %v2782 = vsel %vm1124, %v2750, %v2752
      %v2783 = vsel %vm1124, %v2751, %v2753
      %v2784 = vsel %vm1124, %v2748, %v2750
      %v2785 = vsel %vm1124, %v2749, %v2751
      %v2786 = vsel %vm1124, %v2746, %v2748
      %v2787 = vsel %vm1124, %v2747, %v2749
      %v2788 = vsel %vm1124, %v2744, %v2746
      %v2789 = vsel %vm1124, %v2745, %v2747
      %v2790 = vsel %vm1124, %v2742, %v2744
      %v2791 = vsel %vm1124, %v2743, %v2745
      %v2792 = vsel %vm1124, %v2740, %v2742
      %v2793 = vsel %vm1124, %v2741, %v2743
      %v2794 = vsel %vm1124, %v2738, %v2740
      %v2795 = vsel %vm1124, %v2739, %v2741
      %v2796 = vsel %vm1124, %v2736, %v2738
      %v2797 = vsel %vm1124, %v2737, %v2739
      %v2798 = vsel %vm1124, %v2734, %v2736
      %v2799 = vsel %vm1124, %v2735, %v2737
      %v2800 = vsel %vm1124, %v2732, %v2734
      %v2801 = vsel %vm1124, %v2733, %v2735
      %v2802 = vsel %vm1124, %v2766, %v2732
      %v2803 = vsel %vm1124, %v2767, %v2733
      %v2804 = vadd.f32 %v2696, %v2800
      %v2805 = vadd.f32 %v2697, %v2801
      %v2806 = vadd.f32 %v2698, %v2798
      %v2807 = vadd.f32 %v2699, %v2799
      %v2808 = vadd.f32 %v2700, %v2796
      %v2809 = vadd.f32 %v2701, %v2797
      %v2810 = vadd.f32 %v2702, %v2794
      %v2811 = vadd.f32 %v2703, %v2795
      %v2812 = vadd.f32 %v2704, %v2792
      %v2813 = vadd.f32 %v2705, %v2793
      %v2814 = vadd.f32 %v2706, %v2790
      %v2815 = vadd.f32 %v2707, %v2791
      %v2816 = vadd.f32 %v2708, %v2788
      %v2817 = vadd.f32 %v2709, %v2789
      %v2818 = vadd.f32 %v2710, %v2786
      %v2819 = vadd.f32 %v2711, %v2787
      %v2820 = vadd.f32 %v2712, %v2784
      %v2821 = vadd.f32 %v2713, %v2785
      %v2822 = vadd.f32 %v2714, %v2782
      %v2823 = vadd.f32 %v2715, %v2783
      %v2824 = vadd.f32 %v2716, %v2780
      %v2825 = vadd.f32 %v2717, %v2781
      %v2826 = vadd.f32 %v2718, %v2778
      %v2827 = vadd.f32 %v2719, %v2779
      %v2828 = vadd.f32 %v2720, %v2776
      %v2829 = vadd.f32 %v2721, %v2777
      %v2830 = vadd.f32 %v2722, %v2774
      %v2831 = vadd.f32 %v2723, %v2775
      %v2832 = vadd.f32 %v2724, %v2772
      %v2833 = vadd.f32 %v2725, %v2773
      %v2834 = vadd.f32 %v2726, %v2770
      %v2835 = vadd.f32 %v2727, %v2771
      %v2836 = vadd.f32 %v2728, %v2768
      %v2837 = vadd.f32 %v2729, %v2769
      %v2838 = vadd.f32 %v2730, %v2802
      %v2839 = vadd.f32 %v2731, %v2803
      %v2840 = vld [vmem:[#allocation3] sm:$0xff]
      %v2841 = vld [vmem:[#allocation3 + $0x8] sm:$0xff]
      %v2842 = vld [vmem:[#allocation3 + $0x10] sm:$0xff]
      %v2843 = vld [vmem:[#allocation3 + $0x18] sm:$0xff]
      %v2844 = vld [vmem:[#allocation3 + $0x20] sm:$0xff]
      %v2845 = vld [vmem:[#allocation3 + $0x28] sm:$0xff]
      %v2846 = vld [vmem:[#allocation3 + $0x30] sm:$0xff]
      %v2847 = vld [vmem:[#allocation3 + $0x38] sm:$0xff]
      %v2848 = vld [vmem:[#allocation3 + $0x40] sm:$0xff]
      %v2849 = vld [vmem:[#allocation3 + $0x48] sm:$0xff]
      %v2850 = vld [vmem:[#allocation3 + $0x50] sm:$0xff]
      %v2851 = vld [vmem:[#allocation3 + $0x58] sm:$0xff]
      %v2852 = vld [vmem:[#allocation3 + $0x60] sm:$0xff]
      %v2853 = vld [vmem:[#allocation3 + $0x68] sm:$0xff]
      %v2854 = vld [vmem:[#allocation3 + $0x70] sm:$0xff]
      %v2855 = vld [vmem:[#allocation3 + $0x78] sm:$0xff]
      %v2856 = vld [vmem:[#allocation3 + $0x80] sm:$0xff]
      %v2857 = vld [vmem:[#allocation3 + $0x88] sm:$0xff]
      %v2858 = vld [vmem:[#allocation3 + $0x90] sm:$0xff]
      %v2859 = vld [vmem:[#allocation3 + $0x98] sm:$0xff]
      %v2860 = vld [vmem:[#allocation3 + $0xa0] sm:$0xff]
      %v2861 = vld [vmem:[#allocation3 + $0xa8] sm:$0xff]
      %v2862 = vld [vmem:[#allocation3 + $0xb0] sm:$0xff]
      %v2863 = vld [vmem:[#allocation3 + $0xb8] sm:$0xff]
      %v2864 = vld [vmem:[#allocation3 + $0xc0] sm:$0xff]
      %v2865 = vld [vmem:[#allocation3 + $0xc8] sm:$0xff]
      %v2866 = vld [vmem:[#allocation3 + $0xd0] sm:$0xff]
      %v2867 = vld [vmem:[#allocation3 + $0xd8] sm:$0xff]
      %v2868 = vld [vmem:[#allocation3 + $0xe0] sm:$0xff]
      %v2869 = vld [vmem:[#allocation3 + $0xe8] sm:$0xff]
      %v2870 = vld [vmem:[#allocation3 + $0xf0] sm:$0xff]
      %v2871 = vld [vmem:[#allocation3 + $0xf8] sm:$0xff]
      %v2872 = vld [vmem:[#allocation3 + $0x100] sm:$0xff]
      %v2873 = vld [vmem:[#allocation3 + $0x108] sm:$0xff]
      %v2874 = vld [vmem:[#allocation3 + $0x110] sm:$0xff]
      %v2875 = vld [vmem:[#allocation3 + $0x118] sm:$0xff]
      %v2876 = vadd.f32 %v2804, %v2840
      %v2877 = vadd.f32 %v2805, %v2841
      %v2878 = vadd.f32 %v2806, %v2842
      %v2879 = vadd.f32 %v2807, %v2843
      %v2880 = vadd.f32 %v2808, %v2844
      %v2881 = vadd.f32 %v2809, %v2845
      %v2882 = vadd.f32 %v2810, %v2846
      %v2883 = vadd.f32 %v2811, %v2847
      %v2884 = vadd.f32 %v2812, %v2848
      %v2885 = vadd.f32 %v2813, %v2849
      %v2886 = vadd.f32 %v2814, %v2850
      %v2887 = vadd.f32 %v2815, %v2851
      %v2888 = vadd.f32 %v2816, %v2852
      %v2889 = vadd.f32 %v2817, %v2853
      %v2890 = vadd.f32 %v2818, %v2854
      %v2891 = vadd.f32 %v2819, %v2855
      %v2892 = vadd.f32 %v2820, %v2856
      %v2893 = vadd.f32 %v2821, %v2857
      %v2894 = vadd.f32 %v2822, %v2858
      %v2895 = vadd.f32 %v2823, %v2859
      %v2896 = vadd.f32 %v2824, %v2860
      %v2897 = vadd.f32 %v2825, %v2861
      %v2898 = vadd.f32 %v2826, %v2862
      %v2899 = vadd.f32 %v2827, %v2863
      %v2900 = vadd.f32 %v2828, %v2864
      %v2901 = vadd.f32 %v2829, %v2865
      %v2902 = vadd.f32 %v2830, %v2866
      %v2903 = vadd.f32 %v2831, %v2867
      %v2904 = vadd.f32 %v2832, %v2868
      %v2905 = vadd.f32 %v2833, %v2869
      %v2906 = vadd.f32 %v2834, %v2870
      %v2907 = vadd.f32 %v2835, %v2871
      %v2908 = vadd.f32 %v2836, %v2872
      %v2909 = vadd.f32 %v2837, %v2873
      %v2910 = vadd.f32 %v2838, %v2874
      %v2911 = vadd.f32 %v2839, %v2875
      %v2912 = vtanh.pop %v2876
      %v2913 = vtanh.pop %v2877
      %v2914 = vtanh.pop %v2878
      %v2915 = vtanh.pop %v2879
      %v2916 = vtanh.pop %v2880
      %v2917 = vtanh.pop %v2881
      %v2918 = vtanh.pop %v2882
      %v2919 = vtanh.pop %v2883
      %v2920 = vtanh.pop %v2884
      %v2921 = vtanh.pop %v2885
      %v2922 = vtanh.pop %v2886
      %v2923 = vtanh.pop %v2887
      %v2924 = vtanh.pop %v2888
      %v2925 = vtanh.pop %v2889
      %v2926 = vtanh.pop %v2890
      %v2927 = vtanh.pop %v2891
      %v2928 = vtanh.pop %v2892
      %v2929 = vtanh.pop %v2893
      %v2930 = vtanh.pop %v2894
      %v2931 = vtanh.pop %v2895
      %v2932 = vtanh.pop %v2896
      %v2933 = vtanh.pop %v2897
      %v2934 = vtanh.pop %v2898
      %v2935 = vtanh.pop %v2899
      %v2936 = vtanh.pop %v2900
      %v2937 = vtanh.pop %v2901
      %v2938 = vtanh.pop %v2902
      %v2939 = vtanh.pop %v2903
      %v2940 = vtanh.pop %v2904
      %v2941 = vtanh.pop %v2905
      %v2942 = vtanh.pop %v2906
      %v2943 = vtanh.pop %v2907
      %v2944 = vtanh.pop %v2908
      %v2945 = vtanh.pop %v2909
      %v2946 = vtanh.pop %v2910
      %v2947 = vtanh.pop %v2911
      %v2948 = vpack.c.bf16 %v2914, %v2912
      %v2949 = vpack.c.bf16 %v2915, %v2913
      %v2950 = vpack.c.bf16 %v2918, %v2916
      %v2951 = vpack.c.bf16 %v2919, %v2917
      %v2952 = vpack.c.bf16 %v2922, %v2920
      %v2953 = vpack.c.bf16 %v2923, %v2921
      %v2954 = vpack.c.bf16 %v2926, %v2924
      %v2955 = vpack.c.bf16 %v2927, %v2925
      %v2956 = vpack.c.bf16 %v2930, %v2928
      %v2957 = vpack.c.bf16 %v2931, %v2929
      %v2958 = vpack.c.bf16 %v2934, %v2932
      %v2959 = vpack.c.bf16 %v2935, %v2933
      %v2960 = vpack.c.bf16 %v2938, %v2936
      %v2961 = vpack.c.bf16 %v2939, %v2937
      %v2962 = vpack.c.bf16 %v2942, %v2940
      %v2963 = vpack.c.bf16 %v2943, %v2941
      %v2964 = vpack.c.bf16 %v2946, %v2944
      %v2965 = vpack.c.bf16 %v2947, %v2945
      %v2966 = vld [vmem:[%s0] sm:$0xff]
      %v2967 = vld [vmem:[%s0 + $0x8] sm:$0xff]
      %v2968 = vld [vmem:[%s0 + $0x10] sm:$0xff]
      %v2969 = vld [vmem:[%s0 + $0x18] sm:$0xff]
      %v2970 = vld [vmem:[%s0 + $0x20] sm:$0xff]
      %v2971 = vld [vmem:[%s0 + $0x28] sm:$0xff]
      %v2972 = vld [vmem:[%s0 + $0x30] sm:$0xff]
      %v2973 = vld [vmem:[%s0 + $0x38] sm:$0xff]
      %v2974 = vld [vmem:[%s0 + $0x40] sm:$0xff]
      %v2975 = vld [vmem:[%s0 + $0x48] sm:$0xff]
      %v2976 = vld [vmem:[%s0 + $0x50] sm:$0xff]
      %v2977 = vld [vmem:[%s0 + $0x58] sm:$0xff]
      %v2978 = vld [vmem:[%s0 + $0x60] sm:$0xff]
      %v2979 = vld [vmem:[%s0 + $0x68] sm:$0xff]
      %v2980 = vld [vmem:[%s0 + $0x70] sm:$0xff]
      %v2981 = vld [vmem:[%s0 + $0x78] sm:$0xff]
      %v2982 = vld [vmem:[%s0 + $0x80] sm:$0xff]
      %v2983 = vld [vmem:[%s0 + $0x88] sm:$0xff]
      %v3002 = vunpack.c.l.b16 %v2966
      %v3003 = vunpack.c.h.b16 %v2966
      %v3004 = vunpack.c.l.b16 %v2967
      %v3005 = vunpack.c.h.b16 %v2967
      %v3006 = vunpack.c.l.b16 %v2968
      %v3007 = vunpack.c.h.b16 %v2968
      %v3008 = vunpack.c.l.b16 %v2969
      %v3009 = vunpack.c.h.b16 %v2969
      %v3010 = vunpack.c.l.b16 %v2970
      %v3011 = vunpack.c.h.b16 %v2970
      %v3012 = vunpack.c.l.b16 %v2971
      %v3013 = vunpack.c.h.b16 %v2971
      %v3014 = vunpack.c.l.b16 %v2972
      %v3015 = vunpack.c.h.b16 %v2972
      %v3016 = vunpack.c.l.b16 %v2973
      %v3017 = vunpack.c.h.b16 %v2973
      %v3018 = vunpack.c.l.b16 %v2974
      %v3019 = vunpack.c.h.b16 %v2974
      %v3020 = vunpack.c.l.b16 %v2975
      %v3021 = vunpack.c.h.b16 %v2975
      %v3022 = vunpack.c.l.b16 %v2976
      %v3023 = vunpack.c.h.b16 %v2976
      %v3024 = vunpack.c.l.b16 %v2977
      %v3025 = vunpack.c.h.b16 %v2977
      %v3026 = vunpack.c.l.b16 %v2978
      %v3027 = vunpack.c.h.b16 %v2978
      %v3028 = vunpack.c.l.b16 %v2979
      %v3029 = vunpack.c.h.b16 %v2979
      %v3030 = vunpack.c.l.b16 %v2980
      %v3031 = vunpack.c.h.b16 %v2980
      %v3032 = vunpack.c.l.b16 %v2981
      %v3033 = vunpack.c.h.b16 %v2981
      %v3034 = vunpack.c.l.b16 %v2982
      %v3035 = vunpack.c.h.b16 %v2982
      %v3036 = vunpack.c.l.b16 %v2983
      %v3037 = vunpack.c.h.b16 %v2983
      %v3038 = vpack.c.b16 %v3004, %v3002
      %v3039 = vpack.c.b16 %v3005, %v3003
      %v3040 = vpack.c.b16 %v3008, %v3006
      %v3041 = vpack.c.b16 %v3009, %v3007
      %v3042 = vpack.c.b16 %v3012, %v3010
      %v3043 = vpack.c.b16 %v3013, %v3011
      %v3044 = vpack.c.b16 %v3016, %v3014
      %v3045 = vpack.c.b16 %v3017, %v3015
      %v3046 = vpack.c.b16 %v3020, %v3018
      %v3047 = vpack.c.b16 %v3021, %v3019
      %v3048 = vpack.c.b16 %v3024, %v3022
      %v3049 = vpack.c.b16 %v3025, %v3023
      %v3050 = vpack.c.b16 %v3028, %v3026
      %v3051 = vpack.c.b16 %v3029, %v3027
      %v3052 = vpack.c.b16 %v3032, %v3030
      %v3053 = vpack.c.b16 %v3033, %v3031
      %v3054 = vpack.c.b16 %v3036, %v3034
      %v3055 = vpack.c.b16 %v3037, %v3035
      %v3074 = vmul.bf16 %v2948, %v3038
      %v3075 = vmul.bf16 %v2949, %v3039
      %v3076 = vmul.bf16 %v2950, %v3040
      %v3077 = vmul.bf16 %v2951, %v3041
      %v3078 = vmul.bf16 %v2952, %v3042
      %v3079 = vmul.bf16 %v2953, %v3043
      %v3080 = vmul.bf16 %v2954, %v3044
      %v3081 = vmul.bf16 %v2955, %v3045
      %v3082 = vmul.bf16 %v2956, %v3046
      %v3083 = vmul.bf16 %v2957, %v3047
      %v3084 = vmul.bf16 %v2958, %v3048
      %v3085 = vmul.bf16 %v2959, %v3049
      %v3086 = vmul.bf16 %v2960, %v3050
      %v3087 = vmul.bf16 %v2961, %v3051
      %v3088 = vmul.bf16 %v2962, %v3052
      %v3089 = vmul.bf16 %v2963, %v3053
      %v3090 = vmul.bf16 %v2964, %v3054
      %v3091 = vmul.bf16 %v2965, %v3055
      %v3110 = vunpack.c.l.b16 %v3074
      %v3111 = vunpack.c.l.b16 %v3075
      %v3112 = vunpack.c.h.b16 %v3074
      %v3113 = vunpack.c.h.b16 %v3075
      %v3114 = vunpack.c.l.b16 %v3076
      %v3115 = vunpack.c.l.b16 %v3077
      %v3116 = vunpack.c.h.b16 %v3076
      %v3117 = vunpack.c.h.b16 %v3077
      %v3118 = vunpack.c.l.b16 %v3078
      %v3119 = vunpack.c.l.b16 %v3079
      %v3120 = vunpack.c.h.b16 %v3078
      %v3121 = vunpack.c.h.b16 %v3079
      %v3122 = vunpack.c.l.b16 %v3080
      %v3123 = vunpack.c.l.b16 %v3081
      %v3124 = vunpack.c.h.b16 %v3080
      %v3125 = vunpack.c.h.b16 %v3081
      %v3126 = vunpack.c.l.b16 %v3082
      %v3127 = vunpack.c.l.b16 %v3083
      %v3128 = vunpack.c.h.b16 %v3082
      %v3129 = vunpack.c.h.b16 %v3083
      %v3130 = vunpack.c.l.b16 %v3084
      %v3131 = vunpack.c.l.b16 %v3085
      %v3132 = vunpack.c.h.b16 %v3084
      %v3133 = vunpack.c.h.b16 %v3085
      %v3134 = vunpack.c.l.b16 %v3086
      %v3135 = vunpack.c.l.b16 %v3087
      %v3136 = vunpack.c.h.b16 %v3086
      %v3137 = vunpack.c.h.b16 %v3087
      %v3138 = vunpack.c.l.b16 %v3088
      %v3139 = vunpack.c.l.b16 %v3089
      %v3140 = vunpack.c.h.b16 %v3088
      %v3141 = vunpack.c.h.b16 %v3089
      %v3142 = vunpack.c.l.b16 %v3090
      %v3143 = vunpack.c.l.b16 %v3091
      %v3144 = vunpack.c.h.b16 %v3090
      %v3145 = vunpack.c.h.b16 %v3091
      %v3146 = vpack.c.b16 %v3111, %v3110
      %v3147 = vpack.c.b16 %v3113, %v3112
      %v3148 = vpack.c.b16 %v3115, %v3114
      %v3149 = vpack.c.b16 %v3117, %v3116
      %v3150 = vpack.c.b16 %v3119, %v3118
      %v3151 = vpack.c.b16 %v3121, %v3120
      %v3152 = vpack.c.b16 %v3123, %v3122
      %v3153 = vpack.c.b16 %v3125, %v3124
      %v3154 = vpack.c.b16 %v3127, %v3126
      %v3155 = vpack.c.b16 %v3129, %v3128
      %v3156 = vpack.c.b16 %v3131, %v3130
      %v3157 = vpack.c.b16 %v3133, %v3132
      %v3158 = vpack.c.b16 %v3135, %v3134
      %v3159 = vpack.c.b16 %v3137, %v3136
      %v3160 = vpack.c.b16 %v3139, %v3138
      %v3161 = vpack.c.b16 %v3141, %v3140
      %v3162 = vpack.c.b16 %v3143, %v3142
      %v3163 = vpack.c.b16 %v3145, %v3144
      %3182 = vst [vmem:[#allocation2] sm:$0xff] %v3146
      %3183 = vst [vmem:[#allocation2 + $0x8] sm:$0xff] %v3147
      %3184 = vst [vmem:[#allocation2 + $0x10] sm:$0xff] %v3148
      %3185 = vst [vmem:[#allocation2 + $0x18] sm:$0xff] %v3149
      %3186 = vst [vmem:[#allocation2 + $0x20] sm:$0xff] %v3150
      %3187 = vst [vmem:[#allocation2 + $0x28] sm:$0xff] %v3151
      %3188 = vst [vmem:[#allocation2 + $0x30] sm:$0xff] %v3152
      %3189 = vst [vmem:[#allocation2 + $0x38] sm:$0xff] %v3153
      %3190 = vst [vmem:[#allocation2 + $0x40] sm:$0xff] %v3154
      %3191 = vst [vmem:[#allocation2 + $0x48] sm:$0xff] %v3155
      %3192 = vst [vmem:[#allocation2 + $0x50] sm:$0xff] %v3156
      %3193 = vst [vmem:[#allocation2 + $0x58] sm:$0xff] %v3157
      %3194 = vst [vmem:[#allocation2 + $0x60] sm:$0xff] %v3158
      %3195 = vst [vmem:[#allocation2 + $0x68] sm:$0xff] %v3159
      %3196 = vst [vmem:[#allocation2 + $0x70] sm:$0xff] %v3160
      %3197 = vst [vmem:[#allocation2 + $0x78] sm:$0xff] %v3161
      %3198 = vst [vmem:[#allocation2 + $0x80] sm:$0xff] %v3162
      %3199 = vst [vmem:[#allocation2 + $0x88] sm:$0xff] %v3163
      %v3200 = vld [vmem:[#allocation2] sm:$0xff]
      %v3201 = vld [vmem:[#allocation2 + $0x8] sm:$0xff]
      %v3202 = vld [vmem:[#allocation2 + $0x10] sm:$0xff]
      %v3203 = vld [vmem:[#allocation2 + $0x18] sm:$0xff]
      %v3204 = vld [vmem:[#allocation2 + $0x20] sm:$0xff]
      %v3205 = vld [vmem:[#allocation2 + $0x28] sm:$0xff]
      %v3206 = vld [vmem:[#allocation2 + $0x30] sm:$0xff]
      %v3207 = vld [vmem:[#allocation2 + $0x38] sm:$0xff]
      %v3208 = vld [vmem:[#allocation2 + $0x40] sm:$0xff]
      %v3209 = vld [vmem:[#allocation2 + $0x48] sm:$0xff]
      %v3210 = vld [vmem:[#allocation2 + $0x50] sm:$0xff]
      %v3211 = vld [vmem:[#allocation2 + $0x58] sm:$0xff]
      %v3212 = vld [vmem:[#allocation2 + $0x60] sm:$0xff]
      %v3213 = vld [vmem:[#allocation2 + $0x68] sm:$0xff]
      %v3214 = vld [vmem:[#allocation2 + $0x70] sm:$0xff]
      %v3215 = vld [vmem:[#allocation2 + $0x78] sm:$0xff]
      %v3216 = vld [vmem:[#allocation2 + $0x80] sm:$0xff]
      %v3217 = vld [vmem:[#allocation2 + $0x88] sm:$0xff]
      %v3218 = vld [vmem:[%s352] sm:$0xff]
      %v3219 = vld [vmem:[%s352 + $0x8] sm:$0xff]
      %v3220 = vld [vmem:[%s352 + $0x10] sm:$0xff]
      %v3221 = vld [vmem:[%s352 + $0x18] sm:$0xff]
      %v3222 = vld [vmem:[%s352 + $0x20] sm:$0xff]
      %v3223 = vld [vmem:[%s352 + $0x28] sm:$0xff]
      %v3224 = vld [vmem:[%s352 + $0x30] sm:$0xff]
      %v3225 = vld [vmem:[%s352 + $0x38] sm:$0xff]
      %v3226 = vld [vmem:[%s352 + $0x40] sm:$0xff]
      %v3227 = vld [vmem:[%s352 + $0x48] sm:$0xff]
      %v3228 = vld [vmem:[%s352 + $0x50] sm:$0xff]
      %v3229 = vld [vmem:[%s352 + $0x58] sm:$0xff]
      %v3230 = vld [vmem:[%s352 + $0x60] sm:$0xff]
      %v3231 = vld [vmem:[%s352 + $0x68] sm:$0xff]
      %v3232 = vld [vmem:[%s352 + $0x70] sm:$0xff]
      %v3233 = vld [vmem:[%s352 + $0x78] sm:$0xff]
      %v3234 = vld [vmem:[%s352 + $0x80] sm:$0xff]
      %v3235 = vld [vmem:[%s352 + $0x88] sm:$0xff]
      %v3236 = vld [vmem:[%s352 + $0x90] sm:$0xff]
      %v3237 = vld [vmem:[%s352 + $0x98] sm:$0xff]
      %v3238 = vld [vmem:[%s352 + $0xa0] sm:$0xff]
      %v3239 = vld [vmem:[%s352 + $0xa8] sm:$0xff]
      %v3240 = vld [vmem:[%s352 + $0xb0] sm:$0xff]
      %v3241 = vld [vmem:[%s352 + $0xb8] sm:$0xff]
      %v3242 = vld [vmem:[%s352 + $0xc0] sm:$0xff]
      %v3243 = vld [vmem:[%s352 + $0xc8] sm:$0xff]
      %v3244 = vld [vmem:[%s352 + $0xd0] sm:$0xff]
      %v3245 = vld [vmem:[%s352 + $0xd8] sm:$0xff]
      %v3246 = vld [vmem:[%s352 + $0xe0] sm:$0xff]
      %v3247 = vld [vmem:[%s352 + $0xe8] sm:$0xff]
      %v3248 = vld [vmem:[%s352 + $0xf0] sm:$0xff]
      %v3249 = vld [vmem:[%s352 + $0xf8] sm:$0xff]
      %v3268 = vunpack.c.l.b16 %v3200
      %v3269 = vunpack.c.h.b16 %v3200
      %v3270 = vunpack.c.l.b16 %v3201
      %v3271 = vunpack.c.h.b16 %v3201
      %v3272 = vunpack.c.l.b16 %v3202
      %v3273 = vunpack.c.h.b16 %v3202
      %v3274 = vunpack.c.l.b16 %v3203
      %v3275 = vunpack.c.h.b16 %v3203
      %v3276 = vunpack.c.l.b16 %v3204
      %v3277 = vunpack.c.h.b16 %v3204
      %v3278 = vunpack.c.l.b16 %v3205
      %v3279 = vunpack.c.h.b16 %v3205
      %v3280 = vunpack.c.l.b16 %v3206
      %v3281 = vunpack.c.h.b16 %v3206
      %v3282 = vunpack.c.l.b16 %v3207
      %v3283 = vunpack.c.h.b16 %v3207
      %v3284 = vunpack.c.l.b16 %v3208
      %v3285 = vunpack.c.h.b16 %v3208
      %v3286 = vunpack.c.l.b16 %v3209
      %v3287 = vunpack.c.h.b16 %v3209
      %v3288 = vunpack.c.l.b16 %v3210
      %v3289 = vunpack.c.h.b16 %v3210
      %v3290 = vunpack.c.l.b16 %v3211
      %v3291 = vunpack.c.h.b16 %v3211
      %v3292 = vunpack.c.l.b16 %v3212
      %v3293 = vunpack.c.h.b16 %v3212
      %v3294 = vunpack.c.l.b16 %v3213
      %v3295 = vunpack.c.h.b16 %v3213
      %v3296 = vunpack.c.l.b16 %v3214
      %v3297 = vunpack.c.h.b16 %v3214
      %v3298 = vunpack.c.l.b16 %v3215
      %v3299 = vunpack.c.h.b16 %v3215
      %v3300 = vunpack.c.l.b16 %v3216
      %v3301 = vunpack.c.h.b16 %v3216
      %v3302 = vunpack.c.l.b16 %v3217
      %v3303 = vunpack.c.h.b16 %v3217
      %v3304 = vpack.c.b16 %v3270, %v3268
      %v3305 = vpack.c.b16 %v3271, %v3269
      %v3306 = vpack.c.b16 %v3274, %v3272
      %v3307 = vpack.c.b16 %v3275, %v3273
      %v3308 = vpack.c.b16 %v3278, %v3276
      %v3309 = vpack.c.b16 %v3279, %v3277
      %v3310 = vpack.c.b16 %v3282, %v3280
      %v3311 = vpack.c.b16 %v3283, %v3281
      %v3312 = vpack.c.b16 %v3286, %v3284
      %v3313 = vpack.c.b16 %v3287, %v3285
      %v3314 = vpack.c.b16 %v3290, %v3288
      %v3315 = vpack.c.b16 %v3291, %v3289
      %v3316 = vpack.c.b16 %v3294, %v3292
      %v3317 = vpack.c.b16 %v3295, %v3293
      %v3318 = vpack.c.b16 %v3298, %v3296
      %v3319 = vpack.c.b16 %v3299, %v3297
      %v3320 = vpack.c.b16 %v3302, %v3300
      %v3321 = vpack.c.b16 %v3303, %v3301
      %v3372 = vunpack.c.l.b16 %v3218
      %v3373 = vunpack.c.h.b16 %v3218
      %v3374 = vunpack.c.l.b16 %v3219
      %v3375 = vunpack.c.h.b16 %v3219
      %v3376 = vunpack.c.l.b16 %v3220
      %v3377 = vunpack.c.h.b16 %v3220
      %v3378 = vunpack.c.l.b16 %v3221
      %v3379 = vunpack.c.h.b16 %v3221
      %v3380 = vunpack.c.l.b16 %v3222
      %v3381 = vunpack.c.h.b16 %v3222
      %v3382 = vunpack.c.l.b16 %v3223
      %v3383 = vunpack.c.h.b16 %v3223
      %v3384 = vunpack.c.l.b16 %v3224
      %v3385 = vunpack.c.h.b16 %v3224
      %v3386 = vunpack.c.l.b16 %v3225
      %v3387 = vunpack.c.h.b16 %v3225
      %v3388 = vunpack.c.l.b16 %v3226
      %v3389 = vunpack.c.h.b16 %v3226
      %v3390 = vunpack.c.l.b16 %v3227
      %v3391 = vunpack.c.h.b16 %v3227
      %v3392 = vunpack.c.l.b16 %v3228
      %v3393 = vunpack.c.h.b16 %v3228
      %v3394 = vunpack.c.l.b16 %v3229
      %v3395 = vunpack.c.h.b16 %v3229
      %v3396 = vunpack.c.l.b16 %v3230
      %v3397 = vunpack.c.h.b16 %v3230
      %v3398 = vunpack.c.l.b16 %v3231
      %v3399 = vunpack.c.h.b16 %v3231
      %v3400 = vunpack.c.l.b16 %v3232
      %v3401 = vunpack.c.h.b16 %v3232
      %v3402 = vunpack.c.l.b16 %v3233
      %v3403 = vunpack.c.h.b16 %v3233
      %v3404 = vunpack.c.l.b16 %v3234
      %v3405 = vunpack.c.h.b16 %v3234
      %v3406 = vunpack.c.l.b16 %v3235
      %v3407 = vunpack.c.h.b16 %v3235
      %v3408 = vunpack.c.l.b16 %v3236
      %v3409 = vunpack.c.h.b16 %v3236
      %v3410 = vunpack.c.l.b16 %v3237
      %v3411 = vunpack.c.h.b16 %v3237
      %v3412 = vunpack.c.l.b16 %v3238
      %v3413 = vunpack.c.h.b16 %v3238
      %v3414 = vunpack.c.l.b16 %v3239
      %v3415 = vunpack.c.h.b16 %v3239
      %v3416 = vunpack.c.l.b16 %v3240
      %v3417 = vunpack.c.h.b16 %v3240
      %v3418 = vunpack.c.l.b16 %v3241
      %v3419 = vunpack.c.h.b16 %v3241
      %v3420 = vunpack.c.l.b16 %v3242
      %v3421 = vunpack.c.h.b16 %v3242
      %v3422 = vunpack.c.l.b16 %v3243
      %v3423 = vunpack.c.h.b16 %v3243
      %v3424 = vunpack.c.l.b16 %v3244
      %v3425 = vunpack.c.h.b16 %v3244
      %v3426 = vunpack.c.l.b16 %v3245
      %v3427 = vunpack.c.h.b16 %v3245
      %v3428 = vunpack.c.l.b16 %v3246
      %v3429 = vunpack.c.h.b16 %v3246
      %v3430 = vunpack.c.l.b16 %v3247
      %v3431 = vunpack.c.h.b16 %v3247
      %v3432 = vunpack.c.l.b16 %v3248
      %v3433 = vunpack.c.h.b16 %v3248
      %v3434 = vunpack.c.l.b16 %v3249
      %v3435 = vunpack.c.h.b16 %v3249
      %v3436 = vpack.c.b16 %v3374, %v3372
      %v3437 = vpack.c.b16 %v3375, %v3373
      %v3438 = vpack.c.b16 %v3378, %v3376
      %v3439 = vpack.c.b16 %v3379, %v3377
      %v3440 = vpack.c.b16 %v3382, %v3380
      %v3441 = vpack.c.b16 %v3383, %v3381
      %v3442 = vpack.c.b16 %v3386, %v3384
      %v3443 = vpack.c.b16 %v3387, %v3385
      %v3444 = vpack.c.b16 %v3390, %v3388
      %v3445 = vpack.c.b16 %v3391, %v3389
      %v3446 = vpack.c.b16 %v3394, %v3392
      %v3447 = vpack.c.b16 %v3395, %v3393
      %v3448 = vpack.c.b16 %v3398, %v3396
      %v3449 = vpack.c.b16 %v3399, %v3397
      %v3450 = vpack.c.b16 %v3402, %v3400
      %v3451 = vpack.c.b16 %v3403, %v3401
      %v3452 = vpack.c.b16 %v3406, %v3404
      %v3453 = vpack.c.b16 %v3407, %v3405
      %v3454 = vpack.c.b16 %v3410, %v3408
      %v3455 = vpack.c.b16 %v3411, %v3409
      %v3456 = vpack.c.b16 %v3414, %v3412
      %v3457 = vpack.c.b16 %v3415, %v3413
      %v3458 = vpack.c.b16 %v3418, %v3416
      %v3459 = vpack.c.b16 %v3419, %v3417
      %v3460 = vpack.c.b16 %v3422, %v3420
      %v3461 = vpack.c.b16 %v3423, %v3421
      %v3462 = vpack.c.b16 %v3426, %v3424
      %v3463 = vpack.c.b16 %v3427, %v3425
      %v3464 = vpack.c.b16 %v3430, %v3428
      %v3465 = vpack.c.b16 %v3431, %v3429
      %v3466 = vpack.c.b16 %v3434, %v3432
      %v3467 = vpack.c.b16 %v3435, %v3433
      %3500 = vmatprep.subr.bf16.mxu0 %v3451
      %3501 = vmatpush1.bf16.msra.mxu0 %v3450
      %3502 = vmatprep.subr.bf16.mxu0 %v3449
      %3503 = vmatpush1.bf16.msra.mxu0 %v3448
      %3504 = vmatprep.subr.bf16.mxu0 %v3447
      %3505 = vmatpush1.bf16.msra.mxu0 %v3446
      %3506 = vmatprep.subr.bf16.mxu0 %v3445
      %3507 = vmatpush1.bf16.msra.mxu0 %v3444
      %3508 = vmatprep.subr.bf16.mxu0 %v3443
      %3509 = vmatpush1.bf16.msra.mxu0 %v3442
      %3510 = vmatprep.subr.bf16.mxu0 %v3441
      %3511 = vmatpush1.bf16.msra.mxu0 %v3440
      %3512 = vmatprep.subr.bf16.mxu0 %v3439
      %3513 = vmatpush1.bf16.msra.mxu0 %v3438
      %3514 = vmatprep.subr.bf16.mxu0 %v3437
      %3515 = vmatpush1.bf16.msra.mxu0 %v3436
      %3516 = vmatprep.subr.bf16.mxu0 %v3467
      %3517 = vmatpush2.bf16.msra.mxu0 %v3466
      %3518 = vmatprep.subr.bf16.mxu0 %v3465
      %3519 = vmatpush2.bf16.msra.mxu0 %v3464
      %3520 = vmatprep.subr.bf16.mxu0 %v3463
      %3521 = vmatpush2.bf16.msra.mxu0 %v3462
      %3522 = vmatprep.subr.bf16.mxu0 %v3461
      %3523 = vmatpush2.bf16.msra.mxu0 %v3460
      %3524 = vmatprep.subr.bf16.mxu0 %v3459
      %3525 = vmatpush2.bf16.msra.mxu0 %v3458
      %3526 = vmatprep.subr.bf16.mxu0 %v3457
      %3527 = vmatpush2.bf16.msra.mxu0 %v3456
      %3528 = vmatprep.subr.bf16.mxu0 %v3455
      %3529 = vmatpush2.bf16.msra.mxu0 %v3454
      %3530 = vmatprep.subr.bf16.mxu0 %v3453
      %3531 = vmatpush2.bf16.msra.mxu0 %v3452
      %3532 = vmatprep.mubr.bf16.mxu0 %v3305
      %3533 = vmatmul.mubr.bf16.gmra.mxu0 %v3304
      %v3534 = vpop.f32.mrf.mxu0
      %v3535 = vadd.f32 0.0, %v3534
      %v3536 = vpop.f32.mrf.mxu0
      %v3537 = vadd.f32 0.0, %v3536
      %v3538 = vpop.f32.mrf.mxu0
      %v3539 = vadd.f32 0.0, %v3538
      %v3540 = vpop.f32.mrf.mxu0
      %v3541 = vadd.f32 0.0, %v3540
      %3542 = vmatprep.mubr.bf16.mxu0 %v3307
      %3543 = vmatmul.mubr.bf16.gmra.mxu0 %v3306
      %v3544 = vpop.f32.mrf.mxu0
      %v3545 = vadd.f32 0.0, %v3544
      %v3546 = vpop.f32.mrf.mxu0
      %v3547 = vadd.f32 0.0, %v3546
      %v3548 = vpop.f32.mrf.mxu0
      %v3549 = vadd.f32 0.0, %v3548
      %v3550 = vpop.f32.mrf.mxu0
      %v3551 = vadd.f32 0.0, %v3550
      %3552 = vmatprep.mubr.bf16.mxu0 %v3309
      %3553 = vmatmul.mubr.bf16.gmra.mxu0 %v3308
      %v3554 = vpop.f32.mrf.mxu0
      %v3555 = vadd.f32 0.0, %v3554
      %v3556 = vpop.f32.mrf.mxu0
      %v3557 = vadd.f32 0.0, %v3556
      %v3558 = vpop.f32.mrf.mxu0
      %v3559 = vadd.f32 0.0, %v3558
      %v3560 = vpop.f32.mrf.mxu0
      %v3561 = vadd.f32 0.0, %v3560
      %3562 = vmatprep.mubr.bf16.mxu0 %v3311
      %3563 = vmatmul.mubr.bf16.gmra.mxu0 %v3310
      %v3564 = vpop.f32.mrf.mxu0
      %v3565 = vadd.f32 0.0, %v3564
      %v3566 = vpop.f32.mrf.mxu0
      %v3567 = vadd.f32 0.0, %v3566
      %v3568 = vpop.f32.mrf.mxu0
      %v3569 = vadd.f32 0.0, %v3568
      %v3570 = vpop.f32.mrf.mxu0
      %v3571 = vadd.f32 0.0, %v3570
      %3572 = vmatprep.mubr.bf16.mxu0 %v3313
      %3573 = vmatmul.mubr.bf16.gmra.mxu0 %v3312
      %v3574 = vpop.f32.mrf.mxu0
      %v3575 = vadd.f32 0.0, %v3574
      %v3576 = vpop.f32.mrf.mxu0
      %v3577 = vadd.f32 0.0, %v3576
      %v3578 = vpop.f32.mrf.mxu0
      %v3579 = vadd.f32 0.0, %v3578
      %v3580 = vpop.f32.mrf.mxu0
      %v3581 = vadd.f32 0.0, %v3580
      %3582 = vmatprep.mubr.bf16.mxu0 %v3315
      %3583 = vmatmul.mubr.bf16.gmra.mxu0 %v3314
      %v3584 = vpop.f32.mrf.mxu0
      %v3585 = vadd.f32 0.0, %v3584
      %v3586 = vpop.f32.mrf.mxu0
      %v3587 = vadd.f32 0.0, %v3586
      %v3588 = vpop.f32.mrf.mxu0
      %v3589 = vadd.f32 0.0, %v3588
      %v3590 = vpop.f32.mrf.mxu0
      %v3591 = vadd.f32 0.0, %v3590
      %3592 = vmatprep.mubr.bf16.mxu0 %v3317
      %3593 = vmatmul.mubr.bf16.gmra.mxu0 %v3316
      %v3594 = vpop.f32.mrf.mxu0
      %v3595 = vadd.f32 0.0, %v3594
      %v3596 = vpop.f32.mrf.mxu0
      %v3597 = vadd.f32 0.0, %v3596
      %v3598 = vpop.f32.mrf.mxu0
      %v3599 = vadd.f32 0.0, %v3598
      %v3600 = vpop.f32.mrf.mxu0
      %v3601 = vadd.f32 0.0, %v3600
      %3602 = vmatprep.mubr.bf16.mxu0 %v3319
      %3603 = vmatmul.mubr.bf16.gmra.mxu0 %v3318
      %v3604 = vpop.f32.mrf.mxu0
      %v3605 = vadd.f32 0.0, %v3604
      %v3606 = vpop.f32.mrf.mxu0
      %v3607 = vadd.f32 0.0, %v3606
      %v3608 = vpop.f32.mrf.mxu0
      %v3609 = vadd.f32 0.0, %v3608
      %v3610 = vpop.f32.mrf.mxu0
      %v3611 = vadd.f32 0.0, %v3610
      %3612 = vmatprep.mubr.bf16.mxu0 %v3321
      %3613 = vmatmul.mubr.bf16.gmra.mxu0 %v3320
      %v3614 = vpop.f32.mrf.mxu0
      %v3615 = vadd.f32 0.0, %v3614
      %v3616 = vpop.f32.mrf.mxu0
      %v3617 = vadd.f32 0.0, %v3616
      %v3618 = vpop.f32.mrf.mxu0
      %v3619 = vadd.f32 0.0, %v3618
      %v3620 = vpop.f32.mrf.mxu0
      %v3621 = vadd.f32 0.0, %v3620
      %3622 = vdwg.mxu0
      %v3623 = vld [vmem:[%s1992] sm:$0xff]
      %v3624 = vld [vmem:[%s1992 + $0x8] sm:$0xff]
      %v3625 = vld [vmem:[%s1992 + $0x10] sm:$0xff]
      %v3626 = vld [vmem:[%s1992 + $0x18] sm:$0xff]
      %v3627 = vld [vmem:[%s1992 + $0x20] sm:$0xff]
      %v3628 = vld [vmem:[%s1992 + $0x28] sm:$0xff]
      %v3629 = vld [vmem:[%s1992 + $0x30] sm:$0xff]
      %v3630 = vld [vmem:[%s1992 + $0x38] sm:$0xff]
      %v3631 = vld [vmem:[%s1992 + $0x40] sm:$0xff]
      %v3632 = vld [vmem:[%s1992 + $0x48] sm:$0xff]
      %v3633 = vld [vmem:[%s1992 + $0x50] sm:$0xff]
      %v3634 = vld [vmem:[%s1992 + $0x58] sm:$0xff]
      %v3635 = vld [vmem:[%s1992 + $0x60] sm:$0xff]
      %v3636 = vld [vmem:[%s1992 + $0x68] sm:$0xff]
      %v3637 = vld [vmem:[%s1992 + $0x70] sm:$0xff]
      %v3638 = vld [vmem:[%s1992 + $0x78] sm:$0xff]
      %v3639 = vld [vmem:[%s1992 + $0x80] sm:$0xff]
      %v3640 = vld [vmem:[%s1992 + $0x88] sm:$0xff]
      %v3641 = vld [vmem:[%s1992 + $0x90] sm:$0xff]
      %v3642 = vld [vmem:[%s1992 + $0x98] sm:$0xff]
      %v3643 = vld [vmem:[%s1992 + $0xa0] sm:$0xff]
      %v3644 = vld [vmem:[%s1992 + $0xa8] sm:$0xff]
      %v3645 = vld [vmem:[%s1992 + $0xb0] sm:$0xff]
      %v3646 = vld [vmem:[%s1992 + $0xb8] sm:$0xff]
      %v3647 = vld [vmem:[%s1992 + $0xc0] sm:$0xff]
      %v3648 = vld [vmem:[%s1992 + $0xc8] sm:$0xff]
      %v3649 = vld [vmem:[%s1992 + $0xd0] sm:$0xff]
      %v3650 = vld [vmem:[%s1992 + $0xd8] sm:$0xff]
      %v3651 = vld [vmem:[%s1992 + $0xe0] sm:$0xff]
      %v3652 = vld [vmem:[%s1992 + $0xe8] sm:$0xff]
      %v3653 = vld [vmem:[%s1992 + $0xf0] sm:$0xff]
      %v3654 = vld [vmem:[%s1992 + $0xf8] sm:$0xff]
      %v3687 = vunpack.c.l.b16 %v3623
      %v3688 = vunpack.c.h.b16 %v3623
      %v3689 = vunpack.c.l.b16 %v3624
      %v3690 = vunpack.c.h.b16 %v3624
      %v3691 = vunpack.c.l.b16 %v3625
      %v3692 = vunpack.c.h.b16 %v3625
      %v3693 = vunpack.c.l.b16 %v3626
      %v3694 = vunpack.c.h.b16 %v3626
      %v3695 = vunpack.c.l.b16 %v3627
      %v3696 = vunpack.c.h.b16 %v3627
      %v3697 = vunpack.c.l.b16 %v3628
      %v3698 = vunpack.c.h.b16 %v3628
      %v3699 = vunpack.c.l.b16 %v3629
      %v3700 = vunpack.c.h.b16 %v3629
      %v3701 = vunpack.c.l.b16 %v3630
      %v3702 = vunpack.c.h.b16 %v3630
      %v3703 = vunpack.c.l.b16 %v3631
      %v3704 = vunpack.c.h.b16 %v3631
      %v3705 = vunpack.c.l.b16 %v3632
      %v3706 = vunpack.c.h.b16 %v3632
      %v3707 = vunpack.c.l.b16 %v3633
      %v3708 = vunpack.c.h.b16 %v3633
      %v3709 = vunpack.c.l.b16 %v3634
      %v3710 = vunpack.c.h.b16 %v3634
      %v3711 = vunpack.c.l.b16 %v3635
      %v3712 = vunpack.c.h.b16 %v3635
      %v3713 = vunpack.c.l.b16 %v3636
      %v3714 = vunpack.c.h.b16 %v3636
      %v3715 = vunpack.c.l.b16 %v3637
      %v3716 = vunpack.c.h.b16 %v3637
      %v3717 = vunpack.c.l.b16 %v3638
      %v3718 = vunpack.c.h.b16 %v3638
      %v3719 = vunpack.c.l.b16 %v3639
      %v3720 = vunpack.c.h.b16 %v3639
      %v3721 = vunpack.c.l.b16 %v3640
      %v3722 = vunpack.c.h.b16 %v3640
      %v3723 = vunpack.c.l.b16 %v3641
      %v3724 = vunpack.c.h.b16 %v3641
      %v3725 = vunpack.c.l.b16 %v3642
      %v3726 = vunpack.c.h.b16 %v3642
      %v3727 = vunpack.c.l.b16 %v3643
      %v3728 = vunpack.c.h.b16 %v3643
      %v3729 = vunpack.c.l.b16 %v3644
      %v3730 = vunpack.c.h.b16 %v3644
      %v3731 = vunpack.c.l.b16 %v3645
      %v3732 = vunpack.c.h.b16 %v3645
      %v3733 = vunpack.c.l.b16 %v3646
      %v3734 = vunpack.c.h.b16 %v3646
      %v3735 = vunpack.c.l.b16 %v3647
      %v3736 = vunpack.c.h.b16 %v3647
      %v3737 = vunpack.c.l.b16 %v3648
      %v3738 = vunpack.c.h.b16 %v3648
      %v3739 = vunpack.c.l.b16 %v3649
      %v3740 = vunpack.c.h.b16 %v3649
      %v3741 = vunpack.c.l.b16 %v3650
      %v3742 = vunpack.c.h.b16 %v3650
      %v3743 = vunpack.c.l.b16 %v3651
      %v3744 = vunpack.c.h.b16 %v3651
      %v3745 = vunpack.c.l.b16 %v3652
      %v3746 = vunpack.c.h.b16 %v3652
      %v3747 = vunpack.c.l.b16 %v3653
      %v3748 = vunpack.c.h.b16 %v3653
      %v3749 = vunpack.c.l.b16 %v3654
      %v3750 = vunpack.c.h.b16 %v3654
      %v3751 = vpack.c.b16 %v3689, %v3687
      %v3752 = vpack.c.b16 %v3690, %v3688
      %v3753 = vpack.c.b16 %v3693, %v3691
      %v3754 = vpack.c.b16 %v3694, %v3692
      %v3755 = vpack.c.b16 %v3697, %v3695
      %v3756 = vpack.c.b16 %v3698, %v3696
      %v3757 = vpack.c.b16 %v3701, %v3699
      %v3758 = vpack.c.b16 %v3702, %v3700
      %v3759 = vpack.c.b16 %v3705, %v3703
      %v3760 = vpack.c.b16 %v3706, %v3704
      %v3761 = vpack.c.b16 %v3709, %v3707
      %v3762 = vpack.c.b16 %v3710, %v3708
      %v3763 = vpack.c.b16 %v3713, %v3711
      %v3764 = vpack.c.b16 %v3714, %v3712
      %v3765 = vpack.c.b16 %v3717, %v3715
      %v3766 = vpack.c.b16 %v3718, %v3716
      %v3767 = vpack.c.b16 %v3721, %v3719
      %v3768 = vpack.c.b16 %v3722, %v3720
      %v3769 = vpack.c.b16 %v3725, %v3723
      %v3770 = vpack.c.b16 %v3726, %v3724
      %v3771 = vpack.c.b16 %v3729, %v3727
      %v3772 = vpack.c.b16 %v3730, %v3728
      %v3773 = vpack.c.b16 %v3733, %v3731
      %v3774 = vpack.c.b16 %v3734, %v3732
      %v3775 = vpack.c.b16 %v3737, %v3735
      %v3776 = vpack.c.b16 %v3738, %v3736
      %v3777 = vpack.c.b16 %v3741, %v3739
      %v3778 = vpack.c.b16 %v3742, %v3740
      %v3779 = vpack.c.b16 %v3745, %v3743
      %v3780 = vpack.c.b16 %v3746, %v3744
      %v3781 = vpack.c.b16 %v3749, %v3747
      %v3782 = vpack.c.b16 %v3750, %v3748
      %3815 = vmatprep.subr.bf16.mxu0 %v3766
      %3816 = vmatpush1.bf16.msra.mxu0 %v3765
      %3817 = vmatprep.subr.bf16.mxu0 %v3764
      %3818 = vmatpush1.bf16.msra.mxu0 %v3763
      %3819 = vmatprep.subr.bf16.mxu0 %v3762
      %3820 = vmatpush1.bf16.msra.mxu0 %v3761
      %3821 = vmatprep.subr.bf16.mxu0 %v3760
      %3822 = vmatpush1.bf16.msra.mxu0 %v3759
      %3823 = vmatprep.subr.bf16.mxu0 %v3758
      %3824 = vmatpush1.bf16.msra.mxu0 %v3757
      %3825 = vmatprep.subr.bf16.mxu0 %v3756
      %3826 = vmatpush1.bf16.msra.mxu0 %v3755
      %3827 = vmatprep.subr.bf16.mxu0 %v3754
      %3828 = vmatpush1.bf16.msra.mxu0 %v3753
      %3829 = vmatprep.subr.bf16.mxu0 %v3752
      %3830 = vmatpush1.bf16.msra.mxu0 %v3751
      %3831 = vmatprep.subr.bf16.mxu0 %v3782
      %3832 = vmatpush2.bf16.msra.mxu0 %v3781
      %3833 = vmatprep.subr.bf16.mxu0 %v3780
      %3834 = vmatpush2.bf16.msra.mxu0 %v3779
      %3835 = vmatprep.subr.bf16.mxu0 %v3778
      %3836 = vmatpush2.bf16.msra.mxu0 %v3777
      %3837 = vmatprep.subr.bf16.mxu0 %v3776
      %3838 = vmatpush2.bf16.msra.mxu0 %v3775
      %3839 = vmatprep.subr.bf16.mxu0 %v3774
      %3840 = vmatpush2.bf16.msra.mxu0 %v3773
      %3841 = vmatprep.subr.bf16.mxu0 %v3772
      %3842 = vmatpush2.bf16.msra.mxu0 %v3771
      %3843 = vmatprep.subr.bf16.mxu0 %v3770
      %3844 = vmatpush2.bf16.msra.mxu0 %v3769
      %3845 = vmatprep.subr.bf16.mxu0 %v3768
      %3846 = vmatpush2.bf16.msra.mxu0 %v3767
      %3847 = vmatprep.mubr.bf16.mxu0 %v3305
      %3848 = vmatmul.mubr.bf16.gmra.mxu0 %v3304
      %v3849 = vpop.f32.mrf.mxu0
      %v3850 = vadd.f32 0.0, %v3849
      %v3851 = vpop.f32.mrf.mxu0
      %v3852 = vadd.f32 0.0, %v3851
      %v3853 = vpop.f32.mrf.mxu0
      %v3854 = vadd.f32 0.0, %v3853
      %v3855 = vpop.f32.mrf.mxu0
      %v3856 = vadd.f32 0.0, %v3855
      %3857 = vmatprep.mubr.bf16.mxu0 %v3307
      %3858 = vmatmul.mubr.bf16.gmra.mxu0 %v3306
      %v3859 = vpop.f32.mrf.mxu0
      %v3860 = vadd.f32 0.0, %v3859
      %v3861 = vpop.f32.mrf.mxu0
      %v3862 = vadd.f32 0.0, %v3861
      %v3863 = vpop.f32.mrf.mxu0
      %v3864 = vadd.f32 0.0, %v3863
      %v3865 = vpop.f32.mrf.mxu0
      %v3866 = vadd.f32 0.0, %v3865
      %3867 = vmatprep.mubr.bf16.mxu0 %v3309
      %3868 = vmatmul.mubr.bf16.gmra.mxu0 %v3308
      %v3869 = vpop.f32.mrf.mxu0
      %v3870 = vadd.f32 0.0, %v3869
      %v3871 = vpop.f32.mrf.mxu0
      %v3872 = vadd.f32 0.0, %v3871
      %v3873 = vpop.f32.mrf.mxu0
      %v3874 = vadd.f32 0.0, %v3873
      %v3875 = vpop.f32.mrf.mxu0
      %v3876 = vadd.f32 0.0, %v3875
      %3877 = vmatprep.mubr.bf16.mxu0 %v3311
      %3878 = vmatmul.mubr.bf16.gmra.mxu0 %v3310
      %v3879 = vpop.f32.mrf.mxu0
      %v3880 = vadd.f32 0.0, %v3879
      %v3881 = vpop.f32.mrf.mxu0
      %v3882 = vadd.f32 0.0, %v3881
      %v3883 = vpop.f32.mrf.mxu0
      %v3884 = vadd.f32 0.0, %v3883
      %v3885 = vpop.f32.mrf.mxu0
      %v3886 = vadd.f32 0.0, %v3885
      %3887 = vmatprep.mubr.bf16.mxu0 %v3313
      %3888 = vmatmul.mubr.bf16.gmra.mxu0 %v3312
      %v3889 = vpop.f32.mrf.mxu0
      %v3890 = vadd.f32 0.0, %v3889
      %v3891 = vpop.f32.mrf.mxu0
      %v3892 = vadd.f32 0.0, %v3891
      %v3893 = vpop.f32.mrf.mxu0
      %v3894 = vadd.f32 0.0, %v3893
      %v3895 = vpop.f32.mrf.mxu0
      %v3896 = vadd.f32 0.0, %v3895
      %3897 = vmatprep.mubr.bf16.mxu0 %v3315
      %3898 = vmatmul.mubr.bf16.gmra.mxu0 %v3314
      %v3899 = vpop.f32.mrf.mxu0
      %v3900 = vadd.f32 0.0, %v3899
      %v3901 = vpop.f32.mrf.mxu0
      %v3902 = vadd.f32 0.0, %v3901
      %v3903 = vpop.f32.mrf.mxu0
      %v3904 = vadd.f32 0.0, %v3903
      %v3905 = vpop.f32.mrf.mxu0
      %v3906 = vadd.f32 0.0, %v3905
      %3907 = vmatprep.mubr.bf16.mxu0 %v3317
      %3908 = vmatmul.mubr.bf16.gmra.mxu0 %v3316
      %v3909 = vpop.f32.mrf.mxu0
      %v3910 = vadd.f32 0.0, %v3909
      %v3911 = vpop.f32.mrf.mxu0
      %v3912 = vadd.f32 0.0, %v3911
      %v3913 = vpop.f32.mrf.mxu0
      %v3914 = vadd.f32 0.0, %v3913
      %v3915 = vpop.f32.mrf.mxu0
      %v3916 = vadd.f32 0.0, %v3915
      %3917 = vmatprep.mubr.bf16.mxu0 %v3319
      %3918 = vmatmul.mubr.bf16.gmra.mxu0 %v3318
      %v3919 = vpop.f32.mrf.mxu0
      %v3920 = vadd.f32 0.0, %v3919
      %v3921 = vpop.f32.mrf.mxu0
      %v3922 = vadd.f32 0.0, %v3921
      %v3923 = vpop.f32.mrf.mxu0
      %v3924 = vadd.f32 0.0, %v3923
      %v3925 = vpop.f32.mrf.mxu0
      %v3926 = vadd.f32 0.0, %v3925
      %3927 = vmatprep.mubr.bf16.mxu0 %v3321
      %3928 = vmatmul.mubr.bf16.gmra.mxu0 %v3320
      %v3929 = vpop.f32.mrf.mxu0
      %v3930 = vadd.f32 0.0, %v3929
      %v3931 = vpop.f32.mrf.mxu0
      %v3932 = vadd.f32 0.0, %v3931
      %v3933 = vpop.f32.mrf.mxu0
      %v3934 = vadd.f32 0.0, %v3933
      %v3935 = vpop.f32.mrf.mxu0
      %v3936 = vadd.f32 0.0, %v3935
      %3937 = vdwg.mxu0
      %v3938 = vld [vmem:[%s2308] sm:$0xff]
      %v3939 = vld [vmem:[%s2308 + $0x8] sm:$0xff]
      %v3940 = vld [vmem:[%s2308 + $0x10] sm:$0xff]
      %v3941 = vld [vmem:[%s2308 + $0x18] sm:$0xff]
      %v3942 = vld [vmem:[%s2308 + $0x20] sm:$0xff]
      %v3943 = vld [vmem:[%s2308 + $0x28] sm:$0xff]
      %v3944 = vld [vmem:[%s2308 + $0x30] sm:$0xff]
      %v3945 = vld [vmem:[%s2308 + $0x38] sm:$0xff]
      %v3946 = vld [vmem:[%s2308 + $0x40] sm:$0xff]
      %v3947 = vld [vmem:[%s2308 + $0x48] sm:$0xff]
      %v3948 = vld [vmem:[%s2308 + $0x50] sm:$0xff]
      %v3949 = vld [vmem:[%s2308 + $0x58] sm:$0xff]
      %v3950 = vld [vmem:[%s2308 + $0x60] sm:$0xff]
      %v3951 = vld [vmem:[%s2308 + $0x68] sm:$0xff]
      %v3952 = vld [vmem:[%s2308 + $0x70] sm:$0xff]
      %v3953 = vld [vmem:[%s2308 + $0x78] sm:$0xff]
      %v3954 = vld [vmem:[%s2308 + $0x80] sm:$0xff]
      %v3955 = vld [vmem:[%s2308 + $0x88] sm:$0xff]
      %v3956 = vld [vmem:[%s2308 + $0x90] sm:$0xff]
      %v3957 = vld [vmem:[%s2308 + $0x98] sm:$0xff]
      %v3958 = vld [vmem:[%s2308 + $0xa0] sm:$0xff]
      %v3959 = vld [vmem:[%s2308 + $0xa8] sm:$0xff]
      %v3960 = vld [vmem:[%s2308 + $0xb0] sm:$0xff]
      %v3961 = vld [vmem:[%s2308 + $0xb8] sm:$0xff]
      %v3962 = vld [vmem:[%s2308 + $0xc0] sm:$0xff]
      %v3963 = vld [vmem:[%s2308 + $0xc8] sm:$0xff]
      %v3964 = vld [vmem:[%s2308 + $0xd0] sm:$0xff]
      %v3965 = vld [vmem:[%s2308 + $0xd8] sm:$0xff]
      %v3966 = vld [vmem:[%s2308 + $0xe0] sm:$0xff]
      %v3967 = vld [vmem:[%s2308 + $0xe8] sm:$0xff]
      %v3968 = vld [vmem:[%s2308 + $0xf0] sm:$0xff]
      %v3969 = vld [vmem:[%s2308 + $0xf8] sm:$0xff]
      %v4002 = vunpack.c.l.b16 %v3938
      %v4003 = vunpack.c.h.b16 %v3938
      %v4004 = vunpack.c.l.b16 %v3939
      %v4005 = vunpack.c.h.b16 %v3939
      %v4006 = vunpack.c.l.b16 %v3940
      %v4007 = vunpack.c.h.b16 %v3940
      %v4008 = vunpack.c.l.b16 %v3941
      %v4009 = vunpack.c.h.b16 %v3941
      %v4010 = vunpack.c.l.b16 %v3942
      %v4011 = vunpack.c.h.b16 %v3942
      %v4012 = vunpack.c.l.b16 %v3943
      %v4013 = vunpack.c.h.b16 %v3943
      %v4014 = vunpack.c.l.b16 %v3944
      %v4015 = vunpack.c.h.b16 %v3944
      %v4016 = vunpack.c.l.b16 %v3945
      %v4017 = vunpack.c.h.b16 %v3945
      %v4018 = vunpack.c.l.b16 %v3946
      %v4019 = vunpack.c.h.b16 %v3946
      %v4020 = vunpack.c.l.b16 %v3947
      %v4021 = vunpack.c.h.b16 %v3947
      %v4022 = vunpack.c.l.b16 %v3948
      %v4023 = vunpack.c.h.b16 %v3948
      %v4024 = vunpack.c.l.b16 %v3949
      %v4025 = vunpack.c.h.b16 %v3949
      %v4026 = vunpack.c.l.b16 %v3950
      %v4027 = vunpack.c.h.b16 %v3950
      %v4028 = vunpack.c.l.b16 %v3951
      %v4029 = vunpack.c.h.b16 %v3951
      %v4030 = vunpack.c.l.b16 %v3952
      %v4031 = vunpack.c.h.b16 %v3952
      %v4032 = vunpack.c.l.b16 %v3953
      %v4033 = vunpack.c.h.b16 %v3953
      %v4034 = vunpack.c.l.b16 %v3954
      %v4035 = vunpack.c.h.b16 %v3954
      %v4036 = vunpack.c.l.b16 %v3955
      %v4037 = vunpack.c.h.b16 %v3955
      %v4038 = vunpack.c.l.b16 %v3956
      %v4039 = vunpack.c.h.b16 %v3956
      %v4040 = vunpack.c.l.b16 %v3957
      %v4041 = vunpack.c.h.b16 %v3957
      %v4042 = vunpack.c.l.b16 %v3958
      %v4043 = vunpack.c.h.b16 %v3958
      %v4044 = vunpack.c.l.b16 %v3959
      %v4045 = vunpack.c.h.b16 %v3959
      %v4046 = vunpack.c.l.b16 %v3960
      %v4047 = vunpack.c.h.b16 %v3960
      %v4048 = vunpack.c.l.b16 %v3961
      %v4049 = vunpack.c.h.b16 %v3961
      %v4050 = vunpack.c.l.b16 %v3962
      %v4051 = vunpack.c.h.b16 %v3962
      %v4052 = vunpack.c.l.b16 %v3963
      %v4053 = vunpack.c.h.b16 %v3963
      %v4054 = vunpack.c.l.b16 %v3964
      %v4055 = vunpack.c.h.b16 %v3964
      %v4056 = vunpack.c.l.b16 %v3965
      %v4057 = vunpack.c.h.b16 %v3965
      %v4058 = vunpack.c.l.b16 %v3966
      %v4059 = vunpack.c.h.b16 %v3966
      %v4060 = vunpack.c.l.b16 %v3967
      %v4061 = vunpack.c.h.b16 %v3967
      %v4062 = vunpack.c.l.b16 %v3968
      %v4063 = vunpack.c.h.b16 %v3968
      %v4064 = vunpack.c.l.b16 %v3969
      %v4065 = vunpack.c.h.b16 %v3969
      %v4066 = vpack.c.b16 %v4004, %v4002
      %v4067 = vpack.c.b16 %v4005, %v4003
      %v4068 = vpack.c.b16 %v4008, %v4006
      %v4069 = vpack.c.b16 %v4009, %v4007
      %v4070 = vpack.c.b16 %v4012, %v4010
      %v4071 = vpack.c.b16 %v4013, %v4011
      %v4072 = vpack.c.b16 %v4016, %v4014
      %v4073 = vpack.c.b16 %v4017, %v4015
      %v4074 = vpack.c.b16 %v4020, %v4018
      %v4075 = vpack.c.b16 %v4021, %v4019
      %v4076 = vpack.c.b16 %v4024, %v4022
      %v4077 = vpack.c.b16 %v4025, %v4023
      %v4078 = vpack.c.b16 %v4028, %v4026
      %v4079 = vpack.c.b16 %v4029, %v4027
      %v4080 = vpack.c.b16 %v4032, %v4030
      %v4081 = vpack.c.b16 %v4033, %v4031
      %v4082 = vpack.c.b16 %v4036, %v4034
      %v4083 = vpack.c.b16 %v4037, %v4035
      %v4084 = vpack.c.b16 %v4040, %v4038
      %v4085 = vpack.c.b16 %v4041, %v4039
      %v4086 = vpack.c.b16 %v4044, %v4042
      %v4087 = vpack.c.b16 %v4045, %v4043
      %v4088 = vpack.c.b16 %v4048, %v4046
      %v4089 = vpack.c.b16 %v4049, %v4047
      %v4090 = vpack.c.b16 %v4052, %v4050
      %v4091 = vpack.c.b16 %v4053, %v4051
      %v4092 = vpack.c.b16 %v4056, %v4054
      %v4093 = vpack.c.b16 %v4057, %v4055
      %v4094 = vpack.c.b16 %v4060, %v4058
      %v4095 = vpack.c.b16 %v4061, %v4059
      %v4096 = vpack.c.b16 %v4064, %v4062
      %v4097 = vpack.c.b16 %v4065, %v4063
      %4130 = vmatprep.subr.bf16.mxu0 %v4081
      %4131 = vmatpush1.bf16.msra.mxu0 %v4080
      %4132 = vmatprep.subr.bf16.mxu0 %v4079
      %4133 = vmatpush1.bf16.msra.mxu0 %v4078
      %4134 = vmatprep.subr.bf16.mxu0 %v4077
      %4135 = vmatpush1.bf16.msra.mxu0 %v4076
      %4136 = vmatprep.subr.bf16.mxu0 %v4075
      %4137 = vmatpush1.bf16.msra.mxu0 %v4074
      %4138 = vmatprep.subr.bf16.mxu0 %v4073
      %4139 = vmatpush1.bf16.msra.mxu0 %v4072
      %4140 = vmatprep.subr.bf16.mxu0 %v4071
      %4141 = vmatpush1.bf16.msra.mxu0 %v4070
      %4142 = vmatprep.subr.bf16.mxu0 %v4069
      %4143 = vmatpush1.bf16.msra.mxu0 %v4068
      %4144 = vmatprep.subr.bf16.mxu0 %v4067
      %4145 = vmatpush1.bf16.msra.mxu0 %v4066
      %4146 = vmatprep.subr.bf16.mxu0 %v4097
      %4147 = vmatpush2.bf16.msra.mxu0 %v4096
      %4148 = vmatprep.subr.bf16.mxu0 %v4095
      %4149 = vmatpush2.bf16.msra.mxu0 %v4094
      %4150 = vmatprep.subr.bf16.mxu0 %v4093
      %4151 = vmatpush2.bf16.msra.mxu0 %v4092
      %4152 = vmatprep.subr.bf16.mxu0 %v4091
      %4153 = vmatpush2.bf16.msra.mxu0 %v4090
      %4154 = vmatprep.subr.bf16.mxu0 %v4089
      %4155 = vmatpush2.bf16.msra.mxu0 %v4088
      %4156 = vmatprep.subr.bf16.mxu0 %v4087
      %4157 = vmatpush2.bf16.msra.mxu0 %v4086
      %4158 = vmatprep.subr.bf16.mxu0 %v4085
      %4159 = vmatpush2.bf16.msra.mxu0 %v4084
      %4160 = vmatprep.subr.bf16.mxu0 %v4083
      %4161 = vmatpush2.bf16.msra.mxu0 %v4082
      %4162 = vmatprep.mubr.bf16.mxu0 %v3305
      %4163 = vmatmul.mubr.bf16.gmra.mxu0 %v3304
      %v4164 = vpop.f32.mrf.mxu0
      %v4165 = vadd.f32 0.0, %v4164
      %v4166 = vpop.f32.mrf.mxu0
      %v4167 = vadd.f32 0.0, %v4166
      %v4168 = vpop.f32.mrf.mxu0
      %v4169 = vadd.f32 0.0, %v4168
      %v4170 = vpop.f32.mrf.mxu0
      %v4171 = vadd.f32 0.0, %v4170
      %4172 = vmatprep.mubr.bf16.mxu0 %v3307
      %4173 = vmatmul.mubr.bf16.gmra.mxu0 %v3306
      %v4174 = vpop.f32.mrf.mxu0
      %v4175 = vadd.f32 0.0, %v4174
      %v4176 = vpop.f32.mrf.mxu0
      %v4177 = vadd.f32 0.0, %v4176
      %v4178 = vpop.f32.mrf.mxu0
      %v4179 = vadd.f32 0.0, %v4178
      %v4180 = vpop.f32.mrf.mxu0
      %v4181 = vadd.f32 0.0, %v4180
      %4182 = vmatprep.mubr.bf16.mxu0 %v3309
      %4183 = vmatmul.mubr.bf16.gmra.mxu0 %v3308
      %v4184 = vpop.f32.mrf.mxu0
      %v4185 = vadd.f32 0.0, %v4184
      %v4186 = vpop.f32.mrf.mxu0
      %v4187 = vadd.f32 0.0, %v4186
      %v4188 = vpop.f32.mrf.mxu0
      %v4189 = vadd.f32 0.0, %v4188
      %v4190 = vpop.f32.mrf.mxu0
      %v4191 = vadd.f32 0.0, %v4190
      %4192 = vmatprep.mubr.bf16.mxu0 %v3311
      %4193 = vmatmul.mubr.bf16.gmra.mxu0 %v3310
      %v4194 = vpop.f32.mrf.mxu0
      %v4195 = vadd.f32 0.0, %v4194
      %v4196 = vpop.f32.mrf.mxu0
      %v4197 = vadd.f32 0.0, %v4196
      %v4198 = vpop.f32.mrf.mxu0
      %v4199 = vadd.f32 0.0, %v4198
      %v4200 = vpop.f32.mrf.mxu0
      %v4201 = vadd.f32 0.0, %v4200
      %4202 = vmatprep.mubr.bf16.mxu0 %v3313
      %4203 = vmatmul.mubr.bf16.gmra.mxu0 %v3312
      %v4204 = vpop.f32.mrf.mxu0
      %v4205 = vadd.f32 0.0, %v4204
      %v4206 = vpop.f32.mrf.mxu0
      %v4207 = vadd.f32 0.0, %v4206
      %v4208 = vpop.f32.mrf.mxu0
      %v4209 = vadd.f32 0.0, %v4208
      %v4210 = vpop.f32.mrf.mxu0
      %v4211 = vadd.f32 0.0, %v4210
      %4212 = vmatprep.mubr.bf16.mxu0 %v3315
      %4213 = vmatmul.mubr.bf16.gmra.mxu0 %v3314
      %v4214 = vpop.f32.mrf.mxu0
      %v4215 = vadd.f32 0.0, %v4214
      %v4216 = vpop.f32.mrf.mxu0
      %v4217 = vadd.f32 0.0, %v4216
      %v4218 = vpop.f32.mrf.mxu0
      %v4219 = vadd.f32 0.0, %v4218
      %v4220 = vpop.f32.mrf.mxu0
      %v4221 = vadd.f32 0.0, %v4220
      %4222 = vmatprep.mubr.bf16.mxu0 %v3317
      %4223 = vmatmul.mubr.bf16.gmra.mxu0 %v3316
      %v4224 = vpop.f32.mrf.mxu0
      %v4225 = vadd.f32 0.0, %v4224
      %v4226 = vpop.f32.mrf.mxu0
      %v4227 = vadd.f32 0.0, %v4226
      %v4228 = vpop.f32.mrf.mxu0
      %v4229 = vadd.f32 0.0, %v4228
      %v4230 = vpop.f32.mrf.mxu0
      %v4231 = vadd.f32 0.0, %v4230
      %4232 = vmatprep.mubr.bf16.mxu0 %v3319
      %4233 = vmatmul.mubr.bf16.gmra.mxu0 %v3318
      %v4234 = vpop.f32.mrf.mxu0
      %v4235 = vadd.f32 0.0, %v4234
      %v4236 = vpop.f32.mrf.mxu0
      %v4237 = vadd.f32 0.0, %v4236
      %v4238 = vpop.f32.mrf.mxu0
      %v4239 = vadd.f32 0.0, %v4238
      %v4240 = vpop.f32.mrf.mxu0
      %v4241 = vadd.f32 0.0, %v4240
      %4242 = vmatprep.mubr.bf16.mxu0 %v3321
      %4243 = vmatmul.mubr.bf16.gmra.mxu0 %v3320
      %v4244 = vpop.f32.mrf.mxu0
      %v4245 = vadd.f32 0.0, %v4244
      %v4246 = vpop.f32.mrf.mxu0
      %v4247 = vadd.f32 0.0, %v4246
      %v4248 = vpop.f32.mrf.mxu0
      %v4249 = vadd.f32 0.0, %v4248
      %v4250 = vpop.f32.mrf.mxu0
      %v4251 = vadd.f32 0.0, %v4250
      %4252 = vdwg.mxu0
      %v4253 = vrot.slane %v3535, 7
      %v4254 = vrot.slane %v3537, 7
      %v4255 = vrot.slane %v3539, 7
      %v4256 = vrot.slane %v3541, 7
      %v4257 = vrot.slane %v3545, 7
      %v4258 = vrot.slane %v3547, 7
      %v4259 = vrot.slane %v3549, 7
      %v4260 = vrot.slane %v3551, 7
      %v4261 = vrot.slane %v3555, 7
      %v4262 = vrot.slane %v3557, 7
      %v4263 = vrot.slane %v3559, 7
      %v4264 = vrot.slane %v3561, 7
      %v4265 = vrot.slane %v3565, 7
      %v4266 = vrot.slane %v3567, 7
      %v4267 = vrot.slane %v3569, 7
      %v4268 = vrot.slane %v3571, 7
      %v4269 = vrot.slane %v3575, 7
      %v4270 = vrot.slane %v3577, 7
      %v4271 = vrot.slane %v3579, 7
      %v4272 = vrot.slane %v3581, 7
      %v4273 = vrot.slane %v3585, 7
      %v4274 = vrot.slane %v3587, 7
      %v4275 = vrot.slane %v3589, 7
      %v4276 = vrot.slane %v3591, 7
      %v4277 = vrot.slane %v3595, 7
      %v4278 = vrot.slane %v3597, 7
      %v4279 = vrot.slane %v3599, 7
      %v4280 = vrot.slane %v3601, 7
      %v4281 = vrot.slane %v3605, 7
      %v4282 = vrot.slane %v3607, 7
      %v4283 = vrot.slane %v3609, 7
      %v4284 = vrot.slane %v3611, 7
      %v4285 = vrot.slane %v3615, 7
      %v4286 = vrot.slane %v3617, 7
      %v4287 = vrot.slane %v3619, 7
      %v4288 = vrot.slane %v3621, 7
      %v4289 = vsel %vm1015, %v4285, %v4287
      %v4290 = vsel %vm1015, %v4286, %v4288
      %v4291 = vsel %vm1015, %v4283, %v4285
      %v4292 = vsel %vm1015, %v4284, %v4286
      %v4293 = vsel %vm1015, %v4281, %v4283
      %v4294 = vsel %vm1015, %v4282, %v4284
      %v4295 = vsel %vm1015, %v4279, %v4281
      %v4296 = vsel %vm1015, %v4280, %v4282
      %v4297 = vsel %vm1015, %v4277, %v4279
      %v4298 = vsel %vm1015, %v4278, %v4280
      %v4299 = vsel %vm1015, %v4275, %v4277
      %v4300 = vsel %vm1015, %v4276, %v4278
      %v4301 = vsel %vm1015, %v4273, %v4275
      %v4302 = vsel %vm1015, %v4274, %v4276
      %v4303 = vsel %vm1015, %v4271, %v4273
      %v4304 = vsel %vm1015, %v4272, %v4274
      %v4305 = vsel %vm1015, %v4269, %v4271
      %v4306 = vsel %vm1015, %v4270, %v4272
      %v4307 = vsel %vm1015, %v4267, %v4269
      %v4308 = vsel %vm1015, %v4268, %v4270
      %v4309 = vsel %vm1015, %v4265, %v4267
      %v4310 = vsel %vm1015, %v4266, %v4268
      %v4311 = vsel %vm1015, %v4263, %v4265
      %v4312 = vsel %vm1015, %v4264, %v4266
      %v4313 = vsel %vm1015, %v4261, %v4263
      %v4314 = vsel %vm1015, %v4262, %v4264
      %v4315 = vsel %vm1015, %v4259, %v4261
      %v4316 = vsel %vm1015, %v4260, %v4262
      %v4317 = vsel %vm1015, %v4257, %v4259
      %v4318 = vsel %vm1015, %v4258, %v4260
      %v4319 = vsel %vm1015, %v4255, %v4257
      %v4320 = vsel %vm1015, %v4256, %v4258
      %v4321 = vsel %vm1015, %v4253, %v4255
      %v4322 = vsel %vm1015, %v4254, %v4256
      %v4323 = vsel %vm1015, %v4287, %v4253
      %v4324 = vsel %vm1015, %v4288, %v4254
      %v4325 = vadd.f32 %v4323, %v3850
      %v4326 = vadd.f32 %v4324, %v3852
      %v4327 = vadd.f32 %v4321, %v3854
      %v4328 = vadd.f32 %v4322, %v3856
      %v4329 = vadd.f32 %v4319, %v3860
      %v4330 = vadd.f32 %v4320, %v3862
      %v4331 = vadd.f32 %v4317, %v3864
      %v4332 = vadd.f32 %v4318, %v3866
      %v4333 = vadd.f32 %v4315, %v3870
      %v4334 = vadd.f32 %v4316, %v3872
      %v4335 = vadd.f32 %v4313, %v3874
      %v4336 = vadd.f32 %v4314, %v3876
      %v4337 = vadd.f32 %v4311, %v3880
      %v4338 = vadd.f32 %v4312, %v3882
      %v4339 = vadd.f32 %v4309, %v3884
      %v4340 = vadd.f32 %v4310, %v3886
      %v4341 = vadd.f32 %v4307, %v3890
      %v4342 = vadd.f32 %v4308, %v3892
      %v4343 = vadd.f32 %v4305, %v3894
      %v4344 = vadd.f32 %v4306, %v3896
      %v4345 = vadd.f32 %v4303, %v3900
      %v4346 = vadd.f32 %v4304, %v3902
      %v4347 = vadd.f32 %v4301, %v3904
      %v4348 = vadd.f32 %v4302, %v3906
      %v4349 = vadd.f32 %v4299, %v3910
      %v4350 = vadd.f32 %v4300, %v3912
      %v4351 = vadd.f32 %v4297, %v3914
      %v4352 = vadd.f32 %v4298, %v3916
      %v4353 = vadd.f32 %v4295, %v3920
      %v4354 = vadd.f32 %v4296, %v3922
      %v4355 = vadd.f32 %v4293, %v3924
      %v4356 = vadd.f32 %v4294, %v3926
      %v4357 = vadd.f32 %v4291, %v3930
      %v4358 = vadd.f32 %v4292, %v3932
      %v4359 = vadd.f32 %v4289, %v3934
      %v4360 = vadd.f32 %v4290, %v3936
      %v4361 = vrot.slane %v4165, 1
      %v4362 = vrot.slane %v4167, 1
      %v4363 = vrot.slane %v4169, 1
      %v4364 = vrot.slane %v4171, 1
      %v4365 = vrot.slane %v4175, 1
      %v4366 = vrot.slane %v4177, 1
      %v4367 = vrot.slane %v4179, 1
      %v4368 = vrot.slane %v4181, 1
      %v4369 = vrot.slane %v4185, 1
      %v4370 = vrot.slane %v4187, 1
      %v4371 = vrot.slane %v4189, 1
      %v4372 = vrot.slane %v4191, 1
      %v4373 = vrot.slane %v4195, 1
      %v4374 = vrot.slane %v4197, 1
      %v4375 = vrot.slane %v4199, 1
      %v4376 = vrot.slane %v4201, 1
      %v4377 = vrot.slane %v4205, 1
      %v4378 = vrot.slane %v4207, 1
      %v4379 = vrot.slane %v4209, 1
      %v4380 = vrot.slane %v4211, 1
      %v4381 = vrot.slane %v4215, 1
      %v4382 = vrot.slane %v4217, 1
      %v4383 = vrot.slane %v4219, 1
      %v4384 = vrot.slane %v4221, 1
      %v4385 = vrot.slane %v4225, 1
      %v4386 = vrot.slane %v4227, 1
      %v4387 = vrot.slane %v4229, 1
      %v4388 = vrot.slane %v4231, 1
      %v4389 = vrot.slane %v4235, 1
      %v4390 = vrot.slane %v4237, 1
      %v4391 = vrot.slane %v4239, 1
      %v4392 = vrot.slane %v4241, 1
      %v4393 = vrot.slane %v4245, 1
      %v4394 = vrot.slane %v4247, 1
      %v4395 = vrot.slane %v4249, 1
      %v4396 = vrot.slane %v4251, 1
      %v4397 = vsel %vm1124, %v4393, %v4395
      %v4398 = vsel %vm1124, %v4394, %v4396
      %v4399 = vsel %vm1124, %v4391, %v4393
      %v4400 = vsel %vm1124, %v4392, %v4394
      %v4401 = vsel %vm1124, %v4389, %v4391
      %v4402 = vsel %vm1124, %v4390, %v4392
      %v4403 = vsel %vm1124, %v4387, %v4389
      %v4404 = vsel %vm1124, %v4388, %v4390
      %v4405 = vsel %vm1124, %v4385, %v4387
      %v4406 = vsel %vm1124, %v4386, %v4388
      %v4407 = vsel %vm1124, %v4383, %v4385
      %v4408 = vsel %vm1124, %v4384, %v4386
      %v4409 = vsel %vm1124, %v4381, %v4383
      %v4410 = vsel %vm1124, %v4382, %v4384
      %v4411 = vsel %vm1124, %v4379, %v4381
      %v4412 = vsel %vm1124, %v4380, %v4382
      %v4413 = vsel %vm1124, %v4377, %v4379
      %v4414 = vsel %vm1124, %v4378, %v4380
      %v4415 = vsel %vm1124, %v4375, %v4377
      %v4416 = vsel %vm1124, %v4376, %v4378
      %v4417 = vsel %vm1124, %v4373, %v4375
      %v4418 = vsel %vm1124, %v4374, %v4376
      %v4419 = vsel %vm1124, %v4371, %v4373
      %v4420 = vsel %vm1124, %v4372, %v4374
      %v4421 = vsel %vm1124, %v4369, %v4371
      %v4422 = vsel %vm1124, %v4370, %v4372
      %v4423 = vsel %vm1124, %v4367, %v4369
      %v4424 = vsel %vm1124, %v4368, %v4370
      %v4425 = vsel %vm1124, %v4365, %v4367
      %v4426 = vsel %vm1124, %v4366, %v4368
      %v4427 = vsel %vm1124, %v4363, %v4365
      %v4428 = vsel %vm1124, %v4364, %v4366
      %v4429 = vsel %vm1124, %v4361, %v4363
      %v4430 = vsel %vm1124, %v4362, %v4364
      %v4431 = vsel %vm1124, %v4395, %v4361
      %v4432 = vsel %vm1124, %v4396, %v4362
      %v4433 = vadd.f32 %v4325, %v4429
      %v4434 = vadd.f32 %v4326, %v4430
      %v4435 = vadd.f32 %v4327, %v4427
      %v4436 = vadd.f32 %v4328, %v4428
      %v4437 = vadd.f32 %v4329, %v4425
      %v4438 = vadd.f32 %v4330, %v4426
      %v4439 = vadd.f32 %v4331, %v4423
      %v4440 = vadd.f32 %v4332, %v4424
      %v4441 = vadd.f32 %v4333, %v4421
      %v4442 = vadd.f32 %v4334, %v4422
      %v4443 = vadd.f32 %v4335, %v4419
      %v4444 = vadd.f32 %v4336, %v4420
      %v4445 = vadd.f32 %v4337, %v4417
      %v4446 = vadd.f32 %v4338, %v4418
      %v4447 = vadd.f32 %v4339, %v4415
      %v4448 = vadd.f32 %v4340, %v4416
      %v4449 = vadd.f32 %v4341, %v4413
      %v4450 = vadd.f32 %v4342, %v4414
      %v4451 = vadd.f32 %v4343, %v4411
      %v4452 = vadd.f32 %v4344, %v4412
      %v4453 = vadd.f32 %v4345, %v4409
      %v4454 = vadd.f32 %v4346, %v4410
      %v4455 = vadd.f32 %v4347, %v4407
      %v4456 = vadd.f32 %v4348, %v4408
      %v4457 = vadd.f32 %v4349, %v4405
      %v4458 = vadd.f32 %v4350, %v4406
      %v4459 = vadd.f32 %v4351, %v4403
      %v4460 = vadd.f32 %v4352, %v4404
      %v4461 = vadd.f32 %v4353, %v4401
      %v4462 = vadd.f32 %v4354, %v4402
      %v4463 = vadd.f32 %v4355, %v4399
      %v4464 = vadd.f32 %v4356, %v4400
      %v4465 = vadd.f32 %v4357, %v4397
      %v4466 = vadd.f32 %v4358, %v4398
      %v4467 = vadd.f32 %v4359, %v4431
      %v4468 = vadd.f32 %v4360, %v4432
      %v4469 = vld [vmem:[#allocation3] sm:$0xff]
      %v4470 = vld [vmem:[#allocation3 + $0x8] sm:$0xff]
      %v4471 = vld [vmem:[#allocation3 + $0x10] sm:$0xff]
      %v4472 = vld [vmem:[#allocation3 + $0x18] sm:$0xff]
      %v4473 = vld [vmem:[#allocation3 + $0x20] sm:$0xff]
      %v4474 = vld [vmem:[#allocation3 + $0x28] sm:$0xff]
      %v4475 = vld [vmem:[#allocation3 + $0x30] sm:$0xff]
      %v4476 = vld [vmem:[#allocation3 + $0x38] sm:$0xff]
      %v4477 = vld [vmem:[#allocation3 + $0x40] sm:$0xff]
      %v4478 = vld [vmem:[#allocation3 + $0x48] sm:$0xff]
      %v4479 = vld [vmem:[#allocation3 + $0x50] sm:$0xff]
      %v4480 = vld [vmem:[#allocation3 + $0x58] sm:$0xff]
      %v4481 = vld [vmem:[#allocation3 + $0x60] sm:$0xff]
      %v4482 = vld [vmem:[#allocation3 + $0x68] sm:$0xff]
      %v4483 = vld [vmem:[#allocation3 + $0x70] sm:$0xff]
      %v4484 = vld [vmem:[#allocation3 + $0x78] sm:$0xff]
      %v4485 = vld [vmem:[#allocation3 + $0x80] sm:$0xff]
      %v4486 = vld [vmem:[#allocation3 + $0x88] sm:$0xff]
      %v4487 = vld [vmem:[#allocation3 + $0x90] sm:$0xff]
      %v4488 = vld [vmem:[#allocation3 + $0x98] sm:$0xff]
      %v4489 = vld [vmem:[#allocation3 + $0xa0] sm:$0xff]
      %v4490 = vld [vmem:[#allocation3 + $0xa8] sm:$0xff]
      %v4491 = vld [vmem:[#allocation3 + $0xb0] sm:$0xff]
      %v4492 = vld [vmem:[#allocation3 + $0xb8] sm:$0xff]
      %v4493 = vld [vmem:[#allocation3 + $0xc0] sm:$0xff]
      %v4494 = vld [vmem:[#allocation3 + $0xc8] sm:$0xff]
      %v4495 = vld [vmem:[#allocation3 + $0xd0] sm:$0xff]
      %v4496 = vld [vmem:[#allocation3 + $0xd8] sm:$0xff]
      %v4497 = vld [vmem:[#allocation3 + $0xe0] sm:$0xff]
      %v4498 = vld [vmem:[#allocation3 + $0xe8] sm:$0xff]
      %v4499 = vld [vmem:[#allocation3 + $0xf0] sm:$0xff]
      %v4500 = vld [vmem:[#allocation3 + $0xf8] sm:$0xff]
      %v4501 = vld [vmem:[#allocation3 + $0x100] sm:$0xff]
      %v4502 = vld [vmem:[#allocation3 + $0x108] sm:$0xff]
      %v4503 = vld [vmem:[#allocation3 + $0x110] sm:$0xff]
      %v4504 = vld [vmem:[#allocation3 + $0x118] sm:$0xff]
      %v4505 = vadd.f32 %v4433, %v4469
      %v4506 = vadd.f32 %v4434, %v4470
      %v4507 = vadd.f32 %v4435, %v4471
      %v4508 = vadd.f32 %v4436, %v4472
      %v4509 = vadd.f32 %v4437, %v4473
      %v4510 = vadd.f32 %v4438, %v4474
      %v4511 = vadd.f32 %v4439, %v4475
      %v4512 = vadd.f32 %v4440, %v4476
      %v4513 = vadd.f32 %v4441, %v4477
      %v4514 = vadd.f32 %v4442, %v4478
      %v4515 = vadd.f32 %v4443, %v4479
      %v4516 = vadd.f32 %v4444, %v4480
      %v4517 = vadd.f32 %v4445, %v4481
      %v4518 = vadd.f32 %v4446, %v4482
      %v4519 = vadd.f32 %v4447, %v4483
      %v4520 = vadd.f32 %v4448, %v4484
      %v4521 = vadd.f32 %v4449, %v4485
      %v4522 = vadd.f32 %v4450, %v4486
      %v4523 = vadd.f32 %v4451, %v4487
      %v4524 = vadd.f32 %v4452, %v4488
      %v4525 = vadd.f32 %v4453, %v4489
      %v4526 = vadd.f32 %v4454, %v4490
      %v4527 = vadd.f32 %v4455, %v4491
      %v4528 = vadd.f32 %v4456, %v4492
      %v4529 = vadd.f32 %v4457, %v4493
      %v4530 = vadd.f32 %v4458, %v4494
      %v4531 = vadd.f32 %v4459, %v4495
      %v4532 = vadd.f32 %v4460, %v4496
      %v4533 = vadd.f32 %v4461, %v4497
      %v4534 = vadd.f32 %v4462, %v4498
      %v4535 = vadd.f32 %v4463, %v4499
      %v4536 = vadd.f32 %v4464, %v4500
      %v4537 = vadd.f32 %v4465, %v4501
      %v4538 = vadd.f32 %v4466, %v4502
      %v4539 = vadd.f32 %v4467, %v4503
      %v4540 = vadd.f32 %v4468, %v4504
      %v4541 = vtanh.pop %v4505
      %v4542 = vtanh.pop %v4506
      %v4543 = vtanh.pop %v4507
      %v4544 = vtanh.pop %v4508
      %v4545 = vtanh.pop %v4509
      %v4546 = vtanh.pop %v4510
      %v4547 = vtanh.pop %v4511
      %v4548 = vtanh.pop %v4512
      %v4549 = vtanh.pop %v4513
      %v4550 = vtanh.pop %v4514
      %v4551 = vtanh.pop %v4515
      %v4552 = vtanh.pop %v4516
      %v4553 = vtanh.pop %v4517
      %v4554 = vtanh.pop %v4518
      %v4555 = vtanh.pop %v4519
      %v4556 = vtanh.pop %v4520
      %v4557 = vtanh.pop %v4521
      %v4558 = vtanh.pop %v4522
      %v4559 = vtanh.pop %v4523
      %v4560 = vtanh.pop %v4524
      %v4561 = vtanh.pop %v4525
      %v4562 = vtanh.pop %v4526
      %v4563 = vtanh.pop %v4527
      %v4564 = vtanh.pop %v4528
      %v4565 = vtanh.pop %v4529
      %v4566 = vtanh.pop %v4530
      %v4567 = vtanh.pop %v4531
      %v4568 = vtanh.pop %v4532
      %v4569 = vtanh.pop %v4533
      %v4570 = vtanh.pop %v4534
      %v4571 = vtanh.pop %v4535
      %v4572 = vtanh.pop %v4536
      %v4573 = vtanh.pop %v4537
      %v4574 = vtanh.pop %v4538
      %v4575 = vtanh.pop %v4539
      %v4576 = vtanh.pop %v4540
      %v4577 = vpack.c.bf16 %v4543, %v4541
      %v4578 = vpack.c.bf16 %v4544, %v4542
      %v4579 = vpack.c.bf16 %v4547, %v4545
      %v4580 = vpack.c.bf16 %v4548, %v4546
      %v4581 = vpack.c.bf16 %v4551, %v4549
      %v4582 = vpack.c.bf16 %v4552, %v4550
      %v4583 = vpack.c.bf16 %v4555, %v4553
      %v4584 = vpack.c.bf16 %v4556, %v4554
      %v4585 = vpack.c.bf16 %v4559, %v4557
      %v4586 = vpack.c.bf16 %v4560, %v4558
      %v4587 = vpack.c.bf16 %v4563, %v4561
      %v4588 = vpack.c.bf16 %v4564, %v4562
      %v4589 = vpack.c.bf16 %v4567, %v4565
      %v4590 = vpack.c.bf16 %v4568, %v4566
      %v4591 = vpack.c.bf16 %v4571, %v4569
      %v4592 = vpack.c.bf16 %v4572, %v4570
      %v4593 = vpack.c.bf16 %v4575, %v4573
      %v4594 = vpack.c.bf16 %v4576, %v4574
      %v4595 = vld [vmem:[%s0] sm:$0xff]
      %v4596 = vld [vmem:[%s0 + $0x8] sm:$0xff]
      %v4597 = vld [vmem:[%s0 + $0x10] sm:$0xff]
      %v4598 = vld [vmem:[%s0 + $0x18] sm:$0xff]
      %v4599 = vld [vmem:[%s0 + $0x20] sm:$0xff]
      %v4600 = vld [vmem:[%s0 + $0x28] sm:$0xff]
      %v4601 = vld [vmem:[%s0 + $0x30] sm:$0xff]
      %v4602 = vld [vmem:[%s0 + $0x38] sm:$0xff]
      %v4603 = vld [vmem:[%s0 + $0x40] sm:$0xff]
      %v4604 = vld [vmem:[%s0 + $0x48] sm:$0xff]
      %v4605 = vld [vmem:[%s0 + $0x50] sm:$0xff]
      %v4606 = vld [vmem:[%s0 + $0x58] sm:$0xff]
      %v4607 = vld [vmem:[%s0 + $0x60] sm:$0xff]
      %v4608 = vld [vmem:[%s0 + $0x68] sm:$0xff]
      %v4609 = vld [vmem:[%s0 + $0x70] sm:$0xff]
      %v4610 = vld [vmem:[%s0 + $0x78] sm:$0xff]
      %v4611 = vld [vmem:[%s0 + $0x80] sm:$0xff]
      %v4612 = vld [vmem:[%s0 + $0x88] sm:$0xff]
      %v4631 = vunpack.c.l.b16 %v4595
      %v4632 = vunpack.c.h.b16 %v4595
      %v4633 = vunpack.c.l.b16 %v4596
      %v4634 = vunpack.c.h.b16 %v4596
      %v4635 = vunpack.c.l.b16 %v4597
      %v4636 = vunpack.c.h.b16 %v4597
      %v4637 = vunpack.c.l.b16 %v4598
      %v4638 = vunpack.c.h.b16 %v4598
      %v4639 = vunpack.c.l.b16 %v4599
      %v4640 = vunpack.c.h.b16 %v4599
      %v4641 = vunpack.c.l.b16 %v4600
      %v4642 = vunpack.c.h.b16 %v4600
      %v4643 = vunpack.c.l.b16 %v4601
      %v4644 = vunpack.c.h.b16 %v4601
      %v4645 = vunpack.c.l.b16 %v4602
      %v4646 = vunpack.c.h.b16 %v4602
      %v4647 = vunpack.c.l.b16 %v4603
      %v4648 = vunpack.c.h.b16 %v4603
      %v4649 = vunpack.c.l.b16 %v4604
      %v4650 = vunpack.c.h.b16 %v4604
      %v4651 = vunpack.c.l.b16 %v4605
      %v4652 = vunpack.c.h.b16 %v4605
      %v4653 = vunpack.c.l.b16 %v4606
      %v4654 = vunpack.c.h.b16 %v4606
      %v4655 = vunpack.c.l.b16 %v4607
      %v4656 = vunpack.c.h.b16 %v4607
      %v4657 = vunpack.c.l.b16 %v4608
      %v4658 = vunpack.c.h.b16 %v4608
      %v4659 = vunpack.c.l.b16 %v4609
      %v4660 = vunpack.c.h.b16 %v4609
      %v4661 = vunpack.c.l.b16 %v4610
      %v4662 = vunpack.c.h.b16 %v4610
      %v4663 = vunpack.c.l.b16 %v4611
      %v4664 = vunpack.c.h.b16 %v4611
      %v4665 = vunpack.c.l.b16 %v4612
      %v4666 = vunpack.c.h.b16 %v4612
      %v4667 = vpack.c.b16 %v4633, %v4631
      %v4668 = vpack.c.b16 %v4634, %v4632
      %v4669 = vpack.c.b16 %v4637, %v4635
      %v4670 = vpack.c.b16 %v4638, %v4636
      %v4671 = vpack.c.b16 %v4641, %v4639
      %v4672 = vpack.c.b16 %v4642, %v4640
      %v4673 = vpack.c.b16 %v4645, %v4643
      %v4674 = vpack.c.b16 %v4646, %v4644
      %v4675 = vpack.c.b16 %v4649, %v4647
      %v4676 = vpack.c.b16 %v4650, %v4648
      %v4677 = vpack.c.b16 %v4653, %v4651
      %v4678 = vpack.c.b16 %v4654, %v4652
      %v4679 = vpack.c.b16 %v4657, %v4655
      %v4680 = vpack.c.b16 %v4658, %v4656
      %v4681 = vpack.c.b16 %v4661, %v4659
      %v4682 = vpack.c.b16 %v4662, %v4660
      %v4683 = vpack.c.b16 %v4665, %v4663
      %v4684 = vpack.c.b16 %v4666, %v4664
      %v4703 = vmul.bf16 %v4577, %v4667
      %v4704 = vmul.bf16 %v4578, %v4668
      %v4705 = vmul.bf16 %v4579, %v4669
      %v4706 = vmul.bf16 %v4580, %v4670
      %v4707 = vmul.bf16 %v4581, %v4671
      %v4708 = vmul.bf16 %v4582, %v4672
      %v4709 = vmul.bf16 %v4583, %v4673
      %v4710 = vmul.bf16 %v4584, %v4674
      %v4711 = vmul.bf16 %v4585, %v4675
      %v4712 = vmul.bf16 %v4586, %v4676
      %v4713 = vmul.bf16 %v4587, %v4677
      %v4714 = vmul.bf16 %v4588, %v4678
      %v4715 = vmul.bf16 %v4589, %v4679
      %v4716 = vmul.bf16 %v4590, %v4680
      %v4717 = vmul.bf16 %v4591, %v4681
      %v4718 = vmul.bf16 %v4592, %v4682
      %v4719 = vmul.bf16 %v4593, %v4683
      %v4720 = vmul.bf16 %v4594, %v4684
      %v4739 = vunpack.c.l.b16 %v4703
      %v4740 = vunpack.c.l.b16 %v4704
      %v4741 = vunpack.c.h.b16 %v4703
      %v4742 = vunpack.c.h.b16 %v4704
      %v4743 = vunpack.c.l.b16 %v4705
      %v4744 = vunpack.c.l.b16 %v4706
      %v4745 = vunpack.c.h.b16 %v4705
      %v4746 = vunpack.c.h.b16 %v4706
      %v4747 = vunpack.c.l.b16 %v4707
      %v4748 = vunpack.c.l.b16 %v4708
      %v4749 = vunpack.c.h.b16 %v4707
      %v4750 = vunpack.c.h.b16 %v4708
      %v4751 = vunpack.c.l.b16 %v4709
      %v4752 = vunpack.c.l.b16 %v4710
      %v4753 = vunpack.c.h.b16 %v4709
      %v4754 = vunpack.c.h.b16 %v4710
      %v4755 = vunpack.c.l.b16 %v4711
      %v4756 = vunpack.c.l.b16 %v4712
      %v4757 = vunpack.c.h.b16 %v4711
      %v4758 = vunpack.c.h.b16 %v4712
      %v4759 = vunpack.c.l.b16 %v4713
      %v4760 = vunpack.c.l.b16 %v4714
      %v4761 = vunpack.c.h.b16 %v4713
      %v4762 = vunpack.c.h.b16 %v4714
      %v4763 = vunpack.c.l.b16 %v4715
      %v4764 = vunpack.c.l.b16 %v4716
      %v4765 = vunpack.c.h.b16 %v4715
      %v4766 = vunpack.c.h.b16 %v4716
      %v4767 = vunpack.c.l.b16 %v4717
      %v4768 = vunpack.c.l.b16 %v4718
      %v4769 = vunpack.c.h.b16 %v4717
      %v4770 = vunpack.c.h.b16 %v4718
      %v4771 = vunpack.c.l.b16 %v4719
      %v4772 = vunpack.c.l.b16 %v4720
      %v4773 = vunpack.c.h.b16 %v4719
      %v4774 = vunpack.c.h.b16 %v4720
      %v4775 = vpack.c.b16 %v4740, %v4739
      %v4776 = vpack.c.b16 %v4742, %v4741
      %v4777 = vpack.c.b16 %v4744, %v4743
      %v4778 = vpack.c.b16 %v4746, %v4745
      %v4779 = vpack.c.b16 %v4748, %v4747
      %v4780 = vpack.c.b16 %v4750, %v4749
      %v4781 = vpack.c.b16 %v4752, %v4751
      %v4782 = vpack.c.b16 %v4754, %v4753
      %v4783 = vpack.c.b16 %v4756, %v4755
      %v4784 = vpack.c.b16 %v4758, %v4757
      %v4785 = vpack.c.b16 %v4760, %v4759
      %v4786 = vpack.c.b16 %v4762, %v4761
      %v4787 = vpack.c.b16 %v4764, %v4763
      %v4788 = vpack.c.b16 %v4766, %v4765
      %v4789 = vpack.c.b16 %v4768, %v4767
      %v4790 = vpack.c.b16 %v4770, %v4769
      %v4791 = vpack.c.b16 %v4772, %v4771
      %v4792 = vpack.c.b16 %v4774, %v4773
      %4811 = vst [vmem:[#allocation2] sm:$0xff] %v4775
      %4812 = vst [vmem:[#allocation2 + $0x8] sm:$0xff] %v4776
      %4813 = vst [vmem:[#allocation2 + $0x10] sm:$0xff] %v4777
      %4814 = vst [vmem:[#allocation2 + $0x18] sm:$0xff] %v4778
      %4815 = vst [vmem:[#allocation2 + $0x20] sm:$0xff] %v4779
      %4816 = vst [vmem:[#allocation2 + $0x28] sm:$0xff] %v4780
      %4817 = vst [vmem:[#allocation2 + $0x30] sm:$0xff] %v4781
      %4818 = vst [vmem:[#allocation2 + $0x38] sm:$0xff] %v4782
      %4819 = vst [vmem:[#allocation2 + $0x40] sm:$0xff] %v4783
      %4820 = vst [vmem:[#allocation2 + $0x48] sm:$0xff] %v4784
      %4821 = vst [vmem:[#allocation2 + $0x50] sm:$0xff] %v4785
      %4822 = vst [vmem:[#allocation2 + $0x58] sm:$0xff] %v4786
      %4823 = vst [vmem:[#allocation2 + $0x60] sm:$0xff] %v4787
      %4824 = vst [vmem:[#allocation2 + $0x68] sm:$0xff] %v4788
      %4825 = vst [vmem:[#allocation2 + $0x70] sm:$0xff] %v4789
      %4826 = vst [vmem:[#allocation2 + $0x78] sm:$0xff] %v4790
      %4827 = vst [vmem:[#allocation2 + $0x80] sm:$0xff] %v4791
      %4828 = vst [vmem:[#allocation2 + $0x88] sm:$0xff] %v4792
      %v4829 = vld [vmem:[#allocation2] sm:$0xff]
      %v4830 = vld [vmem:[#allocation2 + $0x8] sm:$0xff]
      %v4831 = vld [vmem:[#allocation2 + $0x10] sm:$0xff]
      %v4832 = vld [vmem:[#allocation2 + $0x18] sm:$0xff]
      %v4833 = vld [vmem:[#allocation2 + $0x20] sm:$0xff]
      %v4834 = vld [vmem:[#allocation2 + $0x28] sm:$0xff]
      %v4835 = vld [vmem:[#allocation2 + $0x30] sm:$0xff]
      %v4836 = vld [vmem:[#allocation2 + $0x38] sm:$0xff]
      %v4837 = vld [vmem:[#allocation2 + $0x40] sm:$0xff]
      %v4838 = vld [vmem:[#allocation2 + $0x48] sm:$0xff]
      %v4839 = vld [vmem:[#allocation2 + $0x50] sm:$0xff]
      %v4840 = vld [vmem:[#allocation2 + $0x58] sm:$0xff]
      %v4841 = vld [vmem:[#allocation2 + $0x60] sm:$0xff]
      %v4842 = vld [vmem:[#allocation2 + $0x68] sm:$0xff]
      %v4843 = vld [vmem:[#allocation2 + $0x70] sm:$0xff]
      %v4844 = vld [vmem:[#allocation2 + $0x78] sm:$0xff]
      %v4845 = vld [vmem:[#allocation2 + $0x80] sm:$0xff]
      %v4846 = vld [vmem:[#allocation2 + $0x88] sm:$0xff]
      %v4847 = vld [vmem:[%s357] sm:$0xf]
      %v4848 = vld [vmem:[%s357 + $0x4] sm:$0xf]
      %v4849 = vld [vmem:[%s357 + $0x8] sm:$0xf]
      %v4850 = vld [vmem:[%s357 + $0xc] sm:$0xf]
      %v4851 = vld [vmem:[%s357 + $0x10] sm:$0xf]
      %v4852 = vld [vmem:[%s357 + $0x14] sm:$0xf]
      %v4853 = vld [vmem:[%s357 + $0x18] sm:$0xf]
      %v4854 = vld [vmem:[%s357 + $0x1c] sm:$0xf]
      %v4855 = vld [vmem:[%s357 + $0x20] sm:$0xf]
      %v4856 = vld [vmem:[%s357 + $0x24] sm:$0xf]
      %v4857 = vld [vmem:[%s357 + $0x28] sm:$0xf]
      %v4858 = vld [vmem:[%s357 + $0x2c] sm:$0xf]
      %v4859 = vld [vmem:[%s357 + $0x30] sm:$0xf]
      %v4860 = vld [vmem:[%s357 + $0x34] sm:$0xf]
      %v4861 = vld [vmem:[%s357 + $0x38] sm:$0xf]
      %v4862 = vld [vmem:[%s357 + $0x3c] sm:$0xf]
      %v4863 = vld [vmem:[%s357 + $0x40] sm:$0xf]
      %v4864 = vld [vmem:[%s357 + $0x44] sm:$0xf]
      %v4865 = vld [vmem:[%s357 + $0x48] sm:$0xf]
      %v4866 = vld [vmem:[%s357 + $0x4c] sm:$0xf]
      %v4867 = vld [vmem:[%s357 + $0x50] sm:$0xf]
      %v4868 = vld [vmem:[%s357 + $0x54] sm:$0xf]
      %v4869 = vld [vmem:[%s357 + $0x58] sm:$0xf]
      %v4870 = vld [vmem:[%s357 + $0x5c] sm:$0xf]
      %v4871 = vld [vmem:[%s357 + $0x60] sm:$0xf]
      %v4872 = vld [vmem:[%s357 + $0x64] sm:$0xf]
      %v4873 = vld [vmem:[%s357 + $0x68] sm:$0xf]
      %v4874 = vld [vmem:[%s357 + $0x6c] sm:$0xf]
      %v4875 = vld [vmem:[%s357 + $0x70] sm:$0xf]
      %v4876 = vld [vmem:[%s357 + $0x74] sm:$0xf]
      %v4877 = vld [vmem:[%s357 + $0x78] sm:$0xf]
      %v4878 = vld [vmem:[%s357 + $0x7c] sm:$0xf]
      %v4897 = vunpack.c.l.b16 %v4829
      %v4898 = vunpack.c.h.b16 %v4829
      %v4899 = vunpack.c.l.b16 %v4830
      %v4900 = vunpack.c.h.b16 %v4830
      %v4901 = vunpack.c.l.b16 %v4831
      %v4902 = vunpack.c.h.b16 %v4831
      %v4903 = vunpack.c.l.b16 %v4832
      %v4904 = vunpack.c.h.b16 %v4832
      %v4905 = vunpack.c.l.b16 %v4833
      %v4906 = vunpack.c.h.b16 %v4833
      %v4907 = vunpack.c.l.b16 %v4834
      %v4908 = vunpack.c.h.b16 %v4834
      %v4909 = vunpack.c.l.b16 %v4835
      %v4910 = vunpack.c.h.b16 %v4835
      %v4911 = vunpack.c.l.b16 %v4836
      %v4912 = vunpack.c.h.b16 %v4836
      %v4913 = vunpack.c.l.b16 %v4837
      %v4914 = vunpack.c.h.b16 %v4837
      %v4915 = vunpack.c.l.b16 %v4838
      %v4916 = vunpack.c.h.b16 %v4838
      %v4917 = vunpack.c.l.b16 %v4839
      %v4918 = vunpack.c.h.b16 %v4839
      %v4919 = vunpack.c.l.b16 %v4840
      %v4920 = vunpack.c.h.b16 %v4840
      %v4921 = vunpack.c.l.b16 %v4841
      %v4922 = vunpack.c.h.b16 %v4841
      %v4923 = vunpack.c.l.b16 %v4842
      %v4924 = vunpack.c.h.b16 %v4842
      %v4925 = vunpack.c.l.b16 %v4843
      %v4926 = vunpack.c.h.b16 %v4843
      %v4927 = vunpack.c.l.b16 %v4844
      %v4928 = vunpack.c.h.b16 %v4844
      %v4929 = vunpack.c.l.b16 %v4845
      %v4930 = vunpack.c.h.b16 %v4845
      %v4931 = vunpack.c.l.b16 %v4846
      %v4932 = vunpack.c.h.b16 %v4846
      %v4933 = vpack.c.b16 %v4899, %v4897
      %v4934 = vpack.c.b16 %v4900, %v4898
      %v4935 = vpack.c.b16 %v4903, %v4901
      %v4936 = vpack.c.b16 %v4904, %v4902
      %v4937 = vpack.c.b16 %v4907, %v4905
      %v4938 = vpack.c.b16 %v4908, %v4906
      %v4939 = vpack.c.b16 %v4911, %v4909
      %v4940 = vpack.c.b16 %v4912, %v4910
      %v4941 = vpack.c.b16 %v4915, %v4913
      %v4942 = vpack.c.b16 %v4916, %v4914
      %v4943 = vpack.c.b16 %v4919, %v4917
      %v4944 = vpack.c.b16 %v4920, %v4918
      %v4945 = vpack.c.b16 %v4923, %v4921
      %v4946 = vpack.c.b16 %v4924, %v4922
      %v4947 = vpack.c.b16 %v4927, %v4925
      %v4948 = vpack.c.b16 %v4928, %v4926
      %v4949 = vpack.c.b16 %v4931, %v4929
      %v4950 = vpack.c.b16 %v4932, %v4930
      %v5001 = vunpack.c.l.b16 %v4847
      %v5002 = vunpack.c.l.b16 %v4848
      %v5003 = vunpack.c.l.b16 %v4849
      %v5004 = vunpack.c.l.b16 %v4850
      %v5005 = vunpack.c.l.b16 %v4851
      %v5006 = vunpack.c.l.b16 %v4852
      %v5007 = vunpack.c.l.b16 %v4853
      %v5008 = vunpack.c.l.b16 %v4854
      %v5009 = vunpack.c.l.b16 %v4855
      %v5010 = vunpack.c.l.b16 %v4856
      %v5011 = vunpack.c.l.b16 %v4857
      %v5012 = vunpack.c.l.b16 %v4858
      %v5013 = vunpack.c.l.b16 %v4859
      %v5014 = vunpack.c.l.b16 %v4860
      %v5015 = vunpack.c.l.b16 %v4861
      %v5016 = vunpack.c.l.b16 %v4862
      %v5017 = vunpack.c.l.b16 %v4863
      %v5018 = vunpack.c.l.b16 %v4864
      %v5019 = vunpack.c.l.b16 %v4865
      %v5020 = vunpack.c.l.b16 %v4866
      %v5021 = vunpack.c.l.b16 %v4867
      %v5022 = vunpack.c.l.b16 %v4868
      %v5023 = vunpack.c.l.b16 %v4869
      %v5024 = vunpack.c.l.b16 %v4870
      %v5025 = vunpack.c.l.b16 %v4871
      %v5026 = vunpack.c.l.b16 %v4872
      %v5027 = vunpack.c.l.b16 %v4873
      %v5028 = vunpack.c.l.b16 %v4874
      %v5029 = vunpack.c.l.b16 %v4875
      %v5030 = vunpack.c.l.b16 %v4876
      %v5031 = vunpack.c.l.b16 %v4877
      %v5032 = vunpack.c.l.b16 %v4878
      %v5033 = vpack.c.b16 %v5002, %v5001
      %v5034 = vpack.c.b16 %v5004, %v5003
      %v5035 = vpack.c.b16 %v5006, %v5005
      %v5036 = vpack.c.b16 %v5008, %v5007
      %v5037 = vpack.c.b16 %v5010, %v5009
      %v5038 = vpack.c.b16 %v5012, %v5011
      %v5039 = vpack.c.b16 %v5014, %v5013
      %v5040 = vpack.c.b16 %v5016, %v5015
      %v5041 = vpack.c.b16 %v5018, %v5017
      %v5042 = vpack.c.b16 %v5020, %v5019
      %v5043 = vpack.c.b16 %v5022, %v5021
      %v5044 = vpack.c.b16 %v5024, %v5023
      %v5045 = vpack.c.b16 %v5026, %v5025
      %v5046 = vpack.c.b16 %v5028, %v5027
      %v5047 = vpack.c.b16 %v5030, %v5029
      %v5048 = vpack.c.b16 %v5032, %v5031
      %5065 = vmatprep.subr.bf16.mxu0 0
      %5066 = vmatpush1.bf16.msra.mxu0 %v5040
      %5067 = vmatprep.subr.bf16.mxu0 0
      %5068 = vmatpush1.bf16.msra.mxu0 %v5039
      %5069 = vmatprep.subr.bf16.mxu0 0
      %5070 = vmatpush1.bf16.msra.mxu0 %v5038
      %5071 = vmatprep.subr.bf16.mxu0 0
      %5072 = vmatpush1.bf16.msra.mxu0 %v5037
      %5073 = vmatprep.subr.bf16.mxu0 0
      %5074 = vmatpush1.bf16.msra.mxu0 %v5036
      %5075 = vmatprep.subr.bf16.mxu0 0
      %5076 = vmatpush1.bf16.msra.mxu0 %v5035
      %5077 = vmatprep.subr.bf16.mxu0 0
      %5078 = vmatpush1.bf16.msra.mxu0 %v5034
      %5079 = vmatprep.subr.bf16.mxu0 0
      %5080 = vmatpush1.bf16.msra.mxu0 %v5033
      %5081 = vmatprep.subr.bf16.mxu0 0
      %5082 = vmatpush2.bf16.msra.mxu0 %v5048
      %5083 = vmatprep.subr.bf16.mxu0 0
      %5084 = vmatpush2.bf16.msra.mxu0 %v5047
      %5085 = vmatprep.subr.bf16.mxu0 0
      %5086 = vmatpush2.bf16.msra.mxu0 %v5046
      %5087 = vmatprep.subr.bf16.mxu0 0
      %5088 = vmatpush2.bf16.msra.mxu0 %v5045
      %5089 = vmatprep.subr.bf16.mxu0 0
      %5090 = vmatpush2.bf16.msra.mxu0 %v5044
      %5091 = vmatprep.subr.bf16.mxu0 0
      %5092 = vmatpush2.bf16.msra.mxu0 %v5043
      %5093 = vmatprep.subr.bf16.mxu0 0
      %5094 = vmatpush2.bf16.msra.mxu0 %v5042
      %5095 = vmatprep.subr.bf16.mxu0 0
      %5096 = vmatpush2.bf16.msra.mxu0 %v5041
      %5097 = vmatprep.mubr.bf16.mxu0 %v4934
      %5098 = vmatmul.mubr.bf16.gmra.mxu0 %v4933
      %v5099 = vpop.f32.mrf.mxu0
      %v5100 = vadd.f32 0.0, %v5099
      %v5101 = vpop.f32.mrf.mxu0
      %v5102 = vpop.f32.mrf.mxu0
      %v5103 = vadd.f32 0.0, %v5102
      %v5104 = vpop.f32.mrf.mxu0
      %5105 = vmatprep.mubr.bf16.mxu0 %v4936
      %5106 = vmatmul.mubr.bf16.gmra.mxu0 %v4935
      %v5107 = vpop.f32.mrf.mxu0
      %v5108 = vadd.f32 0.0, %v5107
      %v5109 = vpop.f32.mrf.mxu0
      %v5110 = vpop.f32.mrf.mxu0
      %v5111 = vadd.f32 0.0, %v5110
      %v5112 = vpop.f32.mrf.mxu0
      %5113 = vmatprep.mubr.bf16.mxu0 %v4938
      %5114 = vmatmul.mubr.bf16.gmra.mxu0 %v4937
      %v5115 = vpop.f32.mrf.mxu0
      %v5116 = vadd.f32 0.0, %v5115
      %v5117 = vpop.f32.mrf.mxu0
      %v5118 = vpop.f32.mrf.mxu0
      %v5119 = vadd.f32 0.0, %v5118
      %v5120 = vpop.f32.mrf.mxu0
      %5121 = vmatprep.mubr.bf16.mxu0 %v4940
      %5122 = vmatmul.mubr.bf16.gmra.mxu0 %v4939
      %v5123 = vpop.f32.mrf.mxu0
      %v5124 = vadd.f32 0.0, %v5123
      %v5125 = vpop.f32.mrf.mxu0
      %v5126 = vpop.f32.mrf.mxu0
      %v5127 = vadd.f32 0.0, %v5126
      %v5128 = vpop.f32.mrf.mxu0
      %5129 = vmatprep.mubr.bf16.mxu0 %v4942
      %5130 = vmatmul.mubr.bf16.gmra.mxu0 %v4941
      %v5131 = vpop.f32.mrf.mxu0
      %v5132 = vadd.f32 0.0, %v5131
      %v5133 = vpop.f32.mrf.mxu0
      %v5134 = vpop.f32.mrf.mxu0
      %v5135 = vadd.f32 0.0, %v5134
      %v5136 = vpop.f32.mrf.mxu0
      %5137 = vmatprep.mubr.bf16.mxu0 %v4944
      %5138 = vmatmul.mubr.bf16.gmra.mxu0 %v4943
      %v5139 = vpop.f32.mrf.mxu0
      %v5140 = vadd.f32 0.0, %v5139
      %v5141 = vpop.f32.mrf.mxu0
      %v5142 = vpop.f32.mrf.mxu0
      %v5143 = vadd.f32 0.0, %v5142
      %v5144 = vpop.f32.mrf.mxu0
      %5145 = vmatprep.mubr.bf16.mxu0 %v4946
      %5146 = vmatmul.mubr.bf16.gmra.mxu0 %v4945
      %v5147 = vpop.f32.mrf.mxu0
      %v5148 = vadd.f32 0.0, %v5147
      %v5149 = vpop.f32.mrf.mxu0
      %v5150 = vpop.f32.mrf.mxu0
      %v5151 = vadd.f32 0.0, %v5150
      %v5152 = vpop.f32.mrf.mxu0
      %5153 = vmatprep.mubr.bf16.mxu0 %v4948
      %5154 = vmatmul.mubr.bf16.gmra.mxu0 %v4947
      %v5155 = vpop.f32.mrf.mxu0
      %v5156 = vadd.f32 0.0, %v5155
      %v5157 = vpop.f32.mrf.mxu0
      %v5158 = vpop.f32.mrf.mxu0
      %v5159 = vadd.f32 0.0, %v5158
      %v5160 = vpop.f32.mrf.mxu0
      %5161 = vmatprep.mubr.bf16.mxu0 %v4950
      %5162 = vmatmul.mubr.bf16.gmra.mxu0 %v4949
      %v5163 = vpop.f32.mrf.mxu0
      %v5164 = vadd.f32 0.0, %v5163
      %v5165 = vpop.f32.mrf.mxu0
      %v5166 = vpop.f32.mrf.mxu0
      %v5167 = vadd.f32 0.0, %v5166
      %v5168 = vpop.f32.mrf.mxu0
      %5169 = vdwg.mxu0
      %s5170 = scalar_lea.vmem %s357, 128
      %v5171 = vld [vmem:[%s5170] sm:$0xf]
      %v5172 = vld [vmem:[%s5170 + $0x4] sm:$0xf]
      %v5173 = vld [vmem:[%s5170 + $0x8] sm:$0xf]
      %v5174 = vld [vmem:[%s5170 + $0xc] sm:$0xf]
      %v5175 = vld [vmem:[%s5170 + $0x10] sm:$0xf]
      %v5176 = vld [vmem:[%s5170 + $0x14] sm:$0xf]
      %v5177 = vld [vmem:[%s5170 + $0x18] sm:$0xf]
      %v5178 = vld [vmem:[%s5170 + $0x1c] sm:$0xf]
      %v5179 = vld [vmem:[%s5170 + $0x20] sm:$0xf]
      %v5180 = vld [vmem:[%s5170 + $0x24] sm:$0xf]
      %v5181 = vld [vmem:[%s5170 + $0x28] sm:$0xf]
      %v5182 = vld [vmem:[%s5170 + $0x2c] sm:$0xf]
      %v5183 = vld [vmem:[%s5170 + $0x30] sm:$0xf]
      %v5184 = vld [vmem:[%s5170 + $0x34] sm:$0xf]
      %v5185 = vld [vmem:[%s5170 + $0x38] sm:$0xf]
      %v5186 = vld [vmem:[%s5170 + $0x3c] sm:$0xf]
      %v5187 = vld [vmem:[%s5170 + $0x40] sm:$0xf]
      %v5188 = vld [vmem:[%s5170 + $0x44] sm:$0xf]
      %v5189 = vld [vmem:[%s5170 + $0x48] sm:$0xf]
      %v5190 = vld [vmem:[%s5170 + $0x4c] sm:$0xf]
      %v5191 = vld [vmem:[%s5170 + $0x50] sm:$0xf]
      %v5192 = vld [vmem:[%s5170 + $0x54] sm:$0xf]
      %v5193 = vld [vmem:[%s5170 + $0x58] sm:$0xf]
      %v5194 = vld [vmem:[%s5170 + $0x5c] sm:$0xf]
      %v5195 = vld [vmem:[%s5170 + $0x60] sm:$0xf]
      %v5196 = vld [vmem:[%s5170 + $0x64] sm:$0xf]
      %v5197 = vld [vmem:[%s5170 + $0x68] sm:$0xf]
      %v5198 = vld [vmem:[%s5170 + $0x6c] sm:$0xf]
      %v5199 = vld [vmem:[%s5170 + $0x70] sm:$0xf]
      %v5200 = vld [vmem:[%s5170 + $0x74] sm:$0xf]
      %v5201 = vld [vmem:[%s5170 + $0x78] sm:$0xf]
      %v5202 = vld [vmem:[%s5170 + $0x7c] sm:$0xf]
      %v5235 = vunpack.c.l.b16 %v5171
      %v5236 = vunpack.c.l.b16 %v5172
      %v5237 = vunpack.c.l.b16 %v5173
      %v5238 = vunpack.c.l.b16 %v5174
      %v5239 = vunpack.c.l.b16 %v5175
      %v5240 = vunpack.c.l.b16 %v5176
      %v5241 = vunpack.c.l.b16 %v5177
      %v5242 = vunpack.c.l.b16 %v5178
      %v5243 = vunpack.c.l.b16 %v5179
      %v5244 = vunpack.c.l.b16 %v5180
      %v5245 = vunpack.c.l.b16 %v5181
      %v5246 = vunpack.c.l.b16 %v5182
      %v5247 = vunpack.c.l.b16 %v5183
      %v5248 = vunpack.c.l.b16 %v5184
      %v5249 = vunpack.c.l.b16 %v5185
      %v5250 = vunpack.c.l.b16 %v5186
      %v5251 = vunpack.c.l.b16 %v5187
      %v5252 = vunpack.c.l.b16 %v5188
      %v5253 = vunpack.c.l.b16 %v5189
      %v5254 = vunpack.c.l.b16 %v5190
      %v5255 = vunpack.c.l.b16 %v5191
      %v5256 = vunpack.c.l.b16 %v5192
      %v5257 = vunpack.c.l.b16 %v5193
      %v5258 = vunpack.c.l.b16 %v5194
      %v5259 = vunpack.c.l.b16 %v5195
      %v5260 = vunpack.c.l.b16 %v5196
      %v5261 = vunpack.c.l.b16 %v5197
      %v5262 = vunpack.c.l.b16 %v5198
      %v5263 = vunpack.c.l.b16 %v5199
      %v5264 = vunpack.c.l.b16 %v5200
      %v5265 = vunpack.c.l.b16 %v5201
      %v5266 = vunpack.c.l.b16 %v5202
      %v5267 = vpack.c.b16 %v5236, %v5235
      %v5268 = vpack.c.b16 %v5238, %v5237
      %v5269 = vpack.c.b16 %v5240, %v5239
      %v5270 = vpack.c.b16 %v5242, %v5241
      %v5271 = vpack.c.b16 %v5244, %v5243
      %v5272 = vpack.c.b16 %v5246, %v5245
      %v5273 = vpack.c.b16 %v5248, %v5247
      %v5274 = vpack.c.b16 %v5250, %v5249
      %v5275 = vpack.c.b16 %v5252, %v5251
      %v5276 = vpack.c.b16 %v5254, %v5253
      %v5277 = vpack.c.b16 %v5256, %v5255
      %v5278 = vpack.c.b16 %v5258, %v5257
      %v5279 = vpack.c.b16 %v5260, %v5259
      %v5280 = vpack.c.b16 %v5262, %v5261
      %v5281 = vpack.c.b16 %v5264, %v5263
      %v5282 = vpack.c.b16 %v5266, %v5265
      %5299 = vmatprep.subr.bf16.mxu0 0
      %5300 = vmatpush1.bf16.msra.mxu0 %v5274
      %5301 = vmatprep.subr.bf16.mxu0 0
      %5302 = vmatpush1.bf16.msra.mxu0 %v5273
      %5303 = vmatprep.subr.bf16.mxu0 0
      %5304 = vmatpush1.bf16.msra.mxu0 %v5272
      %5305 = vmatprep.subr.bf16.mxu0 0
      %5306 = vmatpush1.bf16.msra.mxu0 %v5271
      %5307 = vmatprep.subr.bf16.mxu0 0
      %5308 = vmatpush1.bf16.msra.mxu0 %v5270
      %5309 = vmatprep.subr.bf16.mxu0 0
      %5310 = vmatpush1.bf16.msra.mxu0 %v5269
      %5311 = vmatprep.subr.bf16.mxu0 0
      %5312 = vmatpush1.bf16.msra.mxu0 %v5268
      %5313 = vmatprep.subr.bf16.mxu0 0
      %5314 = vmatpush1.bf16.msra.mxu0 %v5267
      %5315 = vmatprep.subr.bf16.mxu0 0
      %5316 = vmatpush2.bf16.msra.mxu0 %v5282
      %5317 = vmatprep.subr.bf16.mxu0 0
      %5318 = vmatpush2.bf16.msra.mxu0 %v5281
      %5319 = vmatprep.subr.bf16.mxu0 0
      %5320 = vmatpush2.bf16.msra.mxu0 %v5280
      %5321 = vmatprep.subr.bf16.mxu0 0
      %5322 = vmatpush2.bf16.msra.mxu0 %v5279
      %5323 = vmatprep.subr.bf16.mxu0 0
      %5324 = vmatpush2.bf16.msra.mxu0 %v5278
      %5325 = vmatprep.subr.bf16.mxu0 0
      %5326 = vmatpush2.bf16.msra.mxu0 %v5277
      %5327 = vmatprep.subr.bf16.mxu0 0
      %5328 = vmatpush2.bf16.msra.mxu0 %v5276
      %5329 = vmatprep.subr.bf16.mxu0 0
      %5330 = vmatpush2.bf16.msra.mxu0 %v5275
      %5331 = vmatprep.mubr.bf16.mxu0 %v4934
      %5332 = vmatmul.mubr.bf16.gmra.mxu0 %v4933
      %v5333 = vpop.f32.mrf.mxu0
      %v5334 = vadd.f32 0.0, %v5333
      %v5335 = vpop.f32.mrf.mxu0
      %v5336 = vpop.f32.mrf.mxu0
      %v5337 = vadd.f32 0.0, %v5336
      %v5338 = vpop.f32.mrf.mxu0
      %5339 = vmatprep.mubr.bf16.mxu0 %v4936
      %5340 = vmatmul.mubr.bf16.gmra.mxu0 %v4935
      %v5341 = vpop.f32.mrf.mxu0
      %v5342 = vadd.f32 0.0, %v5341
      %v5343 = vpop.f32.mrf.mxu0
      %v5344 = vpop.f32.mrf.mxu0
      %v5345 = vadd.f32 0.0, %v5344
      %v5346 = vpop.f32.mrf.mxu0
      %5347 = vmatprep.mubr.bf16.mxu0 %v4938
      %5348 = vmatmul.mubr.bf16.gmra.mxu0 %v4937
      %v5349 = vpop.f32.mrf.mxu0
      %v5350 = vadd.f32 0.0, %v5349
      %v5351 = vpop.f32.mrf.mxu0
      %v5352 = vpop.f32.mrf.mxu0
      %v5353 = vadd.f32 0.0, %v5352
      %v5354 = vpop.f32.mrf.mxu0
      %5355 = vmatprep.mubr.bf16.mxu0 %v4940
      %5356 = vmatmul.mubr.bf16.gmra.mxu0 %v4939
      %v5357 = vpop.f32.mrf.mxu0
      %v5358 = vadd.f32 0.0, %v5357
      %v5359 = vpop.f32.mrf.mxu0
      %v5360 = vpop.f32.mrf.mxu0
      %v5361 = vadd.f32 0.0, %v5360
      %v5362 = vpop.f32.mrf.mxu0
      %5363 = vmatprep.mubr.bf16.mxu0 %v4942
      %5364 = vmatmul.mubr.bf16.gmra.mxu0 %v4941
      %v5365 = vpop.f32.mrf.mxu0
      %v5366 = vadd.f32 0.0, %v5365
      %v5367 = vpop.f32.mrf.mxu0
      %v5368 = vpop.f32.mrf.mxu0
      %v5369 = vadd.f32 0.0, %v5368
      %v5370 = vpop.f32.mrf.mxu0
      %5371 = vmatprep.mubr.bf16.mxu0 %v4944
      %5372 = vmatmul.mubr.bf16.gmra.mxu0 %v4943
      %v5373 = vpop.f32.mrf.mxu0
      %v5374 = vadd.f32 0.0, %v5373
      %v5375 = vpop.f32.mrf.mxu0
      %v5376 = vpop.f32.mrf.mxu0
      %v5377 = vadd.f32 0.0, %v5376
      %v5378 = vpop.f32.mrf.mxu0
      %5379 = vmatprep.mubr.bf16.mxu0 %v4946
      %5380 = vmatmul.mubr.bf16.gmra.mxu0 %v4945
      %v5381 = vpop.f32.mrf.mxu0
      %v5382 = vadd.f32 0.0, %v5381
      %v5383 = vpop.f32.mrf.mxu0
      %v5384 = vpop.f32.mrf.mxu0
      %v5385 = vadd.f32 0.0, %v5384
      %v5386 = vpop.f32.mrf.mxu0
      %5387 = vmatprep.mubr.bf16.mxu0 %v4948
      %5388 = vmatmul.mubr.bf16.gmra.mxu0 %v4947
      %v5389 = vpop.f32.mrf.mxu0
      %v5390 = vadd.f32 0.0, %v5389
      %v5391 = vpop.f32.mrf.mxu0
      %v5392 = vpop.f32.mrf.mxu0
      %v5393 = vadd.f32 0.0, %v5392
      %v5394 = vpop.f32.mrf.mxu0
      %5395 = vmatprep.mubr.bf16.mxu0 %v4950
      %5396 = vmatmul.mubr.bf16.gmra.mxu0 %v4949
      %v5397 = vpop.f32.mrf.mxu0
      %v5398 = vadd.f32 0.0, %v5397
      %v5399 = vpop.f32.mrf.mxu0
      %v5400 = vpop.f32.mrf.mxu0
      %v5401 = vadd.f32 0.0, %v5400
      %v5402 = vpop.f32.mrf.mxu0
      %5403 = vdwg.mxu0
      %s5404 = scalar_lea.vmem %s357, 256
      %v5405 = vld [vmem:[%s5404] sm:$0xf]
      %v5406 = vld [vmem:[%s5404 + $0x4] sm:$0xf]
      %v5407 = vld [vmem:[%s5404 + $0x8] sm:$0xf]
      %v5408 = vld [vmem:[%s5404 + $0xc] sm:$0xf]
      %v5409 = vld [vmem:[%s5404 + $0x10] sm:$0xf]
      %v5410 = vld [vmem:[%s5404 + $0x14] sm:$0xf]
      %v5411 = vld [vmem:[%s5404 + $0x18] sm:$0xf]
      %v5412 = vld [vmem:[%s5404 + $0x1c] sm:$0xf]
      %v5413 = vld [vmem:[%s5404 + $0x20] sm:$0xf]
      %v5414 = vld [vmem:[%s5404 + $0x24] sm:$0xf]
      %v5415 = vld [vmem:[%s5404 + $0x28] sm:$0xf]
      %v5416 = vld [vmem:[%s5404 + $0x2c] sm:$0xf]
      %v5417 = vld [vmem:[%s5404 + $0x30] sm:$0xf]
      %v5418 = vld [vmem:[%s5404 + $0x34] sm:$0xf]
      %v5419 = vld [vmem:[%s5404 + $0x38] sm:$0xf]
      %v5420 = vld [vmem:[%s5404 + $0x3c] sm:$0xf]
      %v5421 = vld [vmem:[%s5404 + $0x40] sm:$0xf]
      %v5422 = vld [vmem:[%s5404 + $0x44] sm:$0xf]
      %v5423 = vld [vmem:[%s5404 + $0x48] sm:$0xf]
      %v5424 = vld [vmem:[%s5404 + $0x4c] sm:$0xf]
      %v5425 = vld [vmem:[%s5404 + $0x50] sm:$0xf]
      %v5426 = vld [vmem:[%s5404 + $0x54] sm:$0xf]
      %v5427 = vld [vmem:[%s5404 + $0x58] sm:$0xf]
      %v5428 = vld [vmem:[%s5404 + $0x5c] sm:$0xf]
      %v5429 = vld [vmem:[%s5404 + $0x60] sm:$0xf]
      %v5430 = vld [vmem:[%s5404 + $0x64] sm:$0xf]
      %v5431 = vld [vmem:[%s5404 + $0x68] sm:$0xf]
      %v5432 = vld [vmem:[%s5404 + $0x6c] sm:$0xf]
      %v5433 = vld [vmem:[%s5404 + $0x70] sm:$0xf]
      %v5434 = vld [vmem:[%s5404 + $0x74] sm:$0xf]
      %v5435 = vld [vmem:[%s5404 + $0x78] sm:$0xf]
      %v5436 = vld [vmem:[%s5404 + $0x7c] sm:$0xf]
      %v5469 = vunpack.c.l.b16 %v5405
      %v5470 = vunpack.c.l.b16 %v5406
      %v5471 = vunpack.c.l.b16 %v5407
      %v5472 = vunpack.c.l.b16 %v5408
      %v5473 = vunpack.c.l.b16 %v5409
      %v5474 = vunpack.c.l.b16 %v5410
      %v5475 = vunpack.c.l.b16 %v5411
      %v5476 = vunpack.c.l.b16 %v5412
      %v5477 = vunpack.c.l.b16 %v5413
      %v5478 = vunpack.c.l.b16 %v5414
      %v5479 = vunpack.c.l.b16 %v5415
      %v5480 = vunpack.c.l.b16 %v5416
      %v5481 = vunpack.c.l.b16 %v5417
      %v5482 = vunpack.c.l.b16 %v5418
      %v5483 = vunpack.c.l.b16 %v5419
      %v5484 = vunpack.c.l.b16 %v5420
      %v5485 = vunpack.c.l.b16 %v5421
      %v5486 = vunpack.c.l.b16 %v5422
      %v5487 = vunpack.c.l.b16 %v5423
      %v5488 = vunpack.c.l.b16 %v5424
      %v5489 = vunpack.c.l.b16 %v5425
      %v5490 = vunpack.c.l.b16 %v5426
      %v5491 = vunpack.c.l.b16 %v5427
      %v5492 = vunpack.c.l.b16 %v5428
      %v5493 = vunpack.c.l.b16 %v5429
      %v5494 = vunpack.c.l.b16 %v5430
      %v5495 = vunpack.c.l.b16 %v5431
      %v5496 = vunpack.c.l.b16 %v5432
      %v5497 = vunpack.c.l.b16 %v5433
      %v5498 = vunpack.c.l.b16 %v5434
      %v5499 = vunpack.c.l.b16 %v5435
      %v5500 = vunpack.c.l.b16 %v5436
      %v5501 = vpack.c.b16 %v5470, %v5469
      %v5502 = vpack.c.b16 %v5472, %v5471
      %v5503 = vpack.c.b16 %v5474, %v5473
      %v5504 = vpack.c.b16 %v5476, %v5475
      %v5505 = vpack.c.b16 %v5478, %v5477
      %v5506 = vpack.c.b16 %v5480, %v5479
      %v5507 = vpack.c.b16 %v5482, %v5481
      %v5508 = vpack.c.b16 %v5484, %v5483
      %v5509 = vpack.c.b16 %v5486, %v5485
      %v5510 = vpack.c.b16 %v5488, %v5487
      %v5511 = vpack.c.b16 %v5490, %v5489
      %v5512 = vpack.c.b16 %v5492, %v5491
      %v5513 = vpack.c.b16 %v5494, %v5493
      %v5514 = vpack.c.b16 %v5496, %v5495
      %v5515 = vpack.c.b16 %v5498, %v5497
      %v5516 = vpack.c.b16 %v5500, %v5499
      %5533 = vmatprep.subr.bf16.mxu0 0
      %5534 = vmatpush1.bf16.msra.mxu0 %v5508
      %5535 = vmatprep.subr.bf16.mxu0 0
      %5536 = vmatpush1.bf16.msra.mxu0 %v5507
      %5537 = vmatprep.subr.bf16.mxu0 0
      %5538 = vmatpush1.bf16.msra.mxu0 %v5506
      %5539 = vmatprep.subr.bf16.mxu0 0
      %5540 = vmatpush1.bf16.msra.mxu0 %v5505
      %5541 = vmatprep.subr.bf16.mxu0 0
      %5542 = vmatpush1.bf16.msra.mxu0 %v5504
      %5543 = vmatprep.subr.bf16.mxu0 0
      %5544 = vmatpush1.bf16.msra.mxu0 %v5503
      %5545 = vmatprep.subr.bf16.mxu0 0
      %5546 = vmatpush1.bf16.msra.mxu0 %v5502
      %5547 = vmatprep.subr.bf16.mxu0 0
      %5548 = vmatpush1.bf16.msra.mxu0 %v5501
      %5549 = vmatprep.subr.bf16.mxu0 0
      %5550 = vmatpush2.bf16.msra.mxu0 %v5516
      %5551 = vmatprep.subr.bf16.mxu0 0
      %5552 = vmatpush2.bf16.msra.mxu0 %v5515
      %5553 = vmatprep.subr.bf16.mxu0 0
      %5554 = vmatpush2.bf16.msra.mxu0 %v5514
      %5555 = vmatprep.subr.bf16.mxu0 0
      %5556 = vmatpush2.bf16.msra.mxu0 %v5513
      %5557 = vmatprep.subr.bf16.mxu0 0
      %5558 = vmatpush2.bf16.msra.mxu0 %v5512
      %5559 = vmatprep.subr.bf16.mxu0 0
      %5560 = vmatpush2.bf16.msra.mxu0 %v5511
      %5561 = vmatprep.subr.bf16.mxu0 0
      %5562 = vmatpush2.bf16.msra.mxu0 %v5510
      %5563 = vmatprep.subr.bf16.mxu0 0
      %5564 = vmatpush2.bf16.msra.mxu0 %v5509
      %5565 = vmatprep.mubr.bf16.mxu0 %v4934
      %5566 = vmatmul.mubr.bf16.gmra.mxu0 %v4933
      %v5567 = vpop.f32.mrf.mxu0
      %v5568 = vadd.f32 0.0, %v5567
      %v5569 = vpop.f32.mrf.mxu0
      %v5570 = vpop.f32.mrf.mxu0
      %v5571 = vadd.f32 0.0, %v5570
      %v5572 = vpop.f32.mrf.mxu0
      %5573 = vmatprep.mubr.bf16.mxu0 %v4936
      %5574 = vmatmul.mubr.bf16.gmra.mxu0 %v4935
      %v5575 = vpop.f32.mrf.mxu0
      %v5576 = vadd.f32 0.0, %v5575
      %v5577 = vpop.f32.mrf.mxu0
      %v5578 = vpop.f32.mrf.mxu0
      %v5579 = vadd.f32 0.0, %v5578
      %v5580 = vpop.f32.mrf.mxu0
      %5581 = vmatprep.mubr.bf16.mxu0 %v4938
      %5582 = vmatmul.mubr.bf16.gmra.mxu0 %v4937
      %v5583 = vpop.f32.mrf.mxu0
      %v5584 = vadd.f32 0.0, %v5583
      %v5585 = vpop.f32.mrf.mxu0
      %v5586 = vpop.f32.mrf.mxu0
      %v5587 = vadd.f32 0.0, %v5586
      %v5588 = vpop.f32.mrf.mxu0
      %5589 = vmatprep.mubr.bf16.mxu0 %v4940
      %5590 = vmatmul.mubr.bf16.gmra.mxu0 %v4939
      %v5591 = vpop.f32.mrf.mxu0
      %v5592 = vadd.f32 0.0, %v5591
      %v5593 = vpop.f32.mrf.mxu0
      %v5594 = vpop.f32.mrf.mxu0
      %v5595 = vadd.f32 0.0, %v5594
      %v5596 = vpop.f32.mrf.mxu0
      %5597 = vmatprep.mubr.bf16.mxu0 %v4942
      %5598 = vmatmul.mubr.bf16.gmra.mxu0 %v4941
      %v5599 = vpop.f32.mrf.mxu0
      %v5600 = vadd.f32 0.0, %v5599
      %v5601 = vpop.f32.mrf.mxu0
      %v5602 = vpop.f32.mrf.mxu0
      %v5603 = vadd.f32 0.0, %v5602
      %v5604 = vpop.f32.mrf.mxu0
      %5605 = vmatprep.mubr.bf16.mxu0 %v4944
      %5606 = vmatmul.mubr.bf16.gmra.mxu0 %v4943
      %v5607 = vpop.f32.mrf.mxu0
      %v5608 = vadd.f32 0.0, %v5607
      %v5609 = vpop.f32.mrf.mxu0
      %v5610 = vpop.f32.mrf.mxu0
      %v5611 = vadd.f32 0.0, %v5610
      %v5612 = vpop.f32.mrf.mxu0
      %5613 = vmatprep.mubr.bf16.mxu0 %v4946
      %5614 = vmatmul.mubr.bf16.gmra.mxu0 %v4945
      %v5615 = vpop.f32.mrf.mxu0
      %v5616 = vadd.f32 0.0, %v5615
      %v5617 = vpop.f32.mrf.mxu0
      %v5618 = vpop.f32.mrf.mxu0
      %v5619 = vadd.f32 0.0, %v5618
      %v5620 = vpop.f32.mrf.mxu0
      %5621 = vmatprep.mubr.bf16.mxu0 %v4948
      %5622 = vmatmul.mubr.bf16.gmra.mxu0 %v4947
      %v5623 = vpop.f32.mrf.mxu0
      %v5624 = vadd.f32 0.0, %v5623
      %v5625 = vpop.f32.mrf.mxu0
      %v5626 = vpop.f32.mrf.mxu0
      %v5627 = vadd.f32 0.0, %v5626
      %v5628 = vpop.f32.mrf.mxu0
      %5629 = vmatprep.mubr.bf16.mxu0 %v4950
      %5630 = vmatmul.mubr.bf16.gmra.mxu0 %v4949
      %v5631 = vpop.f32.mrf.mxu0
      %v5632 = vadd.f32 0.0, %v5631
      %v5633 = vpop.f32.mrf.mxu0
      %v5634 = vpop.f32.mrf.mxu0
      %v5635 = vadd.f32 0.0, %v5634
      %v5636 = vpop.f32.mrf.mxu0
      %5637 = vdwg.mxu0
      %v5638 = vrot.slane %v5100, 7
      %v5639 = vrot.slane %v5103, 7
      %v5640 = vrot.slane %v5108, 7
      %v5641 = vrot.slane %v5111, 7
      %v5642 = vrot.slane %v5116, 7
      %v5643 = vrot.slane %v5119, 7
      %v5644 = vrot.slane %v5124, 7
      %v5645 = vrot.slane %v5127, 7
      %v5646 = vrot.slane %v5132, 7
      %v5647 = vrot.slane %v5135, 7
      %v5648 = vrot.slane %v5140, 7
      %v5649 = vrot.slane %v5143, 7
      %v5650 = vrot.slane %v5148, 7
      %v5651 = vrot.slane %v5151, 7
      %v5652 = vrot.slane %v5156, 7
      %v5653 = vrot.slane %v5159, 7
      %v5654 = vrot.slane %v5164, 7
      %v5655 = vrot.slane %v5167, 7
      %v5656 = vsel %vm1015, %v5654, %v5655
      %v5657 = vsel %vm1015, %v5653, %v5654
      %v5658 = vsel %vm1015, %v5652, %v5653
      %v5659 = vsel %vm1015, %v5651, %v5652
      %v5660 = vsel %vm1015, %v5650, %v5651
      %v5661 = vsel %vm1015, %v5649, %v5650
      %v5662 = vsel %vm1015, %v5648, %v5649
      %v5663 = vsel %vm1015, %v5647, %v5648
      %v5664 = vsel %vm1015, %v5646, %v5647
      %v5665 = vsel %vm1015, %v5645, %v5646
      %v5666 = vsel %vm1015, %v5644, %v5645
      %v5667 = vsel %vm1015, %v5643, %v5644
      %v5668 = vsel %vm1015, %v5642, %v5643
      %v5669 = vsel %vm1015, %v5641, %v5642
      %v5670 = vsel %vm1015, %v5640, %v5641
      %v5671 = vsel %vm1015, %v5639, %v5640
      %v5672 = vsel %vm1015, %v5638, %v5639
      %v5673 = vsel %vm1015, %v5655, %v5638
      %v5674 = vadd.f32 %v5673, %v5334
      %v5675 = vadd.f32 %v5672, %v5337
      %v5676 = vadd.f32 %v5671, %v5342
      %v5677 = vadd.f32 %v5670, %v5345
      %v5678 = vadd.f32 %v5669, %v5350
      %v5679 = vadd.f32 %v5668, %v5353
      %v5680 = vadd.f32 %v5667, %v5358
      %v5681 = vadd.f32 %v5666, %v5361
      %v5682 = vadd.f32 %v5665, %v5366
      %v5683 = vadd.f32 %v5664, %v5369
      %v5684 = vadd.f32 %v5663, %v5374
      %v5685 = vadd.f32 %v5662, %v5377
      %v5686 = vadd.f32 %v5661, %v5382
      %v5687 = vadd.f32 %v5660, %v5385
      %v5688 = vadd.f32 %v5659, %v5390
      %v5689 = vadd.f32 %v5658, %v5393
      %v5690 = vadd.f32 %v5657, %v5398
      %v5691 = vadd.f32 %v5656, %v5401
      %v5692 = vrot.slane %v5568, 1
      %v5693 = vrot.slane %v5571, 1
      %v5694 = vrot.slane %v5576, 1
      %v5695 = vrot.slane %v5579, 1
      %v5696 = vrot.slane %v5584, 1
      %v5697 = vrot.slane %v5587, 1
      %v5698 = vrot.slane %v5592, 1
      %v5699 = vrot.slane %v5595, 1
      %v5700 = vrot.slane %v5600, 1
      %v5701 = vrot.slane %v5603, 1
      %v5702 = vrot.slane %v5608, 1
      %v5703 = vrot.slane %v5611, 1
      %v5704 = vrot.slane %v5616, 1
      %v5705 = vrot.slane %v5619, 1
      %v5706 = vrot.slane %v5624, 1
      %v5707 = vrot.slane %v5627, 1
      %v5708 = vrot.slane %v5632, 1
      %v5709 = vrot.slane %v5635, 1
      %v5710 = vsel %vm1124, %v5708, %v5709
      %v5711 = vsel %vm1124, %v5707, %v5708
      %v5712 = vsel %vm1124, %v5706, %v5707
      %v5713 = vsel %vm1124, %v5705, %v5706
      %v5714 = vsel %vm1124, %v5704, %v5705
      %v5715 = vsel %vm1124, %v5703, %v5704
      %v5716 = vsel %vm1124, %v5702, %v5703
      %v5717 = vsel %vm1124, %v5701, %v5702
      %v5718 = vsel %vm1124, %v5700, %v5701
      %v5719 = vsel %vm1124, %v5699, %v5700
      %v5720 = vsel %vm1124, %v5698, %v5699
      %v5721 = vsel %vm1124, %v5697, %v5698
      %v5722 = vsel %vm1124, %v5696, %v5697
      %v5723 = vsel %vm1124, %v5695, %v5696
      %v5724 = vsel %vm1124, %v5694, %v5695
      %v5725 = vsel %vm1124, %v5693, %v5694
      %v5726 = vsel %vm1124, %v5692, %v5693
      %v5727 = vsel %vm1124, %v5709, %v5692
      %v5728 = vadd.f32 %v5674, %v5726
      %v5729 = vadd.f32 %v5675, %v5725
      %v5730 = vadd.f32 %v5676, %v5724
      %v5731 = vadd.f32 %v5677, %v5723
      %v5732 = vadd.f32 %v5678, %v5722
      %v5733 = vadd.f32 %v5679, %v5721
      %v5734 = vadd.f32 %v5680, %v5720
      %v5735 = vadd.f32 %v5681, %v5719
      %v5736 = vadd.f32 %v5682, %v5718
      %v5737 = vadd.f32 %v5683, %v5717
      %v5738 = vadd.f32 %v5684, %v5716
      %v5739 = vadd.f32 %v5685, %v5715
      %v5740 = vadd.f32 %v5686, %v5714
      %v5741 = vadd.f32 %v5687, %v5713
      %v5742 = vadd.f32 %v5688, %v5712
      %v5743 = vadd.f32 %v5689, %v5711
      %v5744 = vadd.f32 %v5690, %v5710
      %v5745 = vadd.f32 %v5691, %v5727
      %v5746 = vld [vmem:[%s364] sm:$0x1]
      %v5748 = vlaneseq
      %v5749 = vshrl.u32 %v5748, 7
      %v5750 = vsub.s32 0, %v5749
      %v5751 = vrot.slane %v5746, %v5750
      %v5753 = vadd.f32 %v5728, %v5751
      %v5754 = vadd.f32 %v5729, %v5751
      %v5755 = vadd.f32 %v5730, %v5751
      %v5756 = vadd.f32 %v5731, %v5751
      %v5757 = vadd.f32 %v5732, %v5751
      %v5758 = vadd.f32 %v5733, %v5751
      %v5759 = vadd.f32 %v5734, %v5751
      %v5760 = vadd.f32 %v5735, %v5751
      %v5761 = vadd.f32 %v5736, %v5751
      %v5762 = vadd.f32 %v5737, %v5751
      %v5763 = vadd.f32 %v5738, %v5751
      %v5764 = vadd.f32 %v5739, %v5751
      %v5765 = vadd.f32 %v5740, %v5751
      %v5766 = vadd.f32 %v5741, %v5751
      %v5767 = vadd.f32 %v5742, %v5751
      %v5768 = vadd.f32 %v5743, %v5751
      %v5769 = vadd.f32 %v5744, %v5751
      %v5770 = vadd.f32 %v5745, %v5751
      %5771 = vst.msk [vmem:[%s369] sm:$0xff] %vm482, %v5753
      %5772 = vst.msk [vmem:[%s369 + $0x8] sm:$0xff] %vm482, %v5754
      %5773 = vst.msk [vmem:[%s369 + $0x10] sm:$0xff] %vm482, %v5755
      %5774 = vst.msk [vmem:[%s369 + $0x18] sm:$0xff] %vm482, %v5756
      %5775 = vst.msk [vmem:[%s369 + $0x20] sm:$0xff] %vm482, %v5757
      %5776 = vst.msk [vmem:[%s369 + $0x28] sm:$0xff] %vm482, %v5758
      %5777 = vst.msk [vmem:[%s369 + $0x30] sm:$0xff] %vm482, %v5759
      %5778 = vst.msk [vmem:[%s369 + $0x38] sm:$0xff] %vm482, %v5760
      %5779 = vst.msk [vmem:[%s369 + $0x40] sm:$0xff] %vm482, %v5761
      %5780 = vst.msk [vmem:[%s369 + $0x48] sm:$0xff] %vm482, %v5762
      %5781 = vst.msk [vmem:[%s369 + $0x50] sm:$0xff] %vm482, %v5763
      %5782 = vst.msk [vmem:[%s369 + $0x58] sm:$0xff] %vm482, %v5764
      %5783 = vst.msk [vmem:[%s369 + $0x60] sm:$0xff] %vm482, %v5765
      %5784 = vst.msk [vmem:[%s369 + $0x68] sm:$0xff] %vm482, %v5766
      %5785 = vst.msk [vmem:[%s369 + $0x70] sm:$0xff] %vm482, %v5767
      %5786 = vst.msk [vmem:[%s369 + $0x78] sm:$0xff] %vm482, %v5768
      %5787 = vst.msk [vmem:[%s369 + $0x80] sm:$0xff] %vm482, %v5769
      %5788 = vst.msk [vmem:[%s369 + $0x88] sm:$0xff] %vm482, %v5770
      %p5789 = scmp.lt.s32.totalorder %s18, 1
      %s5790 = scalar_select %p5789, %s18, 1
      %s5791 = smul.addr %s5790, 18
      %s5792 = smul.addr %s5791, 8
      %s5793 = scalar_lea.vmem %s7, %s5792
      // Predicated region
      $region49: #{network_static_semantic_forward.1} parent=47 // pred_check
        %p5794 = pneg %p213
      $region50: #{network_static_semantic_forward.1} parent=47 // pred_check_branch
        %5796 = sbr.rel (%p5794) target = $region52
      $region51: #{network_static_semantic_forward.1} parent=47 // pred_region
        _
      $region52: #{network_static_semantic_forward.1} parent=47 // pred_fallthru
        _
    $region48: #{network_static_semantic_forward.1} parent=5 // pred_fallthru
      _
    %p5797 = scmp.le.s32.totalorder 2, %s13
    // Predicated region
    $region53: #{network_static_semantic_forward.1} parent=5 // pred_check
      %p5798 = pneg %p5797
    $region54: #{network_static_semantic_forward.1} parent=5 // pred_check_branch
      %5800 = sbr.rel (%p5798) target = $region56
    $region55: #{network_static_semantic_forward.1} parent=5 // pred_region
      %s5801 = ssub.s32 %s13, 2
      // Predicated region
      $region57: #{network_static_semantic_forward.1} parent=55 // pred_check
        %p5802 = pneg %p219
      $region58: #{network_static_semantic_forward.1} parent=55 // pred_check_branch
        %5804 = sbr.rel (%p5802) target = $region60
      $region59: #{network_static_semantic_forward.1} parent=55 // pred_region
        %p5805 = scmp.lt.s32.totalorder %s19, 1
        %s5806 = scalar_select %p5805, %s19, 1
        %s5807 = smul.addr %s5806, 18
        %s5808 = smul.addr %s5807, 8
        %s5809 = scalar_lea.vmem %s7, %s5808
      $region60: #{network_static_semantic_forward.1} parent=55 // pred_fallthru
        _
    $region56: #{network_static_semantic_forward.1} parent=5 // pred_fallthru
      _
  $region6: #{network_static_semantic_forward.1} parent=0 // loop_footer
    %s17 = sadd.s32 1, %s13
  $region7: #{network_static_semantic_forward.1} parent=0 // loop_footer_branch
    %12 = sbr.rel target = $region3
  $region8: #{network_static_semantic_forward.1} parent=0 // loop_exit
    _

</llo_original>
